<compile_context>
chip_gen: v7x
topology: tpu7x:2x2x1
jax: 0.10.0
libtpu: 0.0.40
codegen_flags: <defaults>
</compile_context>

<pallas_src>
import functools

import jax
import jax.numpy as jnp
from jax.experimental import pallas as pl
from jax.experimental.pallas import tpu as pltpu

# Network constants fixed by the PyTorch module.
K1, C1, P1 = 9, 64, 4      # conv1: 9x9, 1 -> 64, replicate pad 4
C2 = 32                    # conv2: 1x1, 64 -> 32
K3, P3 = 5, 2              # conv3: 5x5, 32 -> 1, replicate pad 2
T3 = K3 * K3               # 25 conv3 taps


def _srcnn_kernel(xcol_ref, w1_ref, b1_ref, w2_ref, b2_ref, w3t_ref, b3_ref,
                  o_ref, tmap_ref, *, H, W):
    """Fused SRCNN forward for one image.

    xcol_ref : (1, H*W, 81) bf16  conv1 im2col (pixel rows, taps on lanes)
    w1_ref   : (81, 64)     bf16  conv1 weights  [(kh*9+kw), cout]
    w2_ref   : (64, 32)     bf16  conv2 weights
    w3t_ref  : (32, 25)     bf16  conv3 weights  [cin, (kh*5+kw)]
    b*_ref   : f32 biases
    o_ref    : (1, H, W)    f32   output, W on the lane axis (lane-dense)
    tmap_ref : (H+4, W+4, 25) f32 replicate-padded per-tap conv3 maps
    """
    # ---- conv1 (MXU): single (HW, 81) x (81, 64) matmul + bias + ReLU ------
    y1 = jnp.dot(xcol_ref[0], w1_ref[...], preferred_element_type=jnp.float32)
    y1 = jnp.maximum(y1 + b1_ref[...], 0.0).astype(jnp.bfloat16)      # (HW, 64)

    # ---- conv2 (1x1, MXU): (HW, 64) x (64, 32); y1 never hits VMEM ---------
    y2 = jnp.dot(y1, w2_ref[...], preferred_element_type=jnp.float32)
    y2 = jnp.maximum(y2 + b2_ref[...], 0.0).astype(jnp.bfloat16)      # (HW, 32)

    # ---- conv3 channel contraction (MXU): one (HW, 32) x (32, 25) matmul ---
    # t[p, kh*5+kw] = sum_c w3[kh, kw, c] * y2[p, c]; one map per tap, so no
    # (HW, 800) im2col and no Cout=1 matvec.
    t = jnp.dot(y2, w3t_ref[...], preferred_element_type=jnp.float32)  # (HW,25)

    # ---- replicate-pad the tap maps by 2 into VMEM scratch -----------------
    tmap_ref[P3:P3 + H, P3:P3 + W, :] = t.reshape(H, W, T3)
    lcol = tmap_ref[P3:P3 + H, P3:P3 + 1, :]                 # left edge column
    tmap_ref[P3:P3 + H, 0:1, :] = lcol
    tmap_ref[P3:P3 + H, 1:2, :] = lcol
    rcol = tmap_ref[P3:P3 + H, P3 + W - 1:P3 + W, :]         # right edge column
    tmap_ref[P3:P3 + H, P3 + W:P3 + W + 1, :] = rcol
    tmap_ref[P3:P3 + H, P3 + W + 1:P3 + W + 2, :] = rcol
    trow = tmap_ref[P3:P3 + 1, :, :]                         # top edge row
    tmap_ref[0:1, :, :] = trow
    tmap_ref[1:2, :, :] = trow
    brow = tmap_ref[P3 + H - 1:P3 + H, :, :]                 # bottom edge row
    tmap_ref[P3 + H:P3 + H + 1, :, :] = brow
    tmap_ref[P3 + H + 1:P3 + H + 2, :, :] = brow

    # ---- conv3 spatial tap-sum (VPU): 25 shifted-slab adds -----------------
    acc = jnp.zeros((H, W), dtype=jnp.float32)
    for kh in range(K3):
        rows = tmap_ref[kh:kh + H]                  # (H, W+4, 25), outer slice
        for kw in range(K3):
            acc = acc + rows[:, kw:kw + W, kh * K3 + kw]
    o_ref[0] = acc + b3_ref[...]                    # lane-dense (H, W) store


def srcnn_pallas(xcol, w1, b1, w2, b2, w3t, b3, *, H, W):
    N, HW, KK = xcol.shape
    kernel = functools.partial(_srcnn_kernel, H=H, W=W)

    # Size the scoped-VMEM limit from the chip (128 MiB on v5e/v6e, 64 MiB on
    # v7x) instead of a fixed 32 MiB; fall back conservatively if unavailable.
    try:
        phys = int(pltpu.get_tpu_info().vmem_capacity_bytes)
        vmem_limit = min(phys * 3 // 4, 100 * 1024 * 1024)
    except Exception:
        vmem_limit = 32 * 1024 * 1024

    return pl.pallas_call(
        kernel,
        out_shape=jax.ShapeDtypeStruct((N, H, W), jnp.float32),
        grid=(N,),
        in_specs=[
            pl.BlockSpec((1, HW, KK), lambda n: (n, 0, 0)),
            pl.BlockSpec((K1 * K1, C1), lambda n: (0, 0)),
            pl.BlockSpec((1, C1), lambda n: (0, 0)),
            pl.BlockSpec((C1, C2), lambda n: (0, 0)),
            pl.BlockSpec((1, C2), lambda n: (0, 0)),
            pl.BlockSpec((C2, T3), lambda n: (0, 0)),
            pl.BlockSpec((1, 1), lambda n: (0, 0)),
        ],
        out_specs=pl.BlockSpec((1, H, W), lambda n: (n, 0, 0)),
        scratch_shapes=[
            pltpu.VMEM((H + 2 * P3, W + 2 * P3, T3), jnp.float32),  # tap maps
        ],
        compiler_params=pltpu.CompilerParams(
            dimension_semantics=("parallel",),      # batch across TCs (v7x)
            vmem_limit_bytes=vmem_limit,
        ),
    )(xcol, w1, b1, w2, b2, w3t, b3)


def init_srcnn_params(key):
    """Deterministic init mimicking PyTorch Conv2d default (uniform +-1/sqrt(fan_in))."""
    def conv_init(k, kh, kw, cin, cout):
        kw_key, kb_key = jax.random.split(k)
        bound = 1.0 / jnp.sqrt(jnp.float32(cin * kh * kw))
        w = jax.random.uniform(kw_key, (kh, kw, cin, cout), jnp.float32,
                               -bound, bound)
        b = jax.random.uniform(kb_key, (cout,), jnp.float32, -bound, bound)
        return w, b

    k1, k2, k3 = jax.random.split(key, 3)
    return {
        "conv1": conv_init(k1, K1, K1, 1, C1),
        "conv2": conv_init(k2, 1, 1, C1, C2),
        "conv3": conv_init(k3, K3, K3, C2, 1),
    }


@jax.jit
def srcnn_forward(x_nchw, params):
    N, C, H, W = x_nchw.shape
    assert C == 1, "SRCNN takes single-channel (Y) input"
    assert W % 8 == 0, "kernel assumes W is a multiple of 8 (TPU sublane)"
    w1, b1 = params["conv1"]
    w2, b2 = params["conv2"]
    w3, b3 = params["conv3"]

    x = x_nchw.astype(jnp.float32)[:, 0]                           # (N, H, W)
    xp = jnp.pad(x, ((0, 0), (P1, P1), (P1, P1)), mode="edge")     # (N,H+8,W+8)
    # Full conv1 im2col in the wrapper (small-image path; the ~81x blowup is
    # negligible at demo sizes and lets conv1 be one clean MXU matmul).
    cols = [xp[:, kh:kh + H, kw:kw + W]
            for kh in range(K1) for kw in range(K1)]
    xcol = jnp.stack(cols, axis=-1).reshape(N, H * W, K1 * K1)
    xcol = xcol.astype(jnp.bfloat16)

    out = srcnn_pallas(
        xcol,
        w1.reshape(K1 * K1, C1).astype(jnp.bfloat16),
        b1.reshape(1, C1).astype(jnp.float32),
        w2.reshape(C1, C2).astype(jnp.bfloat16),
        b2.reshape(1, C2).astype(jnp.float32),
        w3.reshape(K3 * K3, C2).T.astype(jnp.bfloat16),            # (32, 25)
        b3.reshape(1, 1).astype(jnp.float32),
        H=H, W=W)
    return out.reshape(N, 1, H, W)                                 # NCHW, C=1


def _reference_forward(x_nchw, params):
    # Pure-JAX f32 reference (lax conv with replicate padding) for correctness.
    def conv(x, w, b, pad):
        xp = jnp.pad(x, ((0, 0), (pad, pad), (pad, pad), (0, 0)), mode="edge")
        y = jax.lax.conv_general_dilated(
            xp, w, window_strides=(1, 1), padding="VALID",
            dimension_numbers=("NHWC", "HWIO", "NHWC"))
        return y + b.reshape(1, 1, 1, -1)

    x = jnp.transpose(x_nchw.astype(jnp.float32), (0, 2, 3, 1))
    w1, b1 = params["conv1"]
    w2, b2 = params["conv2"]
    w3, b3 = params["conv3"]
    out = jax.nn.relu(conv(x, w1, b1, P1))
    out = jax.nn.relu(conv(out, w2, b2, 0))
    out = conv(out, w3, b3, P3)
    return jnp.transpose(out, (0, 3, 1, 2))


if __name__ == "__main__":
    key = jax.random.PRNGKey(0)
    pkey, xkey = jax.random.split(key)
    params = init_srcnn_params(pkey)

    # SRCNN takes single-channel (Y-channel) images: NCHW = (2, 1, 16, 16)
    x = jax.random.normal(xkey, (2, 1, 16, 16), dtype=jnp.float32)

    y = srcnn_forward(x, params)
    y = jax.block_until_ready(y)
    assert y.shape == (2, 1, 16, 16), y.shape

    y_ref = _reference_forward(x, params)
    err = float(jnp.max(jnp.abs(y - y_ref)))
    # bf16 MXU operands with f32 accumulation => relaxed tolerance vs f32 ref.
    assert err < 5e-2, err

    print("KERNEL_OK")
</pallas_src>

<mosaic_0001>
module attributes {stable_mosaic.version = 11 : i64} {
  func.func @_srcnn_kernel(%arg0: i32, %arg1: memref<1x256x81xbf16, #tpu.memory_space<vmem>>, %arg2: memref<81x64xbf16, #tpu.memory_space<vmem>>, %arg3: memref<1x64xf32, #tpu.memory_space<vmem>>, %arg4: memref<64x32xbf16, #tpu.memory_space<vmem>>, %arg5: memref<1x32xf32, #tpu.memory_space<vmem>>, %arg6: memref<32x25xbf16, #tpu.memory_space<vmem>>, %arg7: memref<1x1xf32, #tpu.memory_space<vmem>>, %arg8: memref<1x16x16xf32, #tpu.memory_space<vmem>>, %arg9: memref<20x20x25xf32, #tpu.memory_space<vmem>>) attributes {dimension_semantics = [#tpu.dimension_semantics<parallel>], iteration_bounds = array<i64: 2>, scalar_prefetch = 0 : i64, scratch_operands = 1 : i64, tpu.core_type = #tpu.core_type<tc>, window_params = [{transform_indices = @transform_0, window_bounds = array<i64: 1, 256, 81>}, {pipeline_mode = #tpu.pipeline_mode<synchronous>, transform_indices = @transform_1, window_bounds = array<i64: 81, 64>}, {pipeline_mode = #tpu.pipeline_mode<synchronous>, transform_indices = @transform_2, window_bounds = array<i64: 1, 64>}, {pipeline_mode = #tpu.pipeline_mode<synchronous>, transform_indices = @transform_3, window_bounds = array<i64: 64, 32>}, {pipeline_mode = #tpu.pipeline_mode<synchronous>, transform_indices = @transform_4, window_bounds = array<i64: 1, 32>}, {pipeline_mode = #tpu.pipeline_mode<synchronous>, transform_indices = @transform_5, window_bounds = array<i64: 32, 25>}, {pipeline_mode = #tpu.pipeline_mode<synchronous>, transform_indices = @transform_6, window_bounds = array<i64: 1, 1>}, {transform_indices = @transform_7, window_bounds = array<i64: 1, 16, 16>}]} {
    %c0 = arith.constant 0 : index
    %c0_0 = arith.constant 0 : index
    %c0_1 = arith.constant 0 : index
    %0 = vector.load %arg1[%c0, %c0_0, %c0_1] : memref<1x256x81xbf16, #tpu.memory_space<vmem>>, vector<1x256x81xbf16>
    %1 = vector.shape_cast %0 : vector<1x256x81xbf16> to vector<256x81xbf16>
    %c0_2 = arith.constant 0 : index
    %c0_3 = arith.constant 0 : index
    %2 = vector.load %arg2[%c0_2, %c0_3] : memref<81x64xbf16, #tpu.memory_space<vmem>>, vector<81x64xbf16>
    %cst = arith.constant dense<0.000000e+00> : vector<256x64xf32>
    %3 = tpu.matmul %1, %2, %cst {dimension_numbers = #tpu.dot_dimension_numbers<[1], [0], [0], [1], [0, 0, 1, 1], [], []>} : vector<256x81xbf16>, vector<81x64xbf16>, vector<256x64xf32> -> vector<256x64xf32>
    %c0_4 = arith.constant 0 : index
    %c0_5 = arith.constant 0 : index
    %4 = vector.load %arg3[%c0_4, %c0_5] : memref<1x64xf32, #tpu.memory_space<vmem>>, vector<1x64xf32>
    %5 = vector.broadcast %4 : vector<1x64xf32> to vector<256x64xf32>
    %6 = arith.addf %3, %5 : vector<256x64xf32>
    %cst_6 = arith.constant 0.000000e+00 : f32
    %7 = vector.broadcast %cst_6 : f32 to vector<256x64xf32>
    %8 = arith.maximumf %6, %7 : vector<256x64xf32>
    %9 = arith.truncf %8 : vector<256x64xf32> to vector<256x64xbf16>
    %c0_7 = arith.constant 0 : index
    %c0_8 = arith.constant 0 : index
    %10 = vector.load %arg4[%c0_7, %c0_8] : memref<64x32xbf16, #tpu.memory_space<vmem>>, vector<64x32xbf16>
    %cst_9 = arith.constant dense<0.000000e+00> : vector<256x32xf32>
    %11 = tpu.matmul %9, %10, %cst_9 {dimension_numbers = #tpu.dot_dimension_numbers<[1], [0], [0], [1], [0, 0, 1, 1], [], []>} : vector<256x64xbf16>, vector<64x32xbf16>, vector<256x32xf32> -> vector<256x32xf32>
    %c0_10 = arith.constant 0 : index
    %c0_11 = arith.constant 0 : index
    %12 = vector.load %arg5[%c0_10, %c0_11] : memref<1x32xf32, #tpu.memory_space<vmem>>, vector<1x32xf32>
    %13 = vector.broadcast %12 : vector<1x32xf32> to vector<256x32xf32>
    %14 = arith.addf %11, %13 : vector<256x32xf32>
    %cst_12 = arith.constant 0.000000e+00 : f32
    %15 = vector.broadcast %cst_12 : f32 to vector<256x32xf32>
    %16 = arith.maximumf %14, %15 : vector<256x32xf32>
    %17 = arith.truncf %16 : vector<256x32xf32> to vector<256x32xbf16>
    %c0_13 = arith.constant 0 : index
    %c0_14 = arith.constant 0 : index
    %18 = vector.load %arg6[%c0_13, %c0_14] : memref<32x25xbf16, #tpu.memory_space<vmem>>, vector<32x25xbf16>
    %cst_15 = arith.constant dense<0.000000e+00> : vector<256x25xf32>
    %19 = tpu.matmul %17, %18, %cst_15 {dimension_numbers = #tpu.dot_dimension_numbers<[1], [0], [0], [1], [0, 0, 1, 1], [], []>} : vector<256x32xbf16>, vector<32x25xbf16>, vector<256x25xf32> -> vector<256x25xf32>
    %20 = vector.shape_cast %19 : vector<256x25xf32> to vector<16x16x25xf32>
    %c2 = arith.constant 2 : index
    %c2_16 = arith.constant 2 : index
    %c0_17 = arith.constant 0 : index
    %21 = vector.load %arg9[%c2, %c2_16, %c0_17] : memref<20x20x25xf32, #tpu.memory_space<vmem>>, vector<16x16x25xf32>
    tpu.vector_store %arg9[%c2, %c2_16, %c0_17], %20 {strides = array<i32>} : memref<20x20x25xf32, #tpu.memory_space<vmem>>, vector<16x16x25xf32>,
    %c2_18 = arith.constant 2 : index
    %c2_19 = arith.constant 2 : index
    %c0_20 = arith.constant 0 : index
    %22 = vector.load %arg9[%c2_18, %c2_19, %c0_20] : memref<20x20x25xf32, #tpu.memory_space<vmem>>, vector<16x1x25xf32>
    %c2_21 = arith.constant 2 : index
    %c0_22 = arith.constant 0 : index
    %c0_23 = arith.constant 0 : index
    %23 = vector.load %arg9[%c2_21, %c0_22, %c0_23] : memref<20x20x25xf32, #tpu.memory_space<vmem>>, vector<16x1x25xf32>
    tpu.vector_store %arg9[%c2_21, %c0_22, %c0_23], %22 {strides = array<i32>} : memref<20x20x25xf32, #tpu.memory_space<vmem>>, vector<16x1x25xf32>,
    %c2_24 = arith.constant 2 : index
    %c1 = arith.constant 1 : index
    %c0_25 = arith.constant 0 : index
    %24 = vector.load %arg9[%c2_24, %c1, %c0_25] : memref<20x20x25xf32, #tpu.memory_space<vmem>>, vector<16x1x25xf32>
    tpu.vector_store %arg9[%c2_24, %c1, %c0_25], %22 {strides = array<i32>} : memref<20x20x25xf32, #tpu.memory_space<vmem>>, vector<16x1x25xf32>,
    %c2_26 = arith.constant 2 : index
    %c17 = arith.constant 17 : index
    %c0_27 = arith.constant 0 : index
    %25 = vector.load %arg9[%c2_26, %c17, %c0_27] : memref<20x20x25xf32, #tpu.memory_space<vmem>>, vector<16x1x25xf32>
    %c2_28 = arith.constant 2 : index
    %c18 = arith.constant 18 : index
    %c0_29 = arith.constant 0 : index
    %26 = vector.load %arg9[%c2_28, %c18, %c0_29] : memref<20x20x25xf32, #tpu.memory_space<vmem>>, vector<16x1x25xf32>
    tpu.vector_store %arg9[%c2_28, %c18, %c0_29], %25 {strides = array<i32>} : memref<20x20x25xf32, #tpu.memory_space<vmem>>, vector<16x1x25xf32>,
    %c2_30 = arith.constant 2 : index
    %c19 = arith.constant 19 : index
    %c0_31 = arith.constant 0 : index
    %27 = vector.load %arg9[%c2_30, %c19, %c0_31] : memref<20x20x25xf32, #tpu.memory_space<vmem>>, vector<16x1x25xf32>
    tpu.vector_store %arg9[%c2_30, %c19, %c0_31], %25 {strides = array<i32>} : memref<20x20x25xf32, #tpu.memory_space<vmem>>, vector<16x1x25xf32>,
    %c2_32 = arith.constant 2 : index
    %c0_33 = arith.constant 0 : index
    %c0_34 = arith.constant 0 : index
    %28 = vector.load %arg9[%c2_32, %c0_33, %c0_34] : memref<20x20x25xf32, #tpu.memory_space<vmem>>, vector<1x20x25xf32>
    %c0_35 = arith.constant 0 : index
    %c0_36 = arith.constant 0 : index
    %c0_37 = arith.constant 0 : index
    %29 = vector.load %arg9[%c0_35, %c0_36, %c0_37] : memref<20x20x25xf32, #tpu.memory_space<vmem>>, vector<1x20x25xf32>
    tpu.vector_store %arg9[%c0_35, %c0_36, %c0_37], %28 {strides = array<i32>} : memref<20x20x25xf32, #tpu.memory_space<vmem>>, vector<1x20x25xf32>,
    %c1_38 = arith.constant 1 : index
    %c0_39 = arith.constant 0 : index
    %c0_40 = arith.constant 0 : index
    %30 = vector.load %arg9[%c1_38, %c0_39, %c0_40] : memref<20x20x25xf32, #tpu.memory_space<vmem>>, vector<1x20x25xf32>
    tpu.vector_store %arg9[%c1_38, %c0_39, %c0_40], %28 {strides = array<i32>} : memref<20x20x25xf32, #tpu.memory_space<vmem>>, vector<1x20x25xf32>,
    %c17_41 = arith.constant 17 : index
    %c0_42 = arith.constant 0 : index
    %c0_43 = arith.constant 0 : index
    %31 = vector.load %arg9[%c17_41, %c0_42, %c0_43] : memref<20x20x25xf32, #tpu.memory_space<vmem>>, vector<1x20x25xf32>
    %c18_44 = arith.constant 18 : index
    %c0_45 = arith.constant 0 : index
    %c0_46 = arith.constant 0 : index
    %32 = vector.load %arg9[%c18_44, %c0_45, %c0_46] : memref<20x20x25xf32, #tpu.memory_space<vmem>>, vector<1x20x25xf32>
    tpu.vector_store %arg9[%c18_44, %c0_45, %c0_46], %31 {strides = array<i32>} : memref<20x20x25xf32, #tpu.memory_space<vmem>>, vector<1x20x25xf32>,
    %c19_47 = arith.constant 19 : index
    %c0_48 = arith.constant 0 : index
    %c0_49 = arith.constant 0 : index
    %33 = vector.load %arg9[%c19_47, %c0_48, %c0_49] : memref<20x20x25xf32, #tpu.memory_space<vmem>>, vector<1x20x25xf32>
    tpu.vector_store %arg9[%c19_47, %c0_48, %c0_49], %31 {strides = array<i32>} : memref<20x20x25xf32, #tpu.memory_space<vmem>>, vector<1x20x25xf32>,
    %cst_50 = arith.constant 0.000000e+00 : f32
    %34 = vector.broadcast %cst_50 : f32 to vector<16x16xf32>
    %c0_51 = arith.constant 0 : index
    %c0_52 = arith.constant 0 : index
    %c0_53 = arith.constant 0 : index
    %35 = vector.load %arg9[%c0_51, %c0_52, %c0_53] : memref<20x20x25xf32, #tpu.memory_space<vmem>>, vector<16x20x25xf32>
    %36 = vector.extract_strided_slice %35 {offsets = [0, 0, 0], sizes = [16, 16, 1], strides = [1, 1, 1]} : vector<16x20x25xf32> to vector<16x16x1xf32>
    %37 = vector.shape_cast %36 : vector<16x16x1xf32> to vector<16x16xf32>
    %38 = arith.addf %34, %37 : vector<16x16xf32>
    %39 = vector.extract_strided_slice %35 {offsets = [0, 1, 1], sizes = [16, 16, 1], strides = [1, 1, 1]} : vector<16x20x25xf32> to vector<16x16x1xf32>
    %40 = vector.shape_cast %39 : vector<16x16x1xf32> to vector<16x16xf32>
    %41 = arith.addf %38, %40 : vector<16x16xf32>
    %42 = vector.extract_strided_slice %35 {offsets = [0, 2, 2], sizes = [16, 16, 1], strides = [1, 1, 1]} : vector<16x20x25xf32> to vector<16x16x1xf32>
    %43 = vector.shape_cast %42 : vector<16x16x1xf32> to vector<16x16xf32>
    %44 = arith.addf %41, %43 : vector<16x16xf32>
    %45 = vector.extract_strided_slice %35 {offsets = [0, 3, 3], sizes = [16, 16, 1], strides = [1, 1, 1]} : vector<16x20x25xf32> to vector<16x16x1xf32>
    %46 = vector.shape_cast %45 : vector<16x16x1xf32> to vector<16x16xf32>
    %47 = arith.addf %44, %46 : vector<16x16xf32>
    %48 = vector.extract_strided_slice %35 {offsets = [0, 4, 4], sizes = [16, 16, 1], strides = [1, 1, 1]} : vector<16x20x25xf32> to vector<16x16x1xf32>
    %49 = vector.shape_cast %48 : vector<16x16x1xf32> to vector<16x16xf32>
    %50 = arith.addf %47, %49 : vector<16x16xf32>
    %c1_54 = arith.constant 1 : index
    %c0_55 = arith.constant 0 : index
    %c0_56 = arith.constant 0 : index
    %51 = vector.load %arg9[%c1_54, %c0_55, %c0_56] : memref<20x20x25xf32, #tpu.memory_space<vmem>>, vector<16x20x25xf32>
    %52 = vector.extract_strided_slice %51 {offsets = [0, 0, 5], sizes = [16, 16, 1], strides = [1, 1, 1]} : vector<16x20x25xf32> to vector<16x16x1xf32>
    %53 = vector.shape_cast %52 : vector<16x16x1xf32> to vector<16x16xf32>
    %54 = arith.addf %50, %53 : vector<16x16xf32>
    %55 = vector.extract_strided_slice %51 {offsets = [0, 1, 6], sizes = [16, 16, 1], strides = [1, 1, 1]} : vector<16x20x25xf32> to vector<16x16x1xf32>
    %56 = vector.shape_cast %55 : vector<16x16x1xf32> to vector<16x16xf32>
    %57 = arith.addf %54, %56 : vector<16x16xf32>
    %58 = vector.extract_strided_slice %51 {offsets = [0, 2, 7], sizes = [16, 16, 1], strides = [1, 1, 1]} : vector<16x20x25xf32> to vector<16x16x1xf32>
    %59 = vector.shape_cast %58 : vector<16x16x1xf32> to vector<16x16xf32>
    %60 = arith.addf %57, %59 : vector<16x16xf32>
    %61 = vector.extract_strided_slice %51 {offsets = [0, 3, 8], sizes = [16, 16, 1], strides = [1, 1, 1]} : vector<16x20x25xf32> to vector<16x16x1xf32>
    %62 = vector.shape_cast %61 : vector<16x16x1xf32> to vector<16x16xf32>
    %63 = arith.addf %60, %62 : vector<16x16xf32>
    %64 = vector.extract_strided_slice %51 {offsets = [0, 4, 9], sizes = [16, 16, 1], strides = [1, 1, 1]} : vector<16x20x25xf32> to vector<16x16x1xf32>
    %65 = vector.shape_cast %64 : vector<16x16x1xf32> to vector<16x16xf32>
    %66 = arith.addf %63, %65 : vector<16x16xf32>
    %c2_57 = arith.constant 2 : index
    %c0_58 = arith.constant 0 : index
    %c0_59 = arith.constant 0 : index
    %67 = vector.load %arg9[%c2_57, %c0_58, %c0_59] : memref<20x20x25xf32, #tpu.memory_space<vmem>>, vector<16x20x25xf32>
    %68 = vector.extract_strided_slice %67 {offsets = [0, 0, 10], sizes = [16, 16, 1], strides = [1, 1, 1]} : vector<16x20x25xf32> to vector<16x16x1xf32>
    %69 = vector.shape_cast %68 : vector<16x16x1xf32> to vector<16x16xf32>
    %70 = arith.addf %66, %69 : vector<16x16xf32>
    %71 = vector.extract_strided_slice %67 {offsets = [0, 1, 11], sizes = [16, 16, 1], strides = [1, 1, 1]} : vector<16x20x25xf32> to vector<16x16x1xf32>
    %72 = vector.shape_cast %71 : vector<16x16x1xf32> to vector<16x16xf32>
    %73 = arith.addf %70, %72 : vector<16x16xf32>
    %74 = vector.extract_strided_slice %67 {offsets = [0, 2, 12], sizes = [16, 16, 1], strides = [1, 1, 1]} : vector<16x20x25xf32> to vector<16x16x1xf32>
    %75 = vector.shape_cast %74 : vector<16x16x1xf32> to vector<16x16xf32>
    %76 = arith.addf %73, %75 : vector<16x16xf32>
    %77 = vector.extract_strided_slice %67 {offsets = [0, 3, 13], sizes = [16, 16, 1], strides = [1, 1, 1]} : vector<16x20x25xf32> to vector<16x16x1xf32>
    %78 = vector.shape_cast %77 : vector<16x16x1xf32> to vector<16x16xf32>
    %79 = arith.addf %76, %78 : vector<16x16xf32>
    %80 = vector.extract_strided_slice %67 {offsets = [0, 4, 14], sizes = [16, 16, 1], strides = [1, 1, 1]} : vector<16x20x25xf32> to vector<16x16x1xf32>
    %81 = vector.shape_cast %80 : vector<16x16x1xf32> to vector<16x16xf32>
    %82 = arith.addf %79, %81 : vector<16x16xf32>
    %c3 = arith.constant 3 : index
    %c0_60 = arith.constant 0 : index
    %c0_61 = arith.constant 0 : index
    %83 = vector.load %arg9[%c3, %c0_60, %c0_61] : memref<20x20x25xf32, #tpu.memory_space<vmem>>, vector<16x20x25xf32>
    %84 = vector.extract_strided_slice %83 {offsets = [0, 0, 15], sizes = [16, 16, 1], strides = [1, 1, 1]} : vector<16x20x25xf32> to vector<16x16x1xf32>
    %85 = vector.shape_cast %84 : vector<16x16x1xf32> to vector<16x16xf32>
    %86 = arith.addf %82, %85 : vector<16x16xf32>
    %87 = vector.extract_strided_slice %83 {offsets = [0, 1, 16], sizes = [16, 16, 1], strides = [1, 1, 1]} : vector<16x20x25xf32> to vector<16x16x1xf32>
    %88 = vector.shape_cast %87 : vector<16x16x1xf32> to vector<16x16xf32>
    %89 = arith.addf %86, %88 : vector<16x16xf32>
    %90 = vector.extract_strided_slice %83 {offsets = [0, 2, 17], sizes = [16, 16, 1], strides = [1, 1, 1]} : vector<16x20x25xf32> to vector<16x16x1xf32>
    %91 = vector.shape_cast %90 : vector<16x16x1xf32> to vector<16x16xf32>
    %92 = arith.addf %89, %91 : vector<16x16xf32>
    %93 = vector.extract_strided_slice %83 {offsets = [0, 3, 18], sizes = [16, 16, 1], strides = [1, 1, 1]} : vector<16x20x25xf32> to vector<16x16x1xf32>
    %94 = vector.shape_cast %93 : vector<16x16x1xf32> to vector<16x16xf32>
    %95 = arith.addf %92, %94 : vector<16x16xf32>
    %96 = vector.extract_strided_slice %83 {offsets = [0, 4, 19], sizes = [16, 16, 1], strides = [1, 1, 1]} : vector<16x20x25xf32> to vector<16x16x1xf32>
    %97 = vector.shape_cast %96 : vector<16x16x1xf32> to vector<16x16xf32>
    %98 = arith.addf %95, %97 : vector<16x16xf32>
    %c4 = arith.constant 4 : index
    %c0_62 = arith.constant 0 : index
    %c0_63 = arith.constant 0 : index
    %99 = vector.load %arg9[%c4, %c0_62, %c0_63] : memref<20x20x25xf32, #tpu.memory_space<vmem>>, vector<16x20x25xf32>
    %100 = vector.extract_strided_slice %99 {offsets = [0, 0, 20], sizes = [16, 16, 1], strides = [1, 1, 1]} : vector<16x20x25xf32> to vector<16x16x1xf32>
    %101 = vector.shape_cast %100 : vector<16x16x1xf32> to vector<16x16xf32>
    %102 = arith.addf %98, %101 : vector<16x16xf32>
    %103 = vector.extract_strided_slice %99 {offsets = [0, 1, 21], sizes = [16, 16, 1], strides = [1, 1, 1]} : vector<16x20x25xf32> to vector<16x16x1xf32>
    %104 = vector.shape_cast %103 : vector<16x16x1xf32> to vector<16x16xf32>
    %105 = arith.addf %102, %104 : vector<16x16xf32>
    %106 = vector.extract_strided_slice %99 {offsets = [0, 2, 22], sizes = [16, 16, 1], strides = [1, 1, 1]} : vector<16x20x25xf32> to vector<16x16x1xf32>
    %107 = vector.shape_cast %106 : vector<16x16x1xf32> to vector<16x16xf32>
    %108 = arith.addf %105, %107 : vector<16x16xf32>
    %109 = vector.extract_strided_slice %99 {offsets = [0, 3, 23], sizes = [16, 16, 1], strides = [1, 1, 1]} : vector<16x20x25xf32> to vector<16x16x1xf32>
    %110 = vector.shape_cast %109 : vector<16x16x1xf32> to vector<16x16xf32>
    %111 = arith.addf %108, %110 : vector<16x16xf32>
    %112 = vector.extract_strided_slice %99 {offsets = [0, 4, 24], sizes = [16, 16, 1], strides = [1, 1, 1]} : vector<16x20x25xf32> to vector<16x16x1xf32>
    %113 = vector.shape_cast %112 : vector<16x16x1xf32> to vector<16x16xf32>
    %114 = arith.addf %111, %113 : vector<16x16xf32>
    %c0_64 = arith.constant 0 : index
    %c0_65 = arith.constant 0 : index
    %115 = vector.load %arg7[%c0_64, %c0_65] : memref<1x1xf32, #tpu.memory_space<vmem>>, vector<1x1xf32>
    %116 = vector.broadcast %115 : vector<1x1xf32> to vector<16x16xf32>
    %117 = arith.addf %114, %116 : vector<16x16xf32>
    %c0_66 = arith.constant 0 : index
    %c0_67 = arith.constant 0 : index
    %c0_68 = arith.constant 0 : index
    %118 = vector.load %arg8[%c0_66, %c0_67, %c0_68] : memref<1x16x16xf32, #tpu.memory_space<vmem>>, vector<1x16x16xf32>
    %119 = vector.shape_cast %118 : vector<1x16x16xf32> to vector<16x16xf32>
    %120 = vector.shape_cast %117 : vector<16x16xf32> to vector<1x16x16xf32>
    tpu.vector_store %arg8[%c0_66, %c0_67, %c0_68], %120 {strides = array<i32>} : memref<1x16x16xf32, #tpu.memory_space<vmem>>, vector<1x16x16xf32>,
    return
  }
  func.func @transform_0(%arg0: i32) -> (i32, i32, i32) {
    %c0_i32 = arith.constant 0 : i32
    %c0_i32_0 = arith.constant 0 : i32
    %c0_i32_1 = arith.constant 0 : i32
    return %arg0, %c0_i32, %c0_i32_0 : i32, i32, i32
  }
  func.func @transform_1(%arg0: i32) -> (i32, i32) {
    %c0_i32 = arith.constant 0 : i32
    %c0_i32_0 = arith.constant 0 : i32
    %c0_i32_1 = arith.constant 0 : i32
    return %c0_i32, %c0_i32_0 : i32, i32
  }
  func.func @transform_2(%arg0: i32) -> (i32, i32) {
    %c0_i32 = arith.constant 0 : i32
    %c0_i32_0 = arith.constant 0 : i32
    %c0_i32_1 = arith.constant 0 : i32
    return %c0_i32, %c0_i32_0 : i32, i32
  }
  func.func @transform_3(%arg0: i32) -> (i32, i32) {
    %c0_i32 = arith.constant 0 : i32
    %c0_i32_0 = arith.constant 0 : i32
    %c0_i32_1 = arith.constant 0 : i32
    return %c0_i32, %c0_i32_0 : i32, i32
  }
  func.func @transform_4(%arg0: i32) -> (i32, i32) {
    %c0_i32 = arith.constant 0 : i32
    %c0_i32_0 = arith.constant 0 : i32
    %c0_i32_1 = arith.constant 0 : i32
    return %c0_i32, %c0_i32_0 : i32, i32
  }
  func.func @transform_5(%arg0: i32) -> (i32, i32) {
    %c0_i32 = arith.constant 0 : i32
    %c0_i32_0 = arith.constant 0 : i32
    %c0_i32_1 = arith.constant 0 : i32
    return %c0_i32, %c0_i32_0 : i32, i32
  }
  func.func @transform_6(%arg0: i32) -> (i32, i32) {
    %c0_i32 = arith.constant 0 : i32
    %c0_i32_0 = arith.constant 0 : i32
    %c0_i32_1 = arith.constant 0 : i32
    return %c0_i32, %c0_i32_0 : i32, i32
  }
  func.func @transform_7(%arg0: i32) -> (i32, i32, i32) {
    %c0_i32 = arith.constant 0 : i32
    %c0_i32_0 = arith.constant 0 : i32
    %c0_i32_1 = arith.constant 0 : i32
    return %arg0, %c0_i32, %c0_i32_0 : i32, i32, i32
  }
}

</mosaic_0001>

<llo_original>
// kernel: srcnn_forward.1
$region0: #{srcnn_forward.1}
  #allocation0 [shape = 'u32[]', space=smem, size = 0x4, offset = 0x4, fixed_abs, tag = 'smem constant byte address 0x4 - core index']
  #allocation1 [shape = 'u32[144,128]{1,0:T(1,128)}', space=vmem, size = 0x12000, scoped, tag = 'internal scratch']
  #allocation2 [shape = 'f32[20,20,25]{2,1,0:T(8,128)}', space=vmem, size = 0x3c000, scoped, tag = 'scratch operand']
  #allocation3 [shape = 'f32[1,1]{1,0:T(1,128)S(1)}', space=vmem, size = 0x200, scoped, tag = 'scoped memory for srcnn_forward.1']
  %s0 = inlined_call_operand.vmem [shape: bf16[2,256,81], index: 0, kind: input, shape index: {}]
  %s1 = inlined_call_operand.vmem [shape: bf16[81,64], index: 1, kind: input, shape index: {}]
  %s2 = inlined_call_operand.vmem [shape: f32[1,64], index: 2, kind: input, shape index: {}]
  %s3 = inlined_call_operand.vmem [shape: bf16[64,32], index: 3, kind: input, shape index: {}]
  %s4 = inlined_call_operand.vmem [shape: f32[1,32], index: 4, kind: input, shape index: {}]
  %s5 = inlined_call_operand.vmem [shape: bf16[32,25], index: 5, kind: input, shape index: {}]
  %s6 = inlined_call_operand.<no memory space> [shape: f32[1,1], index: 6, kind: input, shape index: {}]
  %s7 = inlined_call_operand.hbm [shape: f32[2,16,16], index: 7, kind: output, shape index: {}]
  %s8 = sld [smem:[#allocation0]]
  $region61: #{srcnn_forward.1} parent=0
    _
  %s10 = ssub.s32 1, %s8
  %s11 = scalar_select 0, %s10, %s8
  %v12 = vstv %s6
  %13 = vst [vmem:[#allocation3] sm:$0x1] %v12
  $region1: #{srcnn_forward.1} parent=0
    #allocation4 [shape = 'u8[16384]{0}', space=vmem, size = 0x4000, scoped, tag = 'output window, operand 0']
    #allocation5 [shape = 's32[2]{0}', space=sflag, size = 0x8, scoped, tag = 'scoped memory for srcnn_forward.1']
    %14 = vsyncpa [#allocation5], 0
    %s15 = scalar_lea.sflag [#allocation5], 1
    %16 = vsyncpa %s15, 0
    loop: start=0, step=1, limit=4
    $region2: #{srcnn_forward.1} parent=1 // loop_pre_header
      _
    $region3: #{srcnn_forward.1} parent=1 // loop_header
      %s18 = sphi 0, %s22
      %p19 = scmp.ge.s32.totalorder %s18, 4
      %s28 = sphi 0, %s30
      %s31 = sphi 0, %s28
      %s32 = sphi 0, %s31
      %s48 = sphi 0, %s32
      %s52 = sphi 0, %s52
      %s54 = sphi 0, %s52
      %s55 = sphi 0, %s54
      %s69 = sphi 0, %s55
      %s73 = sphi 0, %s73
      %s75 = sphi 0, %s73
      %s76 = sphi 0, %s75
      %s90 = sphi 0, %s76
      %s94 = sphi 0, %s94
      %s96 = sphi 0, %s94
      %s97 = sphi 0, %s96
      %s111 = sphi 0, %s97
      %s115 = sphi 0, %s115
      %s117 = sphi 0, %s115
      %s118 = sphi 0, %s117
      %s132 = sphi 0, %s118
      %s136 = sphi 0, %s136
      %s138 = sphi 0, %s136
      %s139 = sphi 0, %s138
      %s153 = sphi 0, %s139
      %s157 = sphi 0, %s157
      %s159 = sphi 0, %s157
      %s160 = sphi 0, %s159
      %s174 = sphi 0, %s160
      %s180 = sphi 0, %s182
      %s183 = sphi 0, %s180
      %s184 = sphi 0, %s183
      %s200 = sphi 0, %s184
    $region4: #{srcnn_forward.1} parent=1 // loop_header_branch
      %21 = sbr.rel (%p19) target = $region8
    $region5: #{srcnn_forward.1} parent=1 // loop_body
      %s23 = ssub.s32 %s18, 1
      %s24 = ssub.s32 %s18, 2
      %s25 = sadd.s32 %s18, 1
      %s26 = ssub.s32 %s18, %s25
      %p27 = scmp.eq.s32.totalorder %s26, 0
      %s29 = sadd.s32 %s28, 1
      %s30 = scalar_select %p27, %s28, %s29
      %p33 = pneg %p27
      %p34 = scmp.eq.s32.totalorder %s18, 1
      %p35 = por %p33, %p34
      %p36 = scmp.ne.s32.totalorder %s28, %s31
      %p37 = scmp.eq.s32.totalorder %s18, 0
      %p38 = por %p36, %p37
      %p39 = scmp.ne.s32.totalorder %s28, %s31
      %p40 = scmp.eq.s32.totalorder %s23, 1
      %p41 = por %p39, %p40
      %p42 = scmp.ne.s32.totalorder %s31, %s32
      %p43 = scmp.eq.s32.totalorder %s23, 0
      %p44 = por %p42, %p43
      %p45 = scmp.ne.s32.totalorder %s31, %s32
      %p46 = scmp.eq.s32.totalorder %s24, 1
      %p47 = por %p45, %p46
      %p49 = scmp.ne.s32.totalorder %s32, %s48
      %p50 = scmp.eq.s32.totalorder %s24, 0
      %p51 = por %p49, %p50
      %s53 = sadd.s32 %s52, 1
      %p56 = scmp.eq.s32.totalorder %s18, 1
      %p57 = scmp.ne.s32.totalorder %s52, %s54
      %p58 = scmp.eq.s32.totalorder %s18, 0
      %p59 = por %p57, %p58
      %p60 = scmp.ne.s32.totalorder %s52, %s54
      %p61 = scmp.eq.s32.totalorder %s23, 1
      %p62 = por %p60, %p61
      %p63 = scmp.ne.s32.totalorder %s54, %s55
      %p64 = scmp.eq.s32.totalorder %s23, 0
      %p65 = por %p63, %p64
      %p66 = scmp.ne.s32.totalorder %s54, %s55
      %p67 = scmp.eq.s32.totalorder %s24, 1
      %p68 = por %p66, %p67
      %p70 = scmp.ne.s32.totalorder %s55, %s69
      %p71 = scmp.eq.s32.totalorder %s24, 0
      %p72 = por %p70, %p71
      %s74 = sadd.s32 %s73, 1
      %p77 = scmp.eq.s32.totalorder %s18, 1
      %p78 = scmp.ne.s32.totalorder %s73, %s75
      %p79 = scmp.eq.s32.totalorder %s18, 0
      %p80 = por %p78, %p79
      %p81 = scmp.ne.s32.totalorder %s73, %s75
      %p82 = scmp.eq.s32.totalorder %s23, 1
      %p83 = por %p81, %p82
      %p84 = scmp.ne.s32.totalorder %s75, %s76
      %p85 = scmp.eq.s32.totalorder %s23, 0
      %p86 = por %p84, %p85
      %p87 = scmp.ne.s32.totalorder %s75, %s76
      %p88 = scmp.eq.s32.totalorder %s24, 1
      %p89 = por %p87, %p88
      %p91 = scmp.ne.s32.totalorder %s76, %s90
      %p92 = scmp.eq.s32.totalorder %s24, 0
      %p93 = por %p91, %p92
      %s95 = sadd.s32 %s94, 1
      %p98 = scmp.eq.s32.totalorder %s18, 1
      %p99 = scmp.ne.s32.totalorder %s94, %s96
      %p100 = scmp.eq.s32.totalorder %s18, 0
      %p101 = por %p99, %p100
      %p102 = scmp.ne.s32.totalorder %s94, %s96
      %p103 = scmp.eq.s32.totalorder %s23, 1
      %p104 = por %p102, %p103
      %p105 = scmp.ne.s32.totalorder %s96, %s97
      %p106 = scmp.eq.s32.totalorder %s23, 0
      %p107 = por %p105, %p106
      %p108 = scmp.ne.s32.totalorder %s96, %s97
      %p109 = scmp.eq.s32.totalorder %s24, 1
      %p110 = por %p108, %p109
      %p112 = scmp.ne.s32.totalorder %s97, %s111
      %p113 = scmp.eq.s32.totalorder %s24, 0
      %p114 = por %p112, %p113
      %s116 = sadd.s32 %s115, 1
      %p119 = scmp.eq.s32.totalorder %s18, 1
      %p120 = scmp.ne.s32.totalorder %s115, %s117
      %p121 = scmp.eq.s32.totalorder %s18, 0
      %p122 = por %p120, %p121
      %p123 = scmp.ne.s32.totalorder %s115, %s117
      %p124 = scmp.eq.s32.totalorder %s23, 1
      %p125 = por %p123, %p124
      %p126 = scmp.ne.s32.totalorder %s117, %s118
      %p127 = scmp.eq.s32.totalorder %s23, 0
      %p128 = por %p126, %p127
      %p129 = scmp.ne.s32.totalorder %s117, %s118
      %p130 = scmp.eq.s32.totalorder %s24, 1
      %p131 = por %p129, %p130
      %p133 = scmp.ne.s32.totalorder %s118, %s132
      %p134 = scmp.eq.s32.totalorder %s24, 0
      %p135 = por %p133, %p134
      %s137 = sadd.s32 %s136, 1
      %p140 = scmp.eq.s32.totalorder %s18, 1
      %p141 = scmp.ne.s32.totalorder %s136, %s138
      %p142 = scmp.eq.s32.totalorder %s18, 0
      %p143 = por %p141, %p142
      %p144 = scmp.ne.s32.totalorder %s136, %s138
      %p145 = scmp.eq.s32.totalorder %s23, 1
      %p146 = por %p144, %p145
      %p147 = scmp.ne.s32.totalorder %s138, %s139
      %p148 = scmp.eq.s32.totalorder %s23, 0
      %p149 = por %p147, %p148
      %p150 = scmp.ne.s32.totalorder %s138, %s139
      %p151 = scmp.eq.s32.totalorder %s24, 1
      %p152 = por %p150, %p151
      %p154 = scmp.ne.s32.totalorder %s139, %s153
      %p155 = scmp.eq.s32.totalorder %s24, 0
      %p156 = por %p154, %p155
      %s158 = sadd.s32 %s157, 1
      %p161 = scmp.eq.s32.totalorder %s18, 1
      %p162 = scmp.ne.s32.totalorder %s157, %s159
      %p163 = scmp.eq.s32.totalorder %s18, 0
      %p164 = por %p162, %p163
      %p165 = scmp.ne.s32.totalorder %s157, %s159
      %p166 = scmp.eq.s32.totalorder %s23, 1
      %p167 = por %p165, %p166
      %p168 = scmp.ne.s32.totalorder %s159, %s160
      %p169 = scmp.eq.s32.totalorder %s23, 0
      %p170 = por %p168, %p169
      %p171 = scmp.ne.s32.totalorder %s159, %s160
      %p172 = scmp.eq.s32.totalorder %s24, 1
      %p173 = por %p171, %p172
      %p175 = scmp.ne.s32.totalorder %s160, %s174
      %p176 = scmp.eq.s32.totalorder %s24, 0
      %p177 = por %p175, %p176
      %s178 = ssub.s32 %s18, %s25
      %p179 = scmp.eq.s32.totalorder %s178, 0
      %s181 = sadd.s32 %s180, 1
      %s182 = scalar_select %p179, %s180, %s181
      %p185 = pneg %p179
      %p186 = scmp.eq.s32.totalorder %s18, 1
      %p187 = por %p185, %p186
      %p188 = scmp.ne.s32.totalorder %s180, %s183
      %p189 = scmp.eq.s32.totalorder %s18, 0
      %p190 = por %p188, %p189
      %p191 = scmp.ne.s32.totalorder %s180, %s183
      %p192 = scmp.eq.s32.totalorder %s23, 1
      %p193 = por %p191, %p192
      %p194 = scmp.ne.s32.totalorder %s183, %s184
      %p195 = scmp.eq.s32.totalorder %s23, 0
      %p196 = por %p194, %p195
      %p197 = scmp.ne.s32.totalorder %s183, %s184
      %p198 = scmp.eq.s32.totalorder %s24, 1
      %p199 = por %p197, %p198
      %p201 = scmp.ne.s32.totalorder %s184, %s200
      %p202 = scmp.eq.s32.totalorder %s24, 0
      %p203 = por %p201, %p202
      %p204 = scmp.le.s32.totalorder 1, %s18
      %p205 = scmp.lt.s32.totalorder %s18, 3
      %p206 = pnand %p204, %p205
      %p207 = pneg %p206
      // Predicated region
      $region9: #{srcnn_forward.1} parent=5 // pred_check
        _
      $region10: #{srcnn_forward.1} parent=5 // pred_check_branch
        %209 = sbr.rel (%p206) target = $region12
      $region11: #{srcnn_forward.1} parent=5 // pred_region
        %s210 = ssub.s32 %s18, 1
        // Predicated region
        $region13: #{srcnn_forward.1} parent=11 // pred_check
          %p211 = pneg %p65
        $region14: #{srcnn_forward.1} parent=11 // pred_check_branch
          %213 = sbr.rel (%p211) target = $region16
        $region15: #{srcnn_forward.1} parent=11 // pred_region
          _
        $region16: #{srcnn_forward.1} parent=11 // pred_fallthru
          _
        // Predicated region
        $region17: #{srcnn_forward.1} parent=11 // pred_check
          %p214 = pneg %p86
        $region18: #{srcnn_forward.1} parent=11 // pred_check_branch
          %216 = sbr.rel (%p214) target = $region20
        $region19: #{srcnn_forward.1} parent=11 // pred_region
          _
        $region20: #{srcnn_forward.1} parent=11 // pred_fallthru
          _
        // Predicated region
        $region21: #{srcnn_forward.1} parent=11 // pred_check
          %p217 = pneg %p107
        $region22: #{srcnn_forward.1} parent=11 // pred_check_branch
          %219 = sbr.rel (%p217) target = $region24
        $region23: #{srcnn_forward.1} parent=11 // pred_region
          _
        $region24: #{srcnn_forward.1} parent=11 // pred_fallthru
          _
        // Predicated region
        $region25: #{srcnn_forward.1} parent=11 // pred_check
          %p220 = pneg %p128
        $region26: #{srcnn_forward.1} parent=11 // pred_check_branch
          %222 = sbr.rel (%p220) target = $region28
        $region27: #{srcnn_forward.1} parent=11 // pred_region
          _
        $region28: #{srcnn_forward.1} parent=11 // pred_fallthru
          _
        // Predicated region
        $region29: #{srcnn_forward.1} parent=11 // pred_check
          %p223 = pneg %p149
        $region30: #{srcnn_forward.1} parent=11 // pred_check_branch
          %225 = sbr.rel (%p223) target = $region32
        $region31: #{srcnn_forward.1} parent=11 // pred_region
          _
        $region32: #{srcnn_forward.1} parent=11 // pred_fallthru
          _
        // Predicated region
        $region33: #{srcnn_forward.1} parent=11 // pred_check
          %p226 = pneg %p170
        $region34: #{srcnn_forward.1} parent=11 // pred_check_branch
          %228 = sbr.rel (%p226) target = $region36
        $region35: #{srcnn_forward.1} parent=11 // pred_region
          _
        $region36: #{srcnn_forward.1} parent=11 // pred_fallthru
          _
      $region12: #{srcnn_forward.1} parent=5 // pred_fallthru
        _
      %p229 = scmp.lt.s32.totalorder %s18, 2
      // Predicated region
      $region37: #{srcnn_forward.1} parent=5 // pred_check
        %p230 = pneg %p229
      $region38: #{srcnn_forward.1} parent=5 // pred_check_branch
        %232 = sbr.rel (%p230) target = $region40
      $region39: #{srcnn_forward.1} parent=5 // pred_region
        // Predicated region
        $region41: #{srcnn_forward.1} parent=39 // pred_check
          %p233 = pneg %p38
        $region42: #{srcnn_forward.1} parent=39 // pred_check_branch
          %235 = sbr.rel (%p233) target = $region44
        $region43: #{srcnn_forward.1} parent=39 // pred_region
          %p236 = scmp.lt.s32.totalorder %s18, 1
          %s237 = scalar_select %p236, %s18, 1
          %s238 = smul.addr %s237, 32
          %s239 = smul.addr %s238, 4
          %s240 = scalar_lea.vmem %s0, %s239
        $region44: #{srcnn_forward.1} parent=39 // pred_fallthru
          _
      $region40: #{srcnn_forward.1} parent=5 // pred_fallthru
        _
      %p241 = scmp.le.s32.totalorder 1, %s18
      %p242 = scmp.lt.s32.totalorder %s18, 3
      %p243 = pnand %p241, %p242
      %p244 = pneg %p243
      // Predicated region
      $region45: #{srcnn_forward.1} parent=5 // pred_check
        _
      $region46: #{srcnn_forward.1} parent=5 // pred_check_branch
        %246 = sbr.rel (%p243) target = $region48
      $region47: #{srcnn_forward.1} parent=5 // pred_region
        %s247 = ssub.s32 %s18, 1
        %p248 = scmp.lt.s32.totalorder %s23, 1
        %s249 = scalar_select %p248, %s23, 1
        %s250 = smul.addr %s249, 32
        %s251 = smul.addr %s250, 4
        %s252 = scalar_lea.vmem %s0, %s251
        %p253 = pneg %p44
        %p254 = pneg %p41
        %p255 = pneg %p65
        %p256 = pneg %p62
        %p257 = pneg %p86
        %p258 = pneg %p83
        %p259 = pneg %p107
        %p260 = pneg %p104
        %p261 = pneg %p128
        %p262 = pneg %p125
        %p263 = pneg %p149
        %p264 = pneg %p146
        %p265 = pneg %p170
        %p266 = pneg %p167
        %p267 = pneg %p196
        %p268 = pneg %p193
        %s269 = sand.u32 %s183, 1
        %s270 = scalar_lea.sflag [#allocation5], %s269
        %s271 = sand.u32 %s183, 1
        %s272 = smul.addr %s271, 16
        %s273 = scalar_lea.vmem [#allocation4], %s272
        %p274 = scmp.lt.s32.totalorder %s23, 1
        %s275 = scalar_select %p274, %s23, 1
        %s276 = smul.addr %s275, 32
        %s277 = smul.addr %s276, 4
        %s278 = scalar_lea.vmem %s0, %s277
        %v280 = vld [vmem:[%s278] sm:$0xf]
        %v281 = vld [vmem:[%s278 + $0x4] sm:$0xf]
        %v282 = vld [vmem:[%s278 + $0x8] sm:$0xf]
        %v283 = vld [vmem:[%s278 + $0xc] sm:$0xf]
        %v284 = vld [vmem:[%s278 + $0x10] sm:$0xf]
        %v285 = vld [vmem:[%s278 + $0x14] sm:$0xf]
        %v286 = vld [vmem:[%s278 + $0x18] sm:$0xf]
        %v287 = vld [vmem:[%s278 + $0x1c] sm:$0xf]
        %v288 = vld [vmem:[%s278 + $0x20] sm:$0xf]
        %v289 = vld [vmem:[%s278 + $0x24] sm:$0xf]
        %v290 = vld [vmem:[%s278 + $0x28] sm:$0xf]
        %v291 = vld [vmem:[%s278 + $0x2c] sm:$0xf]
        %v292 = vld [vmem:[%s278 + $0x30] sm:$0xf]
        %v293 = vld [vmem:[%s278 + $0x34] sm:$0xf]
        %v294 = vld [vmem:[%s278 + $0x38] sm:$0xf]
        %v295 = vld [vmem:[%s278 + $0x3c] sm:$0xf]
        %v296 = vld [vmem:[%s278 + $0x40] sm:$0xf]
        %v297 = vld [vmem:[%s278 + $0x44] sm:$0xf]
        %v298 = vld [vmem:[%s278 + $0x48] sm:$0xf]
        %v299 = vld [vmem:[%s278 + $0x4c] sm:$0xf]
        %v300 = vld [vmem:[%s278 + $0x50] sm:$0xf]
        %v301 = vld [vmem:[%s278 + $0x54] sm:$0xf]
        %v302 = vld [vmem:[%s278 + $0x58] sm:$0xf]
        %v303 = vld [vmem:[%s278 + $0x5c] sm:$0xf]
        %v304 = vld [vmem:[%s278 + $0x60] sm:$0xf]
        %v305 = vld [vmem:[%s278 + $0x64] sm:$0xf]
        %v306 = vld [vmem:[%s278 + $0x68] sm:$0xf]
        %v307 = vld [vmem:[%s278 + $0x6c] sm:$0xf]
        %v308 = vld [vmem:[%s278 + $0x70] sm:$0xf]
        %v309 = vld [vmem:[%s278 + $0x74] sm:$0xf]
        %v310 = vld [vmem:[%s278 + $0x78] sm:$0xf]
        %v311 = vld [vmem:[%s278 + $0x7c] sm:$0xf]
        %v312 = vld [vmem:[%s1] sm:$0xf]
        %v313 = vld [vmem:[%s1 + $0x4] sm:$0xf]
        %v314 = vld [vmem:[%s1 + $0x8] sm:$0xf]
        %v315 = vld [vmem:[%s1 + $0xc] sm:$0xf]
        %v316 = vld [vmem:[%s1 + $0x10] sm:$0xf]
        %v317 = vld [vmem:[%s1 + $0x14] sm:$0xf]
        %v318 = vld [vmem:[%s1 + $0x18] sm:$0xf]
        %v319 = vld [vmem:[%s1 + $0x1c] sm:$0xf]
        %v320 = vld [vmem:[%s1 + $0x20] sm:$0xf]
        %v321 = vld [vmem:[%s1 + $0x24] sm:$0xf]
        %v322 = vld [vmem:[%s1 + $0x28] sm:$0x1]
        %v323 = vld [vmem:[%s2] sm:$0x1]
        %v325 = vlaneseq
        %v326 = vshrl.u32 %v325, 7
        %v327 = vsub.s32 0, %v326
        %v328 = vrot.slane %v323, %v327
        %v362 = vunpack.c.l.b16 %v280
        %v363 = vunpack.c.l.b16 %v281
        %v364 = vunpack.c.l.b16 %v282
        %v365 = vunpack.c.l.b16 %v283
        %v366 = vunpack.c.l.b16 %v284
        %v367 = vunpack.c.l.b16 %v285
        %v368 = vunpack.c.l.b16 %v286
        %v369 = vunpack.c.l.b16 %v287
        %v370 = vunpack.c.l.b16 %v288
        %v371 = vunpack.c.l.b16 %v289
        %v372 = vunpack.c.l.b16 %v290
        %v373 = vunpack.c.l.b16 %v291
        %v374 = vunpack.c.l.b16 %v292
        %v375 = vunpack.c.l.b16 %v293
        %v376 = vunpack.c.l.b16 %v294
        %v377 = vunpack.c.l.b16 %v295
        %v378 = vunpack.c.l.b16 %v296
        %v379 = vunpack.c.l.b16 %v297
        %v380 = vunpack.c.l.b16 %v298
        %v381 = vunpack.c.l.b16 %v299
        %v382 = vunpack.c.l.b16 %v300
        %v383 = vunpack.c.l.b16 %v301
        %v384 = vunpack.c.l.b16 %v302
        %v385 = vunpack.c.l.b16 %v303
        %v386 = vunpack.c.l.b16 %v304
        %v387 = vunpack.c.l.b16 %v305
        %v388 = vunpack.c.l.b16 %v306
        %v389 = vunpack.c.l.b16 %v307
        %v390 = vunpack.c.l.b16 %v308
        %v391 = vunpack.c.l.b16 %v309
        %v392 = vunpack.c.l.b16 %v310
        %v393 = vunpack.c.l.b16 %v311
        %v394 = vpack.c.b16 %v363, %v362
        %v395 = vpack.c.b16 %v365, %v364
        %v396 = vpack.c.b16 %v367, %v366
        %v397 = vpack.c.b16 %v369, %v368
        %v398 = vpack.c.b16 %v371, %v370
        %v399 = vpack.c.b16 %v373, %v372
        %v400 = vpack.c.b16 %v375, %v374
        %v401 = vpack.c.b16 %v377, %v376
        %v402 = vpack.c.b16 %v379, %v378
        %v403 = vpack.c.b16 %v381, %v380
        %v404 = vpack.c.b16 %v383, %v382
        %v405 = vpack.c.b16 %v385, %v384
        %v406 = vpack.c.b16 %v387, %v386
        %v407 = vpack.c.b16 %v389, %v388
        %v408 = vpack.c.b16 %v391, %v390
        %v409 = vpack.c.b16 %v393, %v392
        %v421 = vunpack.c.l.b16 %v312
        %v422 = vunpack.c.l.b16 %v313
        %v423 = vunpack.c.l.b16 %v314
        %v424 = vunpack.c.l.b16 %v315
        %v425 = vunpack.c.l.b16 %v316
        %v426 = vunpack.c.l.b16 %v317
        %v427 = vunpack.c.l.b16 %v318
        %v428 = vunpack.c.l.b16 %v319
        %v429 = vunpack.c.l.b16 %v320
        %v430 = vunpack.c.l.b16 %v321
        %v431 = vunpack.c.l.b16 %v322
        %v432 = vpack.c.b16 %v422, %v421
        %v433 = vpack.c.b16 %v424, %v423
        %v434 = vpack.c.b16 %v426, %v425
        %v435 = vpack.c.b16 %v428, %v427
        %v436 = vpack.c.b16 %v430, %v429
        %v437 = vpack.c.b16 %v431, %v431
        %vm443 = vcmask 662528
        %v445 = vsel %vm443, %v394, 0
        %v448 = vsel %vm443, %v395, 0
        %v451 = vsel %vm443, %v396, 0
        %v454 = vsel %vm443, %v397, 0
        %v457 = vsel %vm443, %v398, 0
        %v460 = vsel %vm443, %v399, 0
        %v463 = vsel %vm443, %v400, 0
        %v466 = vsel %vm443, %v401, 0
        %v469 = vsel %vm443, %v402, 0
        %v472 = vsel %vm443, %v403, 0
        %v475 = vsel %vm443, %v404, 0
        %v478 = vsel %vm443, %v405, 0
        %v481 = vsel %vm443, %v406, 0
        %v484 = vsel %vm443, %v407, 0
        %v487 = vsel %vm443, %v408, 0
        %v490 = vsel %vm443, %v409, 0
        %vm492 = vcmask 1040384
        %v493 = vsel 0, 4294967295, 65535
        %v494 = vsel %vm492, %v493, 0
        %v496 = vand.u32 %v437, %v494
        %498 = vmatprep.subr.bf16.mxu0 0
        %499 = vmatpush1.bf16.msra.mxu0 %v432
        %500 = vmatprep.subr.bf16.mxu0 0
        %501 = vmatpush1.bf16.msra.mxu0 %v433
        %502 = vmatprep.subr.bf16.mxu0 0
        %503 = vmatpush1.bf16.msra.mxu0 %v434
        %504 = vmatprep.subr.bf16.mxu0 0
        %505 = vmatpush1.bf16.msra.mxu0 %v435
        %506 = vmatprep.subr.bf16.mxu0 0
        %507 = vmatpush1.bf16.msra.mxu0 %v436
        %508 = vmatprep.subr.bf16.mxu0 0
        %509 = vmatpush1.bf16.msra.mxu0 %v496
        %510 = vmatprep.subr.bf16.mxu0 0
        %511 = vmatpush1.bf16.msra.mxu0 0
        %512 = vmatprep.subr.bf16.mxu0 0
        %513 = vmatpush1.bf16.msra.mxu0 0
        %514 = vmatprep.subr.bf16.mxu0 0
        %515 = vmatpush1.bf16.msra.mxu0 0
        %516 = vmatprep.subr.bf16.mxu0 0
        %517 = vmatpush1.bf16.msra.mxu0 0
        %518 = vmatprep.subr.bf16.mxu0 0
        %519 = vmatpush1.bf16.msra.mxu0 0
        %520 = vmatprep.subr.bf16.mxu0 0
        %521 = vmatpush1.bf16.msra.mxu0 0
        %522 = vmatprep.subr.bf16.mxu0 0
        %523 = vmatpush1.bf16.msra.mxu0 0
        %524 = vmatprep.subr.bf16.mxu0 0
        %525 = vmatpush1.bf16.msra.mxu0 0
        %526 = vmatprep.subr.bf16.mxu0 0
        %527 = vmatpush1.bf16.msra.mxu0 0
        %528 = vmatprep.subr.bf16.mxu0 0
        %529 = vmatpush1.bf16.msra.mxu0 0
        %530 = vmatprep.mubr.bf16.mxu0 0
        %531 = vmatmul.mubr.bf16.gmra.mrb[0].mxu0 %v445
        %v532 = vpop.f32.mrb[0].mxu0
        %v533 = vadd.f32 %v328, %v532
        %v534 = vpop.f32.mrb[0].mxu0
        %v535 = vpop.f32.mrb[0].mxu0
        %v536 = vadd.f32 %v328, %v535
        %v537 = vpop.f32.mrb[0].mxu0
        %538 = vmatprep.mubr.bf16.mxu0 0
        %539 = vmatmul.mubr.bf16.gmra.mrb[0].mxu0 %v448
        %v540 = vpop.f32.mrb[0].mxu0
        %v541 = vadd.f32 %v328, %v540
        %v542 = vpop.f32.mrb[0].mxu0
        %v543 = vpop.f32.mrb[0].mxu0
        %v544 = vadd.f32 %v328, %v543
        %v545 = vpop.f32.mrb[0].mxu0
        %546 = vmatprep.mubr.bf16.mxu0 0
        %547 = vmatmul.mubr.bf16.gmra.mrb[0].mxu0 %v451
        %v548 = vpop.f32.mrb[0].mxu0
        %v549 = vadd.f32 %v328, %v548
        %v550 = vpop.f32.mrb[0].mxu0
        %v551 = vpop.f32.mrb[0].mxu0
        %v552 = vadd.f32 %v328, %v551
        %v553 = vpop.f32.mrb[0].mxu0
        %554 = vmatprep.mubr.bf16.mxu0 0
        %555 = vmatmul.mubr.bf16.gmra.mrb[0].mxu0 %v454
        %v556 = vpop.f32.mrb[0].mxu0
        %v557 = vadd.f32 %v328, %v556
        %v558 = vpop.f32.mrb[0].mxu0
        %v559 = vpop.f32.mrb[0].mxu0
        %v560 = vadd.f32 %v328, %v559
        %v561 = vpop.f32.mrb[0].mxu0
        %562 = vmatprep.mubr.bf16.mxu0 0
        %563 = vmatmul.mubr.bf16.gmra.mrb[0].mxu0 %v457
        %v564 = vpop.f32.mrb[0].mxu0
        %v565 = vadd.f32 %v328, %v564
        %v566 = vpop.f32.mrb[0].mxu0
        %v567 = vpop.f32.mrb[0].mxu0
        %v568 = vadd.f32 %v328, %v567
        %v569 = vpop.f32.mrb[0].mxu0
        %570 = vmatprep.mubr.bf16.mxu0 0
        %571 = vmatmul.mubr.bf16.gmra.mrb[0].mxu0 %v460
        %v572 = vpop.f32.mrb[0].mxu0
        %v573 = vadd.f32 %v328, %v572
        %v574 = vpop.f32.mrb[0].mxu0
        %v575 = vpop.f32.mrb[0].mxu0
        %v576 = vadd.f32 %v328, %v575
        %v577 = vpop.f32.mrb[0].mxu0
        %578 = vmatprep.mubr.bf16.mxu0 0
        %579 = vmatmul.mubr.bf16.gmra.mrb[0].mxu0 %v463
        %v580 = vpop.f32.mrb[0].mxu0
        %v581 = vadd.f32 %v328, %v580
        %v582 = vpop.f32.mrb[0].mxu0
        %v583 = vpop.f32.mrb[0].mxu0
        %v584 = vadd.f32 %v328, %v583
        %v585 = vpop.f32.mrb[0].mxu0
        %586 = vmatprep.mubr.bf16.mxu0 0
        %587 = vmatmul.mubr.bf16.gmra.mrb[0].mxu0 %v466
        %v588 = vpop.f32.mrb[0].mxu0
        %v589 = vadd.f32 %v328, %v588
        %v590 = vpop.f32.mrb[0].mxu0
        %v591 = vpop.f32.mrb[0].mxu0
        %v592 = vadd.f32 %v328, %v591
        %v593 = vpop.f32.mrb[0].mxu0
        %594 = vmatprep.mubr.bf16.mxu0 0
        %595 = vmatmul.mubr.bf16.gmra.mrb[0].mxu0 %v469
        %v596 = vpop.f32.mrb[0].mxu0
        %v597 = vadd.f32 %v328, %v596
        %v598 = vpop.f32.mrb[0].mxu0
        %v599 = vpop.f32.mrb[0].mxu0
        %v600 = vadd.f32 %v328, %v599
        %v601 = vpop.f32.mrb[0].mxu0
        %602 = vmatprep.mubr.bf16.mxu0 0
        %603 = vmatmul.mubr.bf16.gmra.mrb[0].mxu0 %v472
        %v604 = vpop.f32.mrb[0].mxu0
        %v605 = vadd.f32 %v328, %v604
        %v606 = vpop.f32.mrb[0].mxu0
        %v607 = vpop.f32.mrb[0].mxu0
        %v608 = vadd.f32 %v328, %v607
        %v609 = vpop.f32.mrb[0].mxu0
        %610 = vmatprep.mubr.bf16.mxu0 0
        %611 = vmatmul.mubr.bf16.gmra.mrb[0].mxu0 %v475
        %v612 = vpop.f32.mrb[0].mxu0
        %v613 = vadd.f32 %v328, %v612
        %v614 = vpop.f32.mrb[0].mxu0
        %v615 = vpop.f32.mrb[0].mxu0
        %v616 = vadd.f32 %v328, %v615
        %v617 = vpop.f32.mrb[0].mxu0
        %618 = vmatprep.mubr.bf16.mxu0 0
        %619 = vmatmul.mubr.bf16.gmra.mrb[0].mxu0 %v478
        %v620 = vpop.f32.mrb[0].mxu0
        %v621 = vadd.f32 %v328, %v620
        %v622 = vpop.f32.mrb[0].mxu0
        %v623 = vpop.f32.mrb[0].mxu0
        %v624 = vadd.f32 %v328, %v623
        %v625 = vpop.f32.mrb[0].mxu0
        %626 = vmatprep.mubr.bf16.mxu0 0
        %627 = vmatmul.mubr.bf16.gmra.mrb[0].mxu0 %v481
        %v628 = vpop.f32.mrb[0].mxu0
        %v629 = vadd.f32 %v328, %v628
        %v630 = vpop.f32.mrb[0].mxu0
        %v631 = vpop.f32.mrb[0].mxu0
        %v632 = vadd.f32 %v328, %v631
        %v633 = vpop.f32.mrb[0].mxu0
        %634 = vmatprep.mubr.bf16.mxu0 0
        %635 = vmatmul.mubr.bf16.gmra.mrb[0].mxu0 %v484
        %v636 = vpop.f32.mrb[0].mxu0
        %v637 = vadd.f32 %v328, %v636
        %v638 = vpop.f32.mrb[0].mxu0
        %v639 = vpop.f32.mrb[0].mxu0
        %v640 = vadd.f32 %v328, %v639
        %v641 = vpop.f32.mrb[0].mxu0
        %642 = vmatprep.mubr.bf16.mxu0 0
        %643 = vmatmul.mubr.bf16.gmra.mrb[0].mxu0 %v487
        %v644 = vpop.f32.mrb[0].mxu0
        %v645 = vadd.f32 %v328, %v644
        %v646 = vpop.f32.mrb[0].mxu0
        %v647 = vpop.f32.mrb[0].mxu0
        %v648 = vadd.f32 %v328, %v647
        %v649 = vpop.f32.mrb[0].mxu0
        %650 = vmatprep.mubr.bf16.mxu0 0
        %651 = vmatmul.mubr.bf16.gmra.mrb[0].mxu0 %v490
        %v652 = vpop.f32.mrb[0].mxu0
        %v653 = vadd.f32 %v328, %v652
        %v654 = vpop.f32.mrb[0].mxu0
        %v655 = vpop.f32.mrb[0].mxu0
        %v656 = vadd.f32 %v328, %v655
        %v657 = vpop.f32.mrb[0].mxu0
        %658 = vdwg.mxu0
        %v659 = vmax.f32 %v533, 0.0
        %v660 = vmax.f32 %v536, 0.0
        %v661 = vmax.f32 %v541, 0.0
        %v662 = vmax.f32 %v544, 0.0
        %v663 = vmax.f32 %v549, 0.0
        %v664 = vmax.f32 %v552, 0.0
        %v665 = vmax.f32 %v557, 0.0
        %v666 = vmax.f32 %v560, 0.0
        %v667 = vmax.f32 %v565, 0.0
        %v668 = vmax.f32 %v568, 0.0
        %v669 = vmax.f32 %v573, 0.0
        %v670 = vmax.f32 %v576, 0.0
        %v671 = vmax.f32 %v581, 0.0
        %v672 = vmax.f32 %v584, 0.0
        %v673 = vmax.f32 %v589, 0.0
        %v674 = vmax.f32 %v592, 0.0
        %v675 = vmax.f32 %v597, 0.0
        %v676 = vmax.f32 %v600, 0.0
        %v677 = vmax.f32 %v605, 0.0
        %v678 = vmax.f32 %v608, 0.0
        %v679 = vmax.f32 %v613, 0.0
        %v680 = vmax.f32 %v616, 0.0
        %v681 = vmax.f32 %v621, 0.0
        %v682 = vmax.f32 %v624, 0.0
        %v683 = vmax.f32 %v629, 0.0
        %v684 = vmax.f32 %v632, 0.0
        %v685 = vmax.f32 %v637, 0.0
        %v686 = vmax.f32 %v640, 0.0
        %v687 = vmax.f32 %v645, 0.0
        %v688 = vmax.f32 %v648, 0.0
        %v689 = vmax.f32 %v653, 0.0
        %v690 = vmax.f32 %v656, 0.0
        %v691 = vpack.c.bf16 %v660, %v659
        %v692 = vpack.c.bf16 %v662, %v661
        %v693 = vpack.c.bf16 %v664, %v663
        %v694 = vpack.c.bf16 %v666, %v665
        %v695 = vpack.c.bf16 %v668, %v667
        %v696 = vpack.c.bf16 %v670, %v669
        %v697 = vpack.c.bf16 %v672, %v671
        %v698 = vpack.c.bf16 %v674, %v673
        %v699 = vpack.c.bf16 %v676, %v675
        %v700 = vpack.c.bf16 %v678, %v677
        %v701 = vpack.c.bf16 %v680, %v679
        %v702 = vpack.c.bf16 %v682, %v681
        %v703 = vpack.c.bf16 %v684, %v683
        %v704 = vpack.c.bf16 %v686, %v685
        %v705 = vpack.c.bf16 %v688, %v687
        %v706 = vpack.c.bf16 %v690, %v689
        %v707 = vld [vmem:[%s3] sm:$0xf]
        %v708 = vld [vmem:[%s3 + $0x4] sm:$0xf]
        %v709 = vld [vmem:[%s3 + $0x8] sm:$0xf]
        %v710 = vld [vmem:[%s3 + $0xc] sm:$0xf]
        %v711 = vld [vmem:[%s3 + $0x10] sm:$0xf]
        %v712 = vld [vmem:[%s3 + $0x14] sm:$0xf]
        %v713 = vld [vmem:[%s3 + $0x18] sm:$0xf]
        %v714 = vld [vmem:[%s3 + $0x1c] sm:$0xf]
        %v715 = vld [vmem:[%s4] sm:$0x1]
        %v717 = vlaneseq
        %v718 = vshrl.u32 %v717, 7
        %v719 = vsub.s32 0, %v718
        %v720 = vrot.slane %v715, %v719
        %v730 = vunpack.c.l.b16 %v707
        %v731 = vunpack.c.l.b16 %v708
        %v732 = vunpack.c.l.b16 %v709
        %v733 = vunpack.c.l.b16 %v710
        %v734 = vunpack.c.l.b16 %v711
        %v735 = vunpack.c.l.b16 %v712
        %v736 = vunpack.c.l.b16 %v713
        %v737 = vunpack.c.l.b16 %v714
        %v738 = vpack.c.b16 %v731, %v730
        %v739 = vpack.c.b16 %v733, %v732
        %v740 = vpack.c.b16 %v735, %v734
        %v741 = vpack.c.b16 %v737, %v736
        %vm746 = vcmask 523264
        %v748 = vsel %vm746, %v691, 0
        %v751 = vsel %vm746, %v692, 0
        %v754 = vsel %vm746, %v693, 0
        %v757 = vsel %vm746, %v694, 0
        %v760 = vsel %vm746, %v695, 0
        %v763 = vsel %vm746, %v696, 0
        %v766 = vsel %vm746, %v697, 0
        %v769 = vsel %vm746, %v698, 0
        %v772 = vsel %vm746, %v699, 0
        %v775 = vsel %vm746, %v700, 0
        %v778 = vsel %vm746, %v701, 0
        %v781 = vsel %vm746, %v702, 0
        %v784 = vsel %vm746, %v703, 0
        %v787 = vsel %vm746, %v704, 0
        %v790 = vsel %vm746, %v705, 0
        %v793 = vsel %vm746, %v706, 0
        %795 = vmatprep.subr.bf16.mxu0 0
        %796 = vmatpush1.bf16.msra.mxu0 %v738
        %797 = vmatprep.subr.bf16.mxu0 0
        %798 = vmatpush1.bf16.msra.mxu0 %v739
        %799 = vmatprep.subr.bf16.mxu0 0
        %800 = vmatpush1.bf16.msra.mxu0 %v740
        %801 = vmatprep.subr.bf16.mxu0 0
        %802 = vmatpush1.bf16.msra.mxu0 %v741
        %803 = vmatprep.subr.bf16.mxu0 0
        %804 = vmatpush1.bf16.msra.mxu0 0
        %805 = vmatprep.subr.bf16.mxu0 0
        %806 = vmatpush1.bf16.msra.mxu0 0
        %807 = vmatprep.subr.bf16.mxu0 0
        %808 = vmatpush1.bf16.msra.mxu0 0
        %809 = vmatprep.subr.bf16.mxu0 0
        %810 = vmatpush1.bf16.msra.mxu0 0
        %811 = vmatprep.subr.bf16.mxu0 0
        %812 = vmatpush1.bf16.msra.mxu0 0
        %813 = vmatprep.subr.bf16.mxu0 0
        %814 = vmatpush1.bf16.msra.mxu0 0
        %815 = vmatprep.subr.bf16.mxu0 0
        %816 = vmatpush1.bf16.msra.mxu0 0
        %817 = vmatprep.subr.bf16.mxu0 0
        %818 = vmatpush1.bf16.msra.mxu0 0
        %819 = vmatprep.subr.bf16.mxu0 0
        %820 = vmatpush1.bf16.msra.mxu0 0
        %821 = vmatprep.subr.bf16.mxu0 0
        %822 = vmatpush1.bf16.msra.mxu0 0
        %823 = vmatprep.subr.bf16.mxu0 0
        %824 = vmatpush1.bf16.msra.mxu0 0
        %825 = vmatprep.subr.bf16.mxu0 0
        %826 = vmatpush1.bf16.msra.mxu0 0
        %827 = vmatprep.mubr.bf16.mxu0 0
        %828 = vmatmul.mubr.bf16.gmra.mrb[0].mxu0 %v748
        %v829 = vpop.f32.mrb[0].mxu0
        %v830 = vadd.f32 %v720, %v829
        %v831 = vpop.f32.mrb[0].mxu0
        %v832 = vpop.f32.mrb[0].mxu0
        %v833 = vadd.f32 %v720, %v832
        %v834 = vpop.f32.mrb[0].mxu0
        %835 = vmatprep.mubr.bf16.mxu0 0
        %836 = vmatmul.mubr.bf16.gmra.mrb[0].mxu0 %v751
        %v837 = vpop.f32.mrb[0].mxu0
        %v838 = vadd.f32 %v720, %v837
        %v839 = vpop.f32.mrb[0].mxu0
        %v840 = vpop.f32.mrb[0].mxu0
        %v841 = vadd.f32 %v720, %v840
        %v842 = vpop.f32.mrb[0].mxu0
        %843 = vmatprep.mubr.bf16.mxu0 0
        %844 = vmatmul.mubr.bf16.gmra.mrb[0].mxu0 %v754
        %v845 = vpop.f32.mrb[0].mxu0
        %v846 = vadd.f32 %v720, %v845
        %v847 = vpop.f32.mrb[0].mxu0
        %v848 = vpop.f32.mrb[0].mxu0
        %v849 = vadd.f32 %v720, %v848
        %v850 = vpop.f32.mrb[0].mxu0
        %851 = vmatprep.mubr.bf16.mxu0 0
        %852 = vmatmul.mubr.bf16.gmra.mrb[0].mxu0 %v757
        %v853 = vpop.f32.mrb[0].mxu0
        %v854 = vadd.f32 %v720, %v853
        %v855 = vpop.f32.mrb[0].mxu0
        %v856 = vpop.f32.mrb[0].mxu0
        %v857 = vadd.f32 %v720, %v856
        %v858 = vpop.f32.mrb[0].mxu0
        %859 = vmatprep.mubr.bf16.mxu0 0
        %860 = vmatmul.mubr.bf16.gmra.mrb[0].mxu0 %v760
        %v861 = vpop.f32.mrb[0].mxu0
        %v862 = vadd.f32 %v720, %v861
        %v863 = vpop.f32.mrb[0].mxu0
        %v864 = vpop.f32.mrb[0].mxu0
        %v865 = vadd.f32 %v720, %v864
        %v866 = vpop.f32.mrb[0].mxu0
        %867 = vmatprep.mubr.bf16.mxu0 0
        %868 = vmatmul.mubr.bf16.gmra.mrb[0].mxu0 %v763
        %v869 = vpop.f32.mrb[0].mxu0
        %v870 = vadd.f32 %v720, %v869
        %v871 = vpop.f32.mrb[0].mxu0
        %v872 = vpop.f32.mrb[0].mxu0
        %v873 = vadd.f32 %v720, %v872
        %v874 = vpop.f32.mrb[0].mxu0
        %875 = vmatprep.mubr.bf16.mxu0 0
        %876 = vmatmul.mubr.bf16.gmra.mrb[0].mxu0 %v766
        %v877 = vpop.f32.mrb[0].mxu0
        %v878 = vadd.f32 %v720, %v877
        %v879 = vpop.f32.mrb[0].mxu0
        %v880 = vpop.f32.mrb[0].mxu0
        %v881 = vadd.f32 %v720, %v880
        %v882 = vpop.f32.mrb[0].mxu0
        %883 = vmatprep.mubr.bf16.mxu0 0
        %884 = vmatmul.mubr.bf16.gmra.mrb[0].mxu0 %v769
        %v885 = vpop.f32.mrb[0].mxu0
        %v886 = vadd.f32 %v720, %v885
        %v887 = vpop.f32.mrb[0].mxu0
        %v888 = vpop.f32.mrb[0].mxu0
        %v889 = vadd.f32 %v720, %v888
        %v890 = vpop.f32.mrb[0].mxu0
        %891 = vmatprep.mubr.bf16.mxu0 0
        %892 = vmatmul.mubr.bf16.gmra.mrb[0].mxu0 %v772
        %v893 = vpop.f32.mrb[0].mxu0
        %v894 = vadd.f32 %v720, %v893
        %v895 = vpop.f32.mrb[0].mxu0
        %v896 = vpop.f32.mrb[0].mxu0
        %v897 = vadd.f32 %v720, %v896
        %v898 = vpop.f32.mrb[0].mxu0
        %899 = vmatprep.mubr.bf16.mxu0 0
        %900 = vmatmul.mubr.bf16.gmra.mrb[0].mxu0 %v775
        %v901 = vpop.f32.mrb[0].mxu0
        %v902 = vadd.f32 %v720, %v901
        %v903 = vpop.f32.mrb[0].mxu0
        %v904 = vpop.f32.mrb[0].mxu0
        %v905 = vadd.f32 %v720, %v904
        %v906 = vpop.f32.mrb[0].mxu0
        %907 = vmatprep.mubr.bf16.mxu0 0
        %908 = vmatmul.mubr.bf16.gmra.mrb[0].mxu0 %v778
        %v909 = vpop.f32.mrb[0].mxu0
        %v910 = vadd.f32 %v720, %v909
        %v911 = vpop.f32.mrb[0].mxu0
        %v912 = vpop.f32.mrb[0].mxu0
        %v913 = vadd.f32 %v720, %v912
        %v914 = vpop.f32.mrb[0].mxu0
        %915 = vmatprep.mubr.bf16.mxu0 0
        %916 = vmatmul.mubr.bf16.gmra.mrb[0].mxu0 %v781
        %v917 = vpop.f32.mrb[0].mxu0
        %v918 = vadd.f32 %v720, %v917
        %v919 = vpop.f32.mrb[0].mxu0
        %v920 = vpop.f32.mrb[0].mxu0
        %v921 = vadd.f32 %v720, %v920
        %v922 = vpop.f32.mrb[0].mxu0
        %923 = vmatprep.mubr.bf16.mxu0 0
        %924 = vmatmul.mubr.bf16.gmra.mrb[0].mxu0 %v784
        %v925 = vpop.f32.mrb[0].mxu0
        %v926 = vadd.f32 %v720, %v925
        %v927 = vpop.f32.mrb[0].mxu0
        %v928 = vpop.f32.mrb[0].mxu0
        %v929 = vadd.f32 %v720, %v928
        %v930 = vpop.f32.mrb[0].mxu0
        %931 = vmatprep.mubr.bf16.mxu0 0
        %932 = vmatmul.mubr.bf16.gmra.mrb[0].mxu0 %v787
        %v933 = vpop.f32.mrb[0].mxu0
        %v934 = vadd.f32 %v720, %v933
        %v935 = vpop.f32.mrb[0].mxu0
        %v936 = vpop.f32.mrb[0].mxu0
        %v937 = vadd.f32 %v720, %v936
        %v938 = vpop.f32.mrb[0].mxu0
        %939 = vmatprep.mubr.bf16.mxu0 0
        %940 = vmatmul.mubr.bf16.gmra.mrb[0].mxu0 %v790
        %v941 = vpop.f32.mrb[0].mxu0
        %v942 = vadd.f32 %v720, %v941
        %v943 = vpop.f32.mrb[0].mxu0
        %v944 = vpop.f32.mrb[0].mxu0
        %v945 = vadd.f32 %v720, %v944
        %v946 = vpop.f32.mrb[0].mxu0
        %947 = vmatprep.mubr.bf16.mxu0 0
        %948 = vmatmul.mubr.bf16.gmra.mrb[0].mxu0 %v793
        %v949 = vpop.f32.mrb[0].mxu0
        %v950 = vadd.f32 %v720, %v949
        %v951 = vpop.f32.mrb[0].mxu0
        %v952 = vpop.f32.mrb[0].mxu0
        %v953 = vadd.f32 %v720, %v952
        %v954 = vpop.f32.mrb[0].mxu0
        %955 = vdwg.mxu0
        %v956 = vmax.f32 %v830, 0.0
        %v957 = vmax.f32 %v833, 0.0
        %v958 = vmax.f32 %v838, 0.0
        %v959 = vmax.f32 %v841, 0.0
        %v960 = vmax.f32 %v846, 0.0
        %v961 = vmax.f32 %v849, 0.0
        %v962 = vmax.f32 %v854, 0.0
        %v963 = vmax.f32 %v857, 0.0
        %v964 = vmax.f32 %v862, 0.0
        %v965 = vmax.f32 %v865, 0.0
        %v966 = vmax.f32 %v870, 0.0
        %v967 = vmax.f32 %v873, 0.0
        %v968 = vmax.f32 %v878, 0.0
        %v969 = vmax.f32 %v881, 0.0
        %v970 = vmax.f32 %v886, 0.0
        %v971 = vmax.f32 %v889, 0.0
        %v972 = vmax.f32 %v894, 0.0
        %v973 = vmax.f32 %v897, 0.0
        %v974 = vmax.f32 %v902, 0.0
        %v975 = vmax.f32 %v905, 0.0
        %v976 = vmax.f32 %v910, 0.0
        %v977 = vmax.f32 %v913, 0.0
        %v978 = vmax.f32 %v918, 0.0
        %v979 = vmax.f32 %v921, 0.0
        %v980 = vmax.f32 %v926, 0.0
        %v981 = vmax.f32 %v929, 0.0
        %v982 = vmax.f32 %v934, 0.0
        %v983 = vmax.f32 %v937, 0.0
        %v984 = vmax.f32 %v942, 0.0
        %v985 = vmax.f32 %v945, 0.0
        %v986 = vmax.f32 %v950, 0.0
        %v987 = vmax.f32 %v953, 0.0
        %v988 = vpack.c.bf16 %v957, %v956
        %v989 = vpack.c.bf16 %v959, %v958
        %v990 = vpack.c.bf16 %v961, %v960
        %v991 = vpack.c.bf16 %v963, %v962
        %v992 = vpack.c.bf16 %v965, %v964
        %v993 = vpack.c.bf16 %v967, %v966
        %v994 = vpack.c.bf16 %v969, %v968
        %v995 = vpack.c.bf16 %v971, %v970
        %v996 = vpack.c.bf16 %v973, %v972
        %v997 = vpack.c.bf16 %v975, %v974
        %v998 = vpack.c.bf16 %v977, %v976
        %v999 = vpack.c.bf16 %v979, %v978
        %v1000 = vpack.c.bf16 %v981, %v980
        %v1001 = vpack.c.bf16 %v983, %v982
        %v1002 = vpack.c.bf16 %v985, %v984
        %v1003 = vpack.c.bf16 %v987, %v986
        %v1004 = vld [vmem:[%s5] sm:$0xf]
        %v1005 = vld [vmem:[%s5 + $0x4] sm:$0xf]
        %v1006 = vld [vmem:[%s5 + $0x8] sm:$0xf]
        %v1007 = vld [vmem:[%s5 + $0xc] sm:$0xf]
        %v1012 = vunpack.c.l.b16 %v1004
        %v1013 = vunpack.c.l.b16 %v1005
        %v1014 = vunpack.c.l.b16 %v1006
        %v1015 = vunpack.c.l.b16 %v1007
        %v1016 = vpack.c.b16 %v1013, %v1012
        %v1017 = vpack.c.b16 %v1015, %v1014
        %vm1020 = vcmask 261120
        %v1022 = vsel %vm1020, %v988, 0
        %v1025 = vsel %vm1020, %v989, 0
        %v1028 = vsel %vm1020, %v990, 0
        %v1031 = vsel %vm1020, %v991, 0
        %v1034 = vsel %vm1020, %v992, 0
        %v1037 = vsel %vm1020, %v993, 0
        %v1040 = vsel %vm1020, %v994, 0
        %v1043 = vsel %vm1020, %v995, 0
        %v1046 = vsel %vm1020, %v996, 0
        %v1049 = vsel %vm1020, %v997, 0
        %v1052 = vsel %vm1020, %v998, 0
        %v1055 = vsel %vm1020, %v999, 0
        %v1058 = vsel %vm1020, %v1000, 0
        %v1061 = vsel %vm1020, %v1001, 0
        %v1064 = vsel %vm1020, %v1002, 0
        %v1067 = vsel %vm1020, %v1003, 0
        %1069 = vmatprep.subr.bf16.mxu0 0
        %1070 = vmatpush1.bf16.msra.mxu0 %v1016
        %1071 = vmatprep.subr.bf16.mxu0 0
        %1072 = vmatpush1.bf16.msra.mxu0 %v1017
        %1073 = vmatprep.subr.bf16.mxu0 0
        %1074 = vmatpush1.bf16.msra.mxu0 0
        %1075 = vmatprep.subr.bf16.mxu0 0
        %1076 = vmatpush1.bf16.msra.mxu0 0
        %1077 = vmatprep.subr.bf16.mxu0 0
        %1078 = vmatpush1.bf16.msra.mxu0 0
        %1079 = vmatprep.subr.bf16.mxu0 0
        %1080 = vmatpush1.bf16.msra.mxu0 0
        %1081 = vmatprep.subr.bf16.mxu0 0
        %1082 = vmatpush1.bf16.msra.mxu0 0
        %1083 = vmatprep.subr.bf16.mxu0 0
        %1084 = vmatpush1.bf16.msra.mxu0 0
        %1085 = vmatprep.subr.bf16.mxu0 0
        %1086 = vmatpush1.bf16.msra.mxu0 0
        %1087 = vmatprep.subr.bf16.mxu0 0
        %1088 = vmatpush1.bf16.msra.mxu0 0
        %1089 = vmatprep.subr.bf16.mxu0 0
        %1090 = vmatpush1.bf16.msra.mxu0 0
        %1091 = vmatprep.subr.bf16.mxu0 0
        %1092 = vmatpush1.bf16.msra.mxu0 0
        %1093 = vmatprep.subr.bf16.mxu0 0
        %1094 = vmatpush1.bf16.msra.mxu0 0
        %1095 = vmatprep.subr.bf16.mxu0 0
        %1096 = vmatpush1.bf16.msra.mxu0 0
        %1097 = vmatprep.subr.bf16.mxu0 0
        %1098 = vmatpush1.bf16.msra.mxu0 0
        %1099 = vmatprep.subr.bf16.mxu0 0
        %1100 = vmatpush1.bf16.msra.mxu0 0
        %1101 = vmatprep.mubr.bf16.mxu0 0
        %1102 = vmatmul.mubr.bf16.gmra.mrb[0].mxu0 %v1022
        %v1103 = vpop.f32.mrb[0].mxu0
        %v1104 = vadd.f32 0.0, %v1103
        %v1105 = vpop.f32.mrb[0].mxu0
        %v1106 = vpop.f32.mrb[0].mxu0
        %v1107 = vadd.f32 0.0, %v1106
        %v1108 = vpop.f32.mrb[0].mxu0
        %1109 = vmatprep.mubr.bf16.mxu0 0
        %1110 = vmatmul.mubr.bf16.gmra.mrb[0].mxu0 %v1025
        %v1111 = vpop.f32.mrb[0].mxu0
        %v1112 = vadd.f32 0.0, %v1111
        %v1113 = vpop.f32.mrb[0].mxu0
        %v1114 = vpop.f32.mrb[0].mxu0
        %v1115 = vadd.f32 0.0, %v1114
        %v1116 = vpop.f32.mrb[0].mxu0
        %1117 = vmatprep.mubr.bf16.mxu0 0
        %1118 = vmatmul.mubr.bf16.gmra.mrb[0].mxu0 %v1028
        %v1119 = vpop.f32.mrb[0].mxu0
        %v1120 = vadd.f32 0.0, %v1119
        %v1121 = vpop.f32.mrb[0].mxu0
        %v1122 = vpop.f32.mrb[0].mxu0
        %v1123 = vadd.f32 0.0, %v1122
        %v1124 = vpop.f32.mrb[0].mxu0
        %1125 = vmatprep.mubr.bf16.mxu0 0
        %1126 = vmatmul.mubr.bf16.gmra.mrb[0].mxu0 %v1031
        %v1127 = vpop.f32.mrb[0].mxu0
        %v1128 = vadd.f32 0.0, %v1127
        %v1129 = vpop.f32.mrb[0].mxu0
        %v1130 = vpop.f32.mrb[0].mxu0
        %v1131 = vadd.f32 0.0, %v1130
        %v1132 = vpop.f32.mrb[0].mxu0
        %1133 = vmatprep.mubr.bf16.mxu0 0
        %1134 = vmatmul.mubr.bf16.gmra.mrb[0].mxu0 %v1034
        %v1135 = vpop.f32.mrb[0].mxu0
        %v1136 = vadd.f32 0.0, %v1135
        %v1137 = vpop.f32.mrb[0].mxu0
        %v1138 = vpop.f32.mrb[0].mxu0
        %v1139 = vadd.f32 0.0, %v1138
        %v1140 = vpop.f32.mrb[0].mxu0
        %1141 = vmatprep.mubr.bf16.mxu0 0
        %1142 = vmatmul.mubr.bf16.gmra.mrb[0].mxu0 %v1037
        %v1143 = vpop.f32.mrb[0].mxu0
        %v1144 = vadd.f32 0.0, %v1143
        %v1145 = vpop.f32.mrb[0].mxu0
        %v1146 = vpop.f32.mrb[0].mxu0
        %v1147 = vadd.f32 0.0, %v1146
        %v1148 = vpop.f32.mrb[0].mxu0
        %1149 = vmatprep.mubr.bf16.mxu0 0
        %1150 = vmatmul.mubr.bf16.gmra.mrb[0].mxu0 %v1040
        %v1151 = vpop.f32.mrb[0].mxu0
        %v1152 = vadd.f32 0.0, %v1151
        %v1153 = vpop.f32.mrb[0].mxu0
        %v1154 = vpop.f32.mrb[0].mxu0
        %v1155 = vadd.f32 0.0, %v1154
        %v1156 = vpop.f32.mrb[0].mxu0
        %1157 = vmatprep.mubr.bf16.mxu0 0
        %1158 = vmatmul.mubr.bf16.gmra.mrb[0].mxu0 %v1043
        %v1159 = vpop.f32.mrb[0].mxu0
        %v1160 = vadd.f32 0.0, %v1159
        %v1161 = vpop.f32.mrb[0].mxu0
        %v1162 = vpop.f32.mrb[0].mxu0
        %v1163 = vadd.f32 0.0, %v1162
        %v1164 = vpop.f32.mrb[0].mxu0
        %1165 = vmatprep.mubr.bf16.mxu0 0
        %1166 = vmatmul.mubr.bf16.gmra.mrb[0].mxu0 %v1046
        %v1167 = vpop.f32.mrb[0].mxu0
        %v1168 = vadd.f32 0.0, %v1167
        %v1169 = vpop.f32.mrb[0].mxu0
        %v1170 = vpop.f32.mrb[0].mxu0
        %v1171 = vadd.f32 0.0, %v1170
        %v1172 = vpop.f32.mrb[0].mxu0
        %1173 = vmatprep.mubr.bf16.mxu0 0
        %1174 = vmatmul.mubr.bf16.gmra.mrb[0].mxu0 %v1049
        %v1175 = vpop.f32.mrb[0].mxu0
        %v1176 = vadd.f32 0.0, %v1175
        %v1177 = vpop.f32.mrb[0].mxu0
        %v1178 = vpop.f32.mrb[0].mxu0
        %v1179 = vadd.f32 0.0, %v1178
        %v1180 = vpop.f32.mrb[0].mxu0
        %1181 = vmatprep.mubr.bf16.mxu0 0
        %1182 = vmatmul.mubr.bf16.gmra.mrb[0].mxu0 %v1052
        %v1183 = vpop.f32.mrb[0].mxu0
        %v1184 = vadd.f32 0.0, %v1183
        %v1185 = vpop.f32.mrb[0].mxu0
        %v1186 = vpop.f32.mrb[0].mxu0
        %v1187 = vadd.f32 0.0, %v1186
        %v1188 = vpop.f32.mrb[0].mxu0
        %1189 = vmatprep.mubr.bf16.mxu0 0
        %1190 = vmatmul.mubr.bf16.gmra.mrb[0].mxu0 %v1055
        %v1191 = vpop.f32.mrb[0].mxu0
        %v1192 = vadd.f32 0.0, %v1191
        %v1193 = vpop.f32.mrb[0].mxu0
        %v1194 = vpop.f32.mrb[0].mxu0
        %v1195 = vadd.f32 0.0, %v1194
        %v1196 = vpop.f32.mrb[0].mxu0
        %1197 = vmatprep.mubr.bf16.mxu0 0
        %1198 = vmatmul.mubr.bf16.gmra.mrb[0].mxu0 %v1058
        %v1199 = vpop.f32.mrb[0].mxu0
        %v1200 = vadd.f32 0.0, %v1199
        %v1201 = vpop.f32.mrb[0].mxu0
        %v1202 = vpop.f32.mrb[0].mxu0
        %v1203 = vadd.f32 0.0, %v1202
        %v1204 = vpop.f32.mrb[0].mxu0
        %1205 = vmatprep.mubr.bf16.mxu0 0
        %1206 = vmatmul.mubr.bf16.gmra.mrb[0].mxu0 %v1061
        %v1207 = vpop.f32.mrb[0].mxu0
        %v1208 = vadd.f32 0.0, %v1207
        %v1209 = vpop.f32.mrb[0].mxu0
        %v1210 = vpop.f32.mrb[0].mxu0
        %v1211 = vadd.f32 0.0, %v1210
        %v1212 = vpop.f32.mrb[0].mxu0
        %1213 = vmatprep.mubr.bf16.mxu0 0
        %1214 = vmatmul.mubr.bf16.gmra.mrb[0].mxu0 %v1064
        %v1215 = vpop.f32.mrb[0].mxu0
        %v1216 = vadd.f32 0.0, %v1215
        %v1217 = vpop.f32.mrb[0].mxu0
        %v1218 = vpop.f32.mrb[0].mxu0
        %v1219 = vadd.f32 0.0, %v1218
        %v1220 = vpop.f32.mrb[0].mxu0
        %1221 = vmatprep.mubr.bf16.mxu0 0
        %1222 = vmatmul.mubr.bf16.gmra.mrb[0].mxu0 %v1067
        %v1223 = vpop.f32.mrb[0].mxu0
        %v1224 = vadd.f32 0.0, %v1223
        %v1225 = vpop.f32.mrb[0].mxu0
        %v1226 = vpop.f32.mrb[0].mxu0
        %v1227 = vadd.f32 0.0, %v1226
        %v1228 = vpop.f32.mrb[0].mxu0
        %1229 = vdwg.mxu0
        %s1230 = scalar_lea.vmem [#allocation2], 48
        %vm1231 = vcmask 203776
        %1232 = vst.msk [vmem:[%s1230 + $0x2] sm:$0xff] %vm1231, %v1104
        %1233 = vst.msk [vmem:[%s1230 + $0xa] sm:$0xff] %vm1231, %v1107
        %1234 = vst.msk [vmem:[%s1230 + $0x1a] sm:$0xff] %vm1231, %v1112
        %1235 = vst.msk [vmem:[%s1230 + $0x22] sm:$0xff] %vm1231, %v1115
        %1236 = vst.msk [vmem:[%s1230 + $0x32] sm:$0xff] %vm1231, %v1120
        %1237 = vst.msk [vmem:[%s1230 + $0x3a] sm:$0xff] %vm1231, %v1123
        %1238 = vst.msk [vmem:[%s1230 + $0x4a] sm:$0xff] %vm1231, %v1128
        %1239 = vst.msk [vmem:[%s1230 + $0x52] sm:$0xff] %vm1231, %v1131
        %1240 = vst.msk [vmem:[%s1230 + $0x62] sm:$0xff] %vm1231, %v1136
        %1241 = vst.msk [vmem:[%s1230 + $0x6a] sm:$0xff] %vm1231, %v1139
        %1242 = vst.msk [vmem:[%s1230 + $0x7a] sm:$0xff] %vm1231, %v1144
        %1243 = vst.msk [vmem:[%s1230 + $0x82] sm:$0xff] %vm1231, %v1147
        %1244 = vst.msk [vmem:[%s1230 + $0x92] sm:$0xff] %vm1231, %v1152
        %1245 = vst.msk [vmem:[%s1230 + $0x9a] sm:$0xff] %vm1231, %v1155
        %1246 = vst.msk [vmem:[%s1230 + $0xaa] sm:$0xff] %vm1231, %v1160
        %1247 = vst.msk [vmem:[%s1230 + $0xb2] sm:$0xff] %vm1231, %v1163
        %1248 = vst.msk [vmem:[%s1230 + $0xc2] sm:$0xff] %vm1231, %v1168
        %1249 = vst.msk [vmem:[%s1230 + $0xca] sm:$0xff] %vm1231, %v1171
        %1250 = vst.msk [vmem:[%s1230 + $0xda] sm:$0xff] %vm1231, %v1176
        %1251 = vst.msk [vmem:[%s1230 + $0xe2] sm:$0xff] %vm1231, %v1179
        %1252 = vst.msk [vmem:[%s1230 + $0xf2] sm:$0xff] %vm1231, %v1184
        %1253 = vst.msk [vmem:[%s1230 + $0xfa] sm:$0xff] %vm1231, %v1187
        %1254 = vst.msk [vmem:[%s1230 + $0x10a] sm:$0xff] %vm1231, %v1192
        %1255 = vst.msk [vmem:[%s1230 + $0x112] sm:$0xff] %vm1231, %v1195
        %1256 = vst.msk [vmem:[%s1230 + $0x122] sm:$0xff] %vm1231, %v1200
        %1257 = vst.msk [vmem:[%s1230 + $0x12a] sm:$0xff] %vm1231, %v1203
        %1258 = vst.msk [vmem:[%s1230 + $0x13a] sm:$0xff] %vm1231, %v1208
        %1259 = vst.msk [vmem:[%s1230 + $0x142] sm:$0xff] %vm1231, %v1211
        %1260 = vst.msk [vmem:[%s1230 + $0x152] sm:$0xff] %vm1231, %v1216
        %1261 = vst.msk [vmem:[%s1230 + $0x15a] sm:$0xff] %vm1231, %v1219
        %1262 = vst.msk [vmem:[%s1230 + $0x16a] sm:$0xff] %vm1231, %v1224
        %1263 = vst.msk [vmem:[%s1230 + $0x172] sm:$0xff] %vm1231, %v1227
        %v1264 = vld [vmem:[%s1230 + $0x2] sm:$0x1]
        %v1265 = vld [vmem:[%s1230 + $0x1a] sm:$0x1]
        %v1266 = vld [vmem:[%s1230 + $0x32] sm:$0x1]
        %v1267 = vld [vmem:[%s1230 + $0x4a] sm:$0x1]
        %v1268 = vld [vmem:[%s1230 + $0x62] sm:$0x1]
        %v1269 = vld [vmem:[%s1230 + $0x7a] sm:$0x1]
        %v1270 = vld [vmem:[%s1230 + $0x92] sm:$0x1]
        %v1271 = vld [vmem:[%s1230 + $0xaa] sm:$0x1]
        %v1272 = vld [vmem:[%s1230 + $0xc2] sm:$0x1]
        %v1273 = vld [vmem:[%s1230 + $0xda] sm:$0x1]
        %v1274 = vld [vmem:[%s1230 + $0xf2] sm:$0x1]
        %v1275 = vld [vmem:[%s1230 + $0x10a] sm:$0x1]
        %v1276 = vld [vmem:[%s1230 + $0x122] sm:$0x1]
        %v1277 = vld [vmem:[%s1230 + $0x13a] sm:$0x1]
        %v1278 = vld [vmem:[%s1230 + $0x152] sm:$0x1]
        %v1279 = vld [vmem:[%s1230 + $0x16a] sm:$0x1]
        %vm1280 = vcmask 196608
        %1281 = vst.msk [vmem:[%s1230] sm:$0x1] %vm1280, %v1264
        %1282 = vst.msk [vmem:[%s1230 + $0x18] sm:$0x1] %vm1280, %v1265
        %1283 = vst.msk [vmem:[%s1230 + $0x30] sm:$0x1] %vm1280, %v1266
        %1284 = vst.msk [vmem:[%s1230 + $0x48] sm:$0x1] %vm1280, %v1267
        %1285 = vst.msk [vmem:[%s1230 + $0x60] sm:$0x1] %vm1280, %v1268
        %1286 = vst.msk [vmem:[%s1230 + $0x78] sm:$0x1] %vm1280, %v1269
        %1287 = vst.msk [vmem:[%s1230 + $0x90] sm:$0x1] %vm1280, %v1270
        %1288 = vst.msk [vmem:[%s1230 + $0xa8] sm:$0x1] %vm1280, %v1271
        %1289 = vst.msk [vmem:[%s1230 + $0xc0] sm:$0x1] %vm1280, %v1272
        %1290 = vst.msk [vmem:[%s1230 + $0xd8] sm:$0x1] %vm1280, %v1273
        %1291 = vst.msk [vmem:[%s1230 + $0xf0] sm:$0x1] %vm1280, %v1274
        %1292 = vst.msk [vmem:[%s1230 + $0x108] sm:$0x1] %vm1280, %v1275
        %1293 = vst.msk [vmem:[%s1230 + $0x120] sm:$0x1] %vm1280, %v1276
        %1294 = vst.msk [vmem:[%s1230 + $0x138] sm:$0x1] %vm1280, %v1277
        %1295 = vst.msk [vmem:[%s1230 + $0x150] sm:$0x1] %vm1280, %v1278
        %1296 = vst.msk [vmem:[%s1230 + $0x168] sm:$0x1] %vm1280, %v1279
        %1297 = vst.msk [vmem:[%s1230 + $0x1] sm:$0x1] %vm1280, %v1264
        %1298 = vst.msk [vmem:[%s1230 + $0x19] sm:$0x1] %vm1280, %v1265
        %1299 = vst.msk [vmem:[%s1230 + $0x31] sm:$0x1] %vm1280, %v1266
        %1300 = vst.msk [vmem:[%s1230 + $0x49] sm:$0x1] %vm1280, %v1267
        %1301 = vst.msk [vmem:[%s1230 + $0x61] sm:$0x1] %vm1280, %v1268
        %1302 = vst.msk [vmem:[%s1230 + $0x79] sm:$0x1] %vm1280, %v1269
        %1303 = vst.msk [vmem:[%s1230 + $0x91] sm:$0x1] %vm1280, %v1270
        %1304 = vst.msk [vmem:[%s1230 + $0xa9] sm:$0x1] %vm1280, %v1271
        %1305 = vst.msk [vmem:[%s1230 + $0xc1] sm:$0x1] %vm1280, %v1272
        %1306 = vst.msk [vmem:[%s1230 + $0xd9] sm:$0x1] %vm1280, %v1273
        %1307 = vst.msk [vmem:[%s1230 + $0xf1] sm:$0x1] %vm1280, %v1274
        %1308 = vst.msk [vmem:[%s1230 + $0x109] sm:$0x1] %vm1280, %v1275
        %1309 = vst.msk [vmem:[%s1230 + $0x121] sm:$0x1] %vm1280, %v1276
        %1310 = vst.msk [vmem:[%s1230 + $0x139] sm:$0x1] %vm1280, %v1277
        %1311 = vst.msk [vmem:[%s1230 + $0x151] sm:$0x1] %vm1280, %v1278
        %1312 = vst.msk [vmem:[%s1230 + $0x169] sm:$0x1] %vm1280, %v1279
        %v1313 = vld [vmem:[%s1230 + $0x11] sm:$0x1]
        %v1314 = vld [vmem:[%s1230 + $0x29] sm:$0x1]
        %v1315 = vld [vmem:[%s1230 + $0x41] sm:$0x1]
        %v1316 = vld [vmem:[%s1230 + $0x59] sm:$0x1]
        %v1317 = vld [vmem:[%s1230 + $0x71] sm:$0x1]
        %v1318 = vld [vmem:[%s1230 + $0x89] sm:$0x1]
        %v1319 = vld [vmem:[%s1230 + $0xa1] sm:$0x1]
        %v1320 = vld [vmem:[%s1230 + $0xb9] sm:$0x1]
        %v1321 = vld [vmem:[%s1230 + $0xd1] sm:$0x1]
        %v1322 = vld [vmem:[%s1230 + $0xe9] sm:$0x1]
        %v1323 = vld [vmem:[%s1230 + $0x101] sm:$0x1]
        %v1324 = vld [vmem:[%s1230 + $0x119] sm:$0x1]
        %v1325 = vld [vmem:[%s1230 + $0x131] sm:$0x1]
        %v1326 = vld [vmem:[%s1230 + $0x149] sm:$0x1]
        %v1327 = vld [vmem:[%s1230 + $0x161] sm:$0x1]
        %v1328 = vld [vmem:[%s1230 + $0x179] sm:$0x1]
        %1329 = vst.msk [vmem:[%s1230 + $0x12] sm:$0x1] %vm1280, %v1313
        %1330 = vst.msk [vmem:[%s1230 + $0x2a] sm:$0x1] %vm1280, %v1314
        %1331 = vst.msk [vmem:[%s1230 + $0x42] sm:$0x1] %vm1280, %v1315
        %1332 = vst.msk [vmem:[%s1230 + $0x5a] sm:$0x1] %vm1280, %v1316
        %1333 = vst.msk [vmem:[%s1230 + $0x72] sm:$0x1] %vm1280, %v1317
        %1334 = vst.msk [vmem:[%s1230 + $0x8a] sm:$0x1] %vm1280, %v1318
        %1335 = vst.msk [vmem:[%s1230 + $0xa2] sm:$0x1] %vm1280, %v1319
        %1336 = vst.msk [vmem:[%s1230 + $0xba] sm:$0x1] %vm1280, %v1320
        %1337 = vst.msk [vmem:[%s1230 + $0xd2] sm:$0x1] %vm1280, %v1321
        %1338 = vst.msk [vmem:[%s1230 + $0xea] sm:$0x1] %vm1280, %v1322
        %1339 = vst.msk [vmem:[%s1230 + $0x102] sm:$0x1] %vm1280, %v1323
        %1340 = vst.msk [vmem:[%s1230 + $0x11a] sm:$0x1] %vm1280, %v1324
        %1341 = vst.msk [vmem:[%s1230 + $0x132] sm:$0x1] %vm1280, %v1325
        %1342 = vst.msk [vmem:[%s1230 + $0x14a] sm:$0x1] %vm1280, %v1326
        %1343 = vst.msk [vmem:[%s1230 + $0x162] sm:$0x1] %vm1280, %v1327
        %1344 = vst.msk [vmem:[%s1230 + $0x17a] sm:$0x1] %vm1280, %v1328
        %1345 = vst.msk [vmem:[%s1230 + $0x13] sm:$0x1] %vm1280, %v1313
        %1346 = vst.msk [vmem:[%s1230 + $0x2b] sm:$0x1] %vm1280, %v1314
        %1347 = vst.msk [vmem:[%s1230 + $0x43] sm:$0x1] %vm1280, %v1315
        %1348 = vst.msk [vmem:[%s1230 + $0x5b] sm:$0x1] %vm1280, %v1316
        %1349 = vst.msk [vmem:[%s1230 + $0x73] sm:$0x1] %vm1280, %v1317
        %1350 = vst.msk [vmem:[%s1230 + $0x8b] sm:$0x1] %vm1280, %v1318
        %1351 = vst.msk [vmem:[%s1230 + $0xa3] sm:$0x1] %vm1280, %v1319
        %1352 = vst.msk [vmem:[%s1230 + $0xbb] sm:$0x1] %vm1280, %v1320
        %1353 = vst.msk [vmem:[%s1230 + $0xd3] sm:$0x1] %vm1280, %v1321
        %1354 = vst.msk [vmem:[%s1230 + $0xeb] sm:$0x1] %vm1280, %v1322
        %1355 = vst.msk [vmem:[%s1230 + $0x103] sm:$0x1] %vm1280, %v1323
        %1356 = vst.msk [vmem:[%s1230 + $0x11b] sm:$0x1] %vm1280, %v1324
        %1357 = vst.msk [vmem:[%s1230 + $0x133] sm:$0x1] %vm1280, %v1325
        %1358 = vst.msk [vmem:[%s1230 + $0x14b] sm:$0x1] %vm1280, %v1326
        %1359 = vst.msk [vmem:[%s1230 + $0x163] sm:$0x1] %vm1280, %v1327
        %1360 = vst.msk [vmem:[%s1230 + $0x17b] sm:$0x1] %vm1280, %v1328
        %v1361 = vld [vmem:[%s1230] sm:$0xff]
        %v1362 = vld [vmem:[%s1230 + $0x8] sm:$0xff]
        %v1363 = vld [vmem:[%s1230 + $0x10] sm:$0xf]
        %1364 = vst.msk [vmem:[#allocation2] sm:$0xff] %vm1231, %v1361
        %1365 = vst.msk [vmem:[#allocation2 + $0x8] sm:$0xff] %vm1231, %v1362
        %vm1366 = vcmask 199680
        %1367 = vst.msk [vmem:[#allocation2 + $0x10] sm:$0xf] %vm1366, %v1363
        %s1368 = scalar_lea.vmem [#allocation2], 24
        %1369 = vst.msk [vmem:[%s1368] sm:$0xff] %vm1231, %v1361
        %1370 = vst.msk [vmem:[%s1368 + $0x8] sm:$0xff] %vm1231, %v1362
        %1371 = vst.msk [vmem:[%s1368 + $0x10] sm:$0xf] %vm1366, %v1363
        %s1372 = scalar_lea.vmem [#allocation2], 408
        %v1373 = vld [vmem:[%s1372] sm:$0xff]
        %v1374 = vld [vmem:[%s1372 + $0x8] sm:$0xff]
        %v1375 = vld [vmem:[%s1372 + $0x10] sm:$0xf]
        %s1376 = scalar_lea.vmem [#allocation2], 432
        %1377 = vst.msk [vmem:[%s1376] sm:$0xff] %vm1231, %v1373
        %1378 = vst.msk [vmem:[%s1376 + $0x8] sm:$0xff] %vm1231, %v1374
        %1379 = vst.msk [vmem:[%s1376 + $0x10] sm:$0xf] %vm1366, %v1375
        %s1380 = scalar_lea.vmem [#allocation2], 456
        %1381 = vst.msk [vmem:[%s1380] sm:$0xff] %vm1231, %v1373
        %1382 = vst.msk [vmem:[%s1380 + $0x8] sm:$0xff] %vm1231, %v1374
        %1383 = vst.msk [vmem:[%s1380 + $0x10] sm:$0xf] %vm1366, %v1375
        %v1384 = vld [vmem:[#allocation2] sm:$0xff]
        %v1385 = vld [vmem:[#allocation2 + $0x8] sm:$0xff]
        %v1386 = vld [vmem:[#allocation2 + $0x10] sm:$0xf]
        %v1387 = vld [vmem:[#allocation2 + $0x18] sm:$0xff]
        %v1388 = vld [vmem:[#allocation2 + $0x20] sm:$0xff]
        %v1389 = vld [vmem:[#allocation2 + $0x28] sm:$0xf]
        %v1390 = vld [vmem:[#allocation2 + $0x30] sm:$0xff]
        %v1391 = vld [vmem:[#allocation2 + $0x38] sm:$0xff]
        %v1392 = vld [vmem:[#allocation2 + $0x40] sm:$0xf]
        %v1393 = vld [vmem:[#allocation2 + $0x48] sm:$0xff]
        %v1394 = vld [vmem:[#allocation2 + $0x50] sm:$0xff]
        %v1395 = vld [vmem:[#allocation2 + $0x58] sm:$0xf]
        %v1396 = vld [vmem:[#allocation2 + $0x60] sm:$0xff]
        %v1397 = vld [vmem:[#allocation2 + $0x68] sm:$0xff]
        %v1398 = vld [vmem:[#allocation2 + $0x70] sm:$0xf]
        %v1399 = vld [vmem:[#allocation2 + $0x78] sm:$0xff]
        %v1400 = vld [vmem:[#allocation2 + $0x80] sm:$0xff]
        %v1401 = vld [vmem:[#allocation2 + $0x88] sm:$0xf]
        %v1402 = vld [vmem:[#allocation2 + $0x90] sm:$0xff]
        %v1403 = vld [vmem:[#allocation2 + $0x98] sm:$0xff]
        %v1404 = vld [vmem:[#allocation2 + $0xa0] sm:$0xf]
        %v1405 = vld [vmem:[#allocation2 + $0xa8] sm:$0xff]
        %v1406 = vld [vmem:[#allocation2 + $0xb0] sm:$0xff]
        %v1407 = vld [vmem:[#allocation2 + $0xb8] sm:$0xf]
        %v1408 = vld [vmem:[#allocation2 + $0xc0] sm:$0xff]
        %v1409 = vld [vmem:[#allocation2 + $0xc8] sm:$0xff]
        %v1410 = vld [vmem:[#allocation2 + $0xd0] sm:$0xf]
        %v1411 = vld [vmem:[#allocation2 + $0xd8] sm:$0xff]
        %v1412 = vld [vmem:[#allocation2 + $0xe0] sm:$0xff]
        %v1413 = vld [vmem:[#allocation2 + $0xe8] sm:$0xf]
        %v1414 = vld [vmem:[#allocation2 + $0xf0] sm:$0xff]
        %v1415 = vld [vmem:[#allocation2 + $0xf8] sm:$0xff]
        %v1416 = vld [vmem:[#allocation2 + $0x100] sm:$0xf]
        %v1417 = vld [vmem:[#allocation2 + $0x108] sm:$0xff]
        %v1418 = vld [vmem:[#allocation2 + $0x110] sm:$0xff]
        %v1419 = vld [vmem:[#allocation2 + $0x118] sm:$0xf]
        %v1420 = vld [vmem:[#allocation2 + $0x120] sm:$0xff]
        %v1421 = vld [vmem:[#allocation2 + $0x128] sm:$0xff]
        %v1422 = vld [vmem:[#allocation2 + $0x130] sm:$0xf]
        %v1423 = vld [vmem:[#allocation2 + $0x138] sm:$0xff]
        %v1424 = vld [vmem:[#allocation2 + $0x140] sm:$0xff]
        %v1425 = vld [vmem:[#allocation2 + $0x148] sm:$0xf]
        %v1426 = vld [vmem:[#allocation2 + $0x150] sm:$0xff]
        %v1427 = vld [vmem:[#allocation2 + $0x158] sm:$0xff]
        %v1428 = vld [vmem:[#allocation2 + $0x160] sm:$0xf]
        %v1429 = vld [vmem:[#allocation2 + $0x168] sm:$0xff]
        %v1430 = vld [vmem:[#allocation2 + $0x170] sm:$0xff]
        %v1431 = vld [vmem:[#allocation2 + $0x178] sm:$0xf]
        %v1432 = vadd.f32 %v1384, 0.0
        %v1433 = vadd.f32 %v1385, 0.0
        %v1434 = vadd.f32 %v1387, 0.0
        %v1435 = vadd.f32 %v1388, 0.0
        %v1436 = vadd.f32 %v1390, 0.0
        %v1437 = vadd.f32 %v1391, 0.0
        %v1438 = vadd.f32 %v1393, 0.0
        %v1439 = vadd.f32 %v1394, 0.0
        %v1440 = vadd.f32 %v1396, 0.0
        %v1441 = vadd.f32 %v1397, 0.0
        %v1442 = vadd.f32 %v1399, 0.0
        %v1443 = vadd.f32 %v1400, 0.0
        %v1444 = vadd.f32 %v1402, 0.0
        %v1445 = vadd.f32 %v1403, 0.0
        %v1446 = vadd.f32 %v1405, 0.0
        %v1447 = vadd.f32 %v1406, 0.0
        %v1448 = vadd.f32 %v1408, 0.0
        %v1449 = vadd.f32 %v1409, 0.0
        %v1450 = vadd.f32 %v1411, 0.0
        %v1451 = vadd.f32 %v1412, 0.0
        %v1452 = vadd.f32 %v1414, 0.0
        %v1453 = vadd.f32 %v1415, 0.0
        %v1454 = vadd.f32 %v1417, 0.0
        %v1455 = vadd.f32 %v1418, 0.0
        %v1456 = vadd.f32 %v1420, 0.0
        %v1457 = vadd.f32 %v1421, 0.0
        %v1458 = vadd.f32 %v1423, 0.0
        %v1459 = vadd.f32 %v1424, 0.0
        %v1460 = vadd.f32 %v1426, 0.0
        %v1461 = vadd.f32 %v1427, 0.0
        %v1462 = vadd.f32 %v1429, 0.0
        %v1463 = vadd.f32 %v1430, 0.0
        %vm1512 = vcmask 1046528
        %v1513 = vrot.slane %v1384, 1
        %v1514 = vrot.slane %v1385, 1
        %v1515 = vsel %vm1512, %v1513, %v1514
        %v1516 = vrot.slane %v1386, 1
        %v1517 = vsel %vm1512, %v1514, %v1516
        %v1518 = vrot.slane %v1387, 1
        %v1519 = vrot.slane %v1388, 1
        %v1520 = vsel %vm1512, %v1518, %v1519
        %v1521 = vrot.slane %v1389, 1
        %v1522 = vsel %vm1512, %v1519, %v1521
        %v1523 = vrot.slane %v1390, 1
        %v1524 = vrot.slane %v1391, 1
        %v1525 = vsel %vm1512, %v1523, %v1524
        %v1526 = vrot.slane %v1392, 1
        %v1527 = vsel %vm1512, %v1524, %v1526
        %v1528 = vrot.slane %v1393, 1
        %v1529 = vrot.slane %v1394, 1
        %v1530 = vsel %vm1512, %v1528, %v1529
        %v1531 = vrot.slane %v1395, 1
        %v1532 = vsel %vm1512, %v1529, %v1531
        %v1533 = vrot.slane %v1396, 1
        %v1534 = vrot.slane %v1397, 1
        %v1535 = vsel %vm1512, %v1533, %v1534
        %v1536 = vrot.slane %v1398, 1
        %v1537 = vsel %vm1512, %v1534, %v1536
        %v1538 = vrot.slane %v1399, 1
        %v1539 = vrot.slane %v1400, 1
        %v1540 = vsel %vm1512, %v1538, %v1539
        %v1541 = vrot.slane %v1401, 1
        %v1542 = vsel %vm1512, %v1539, %v1541
        %v1543 = vrot.slane %v1402, 1
        %v1544 = vrot.slane %v1403, 1
        %v1545 = vsel %vm1512, %v1543, %v1544
        %v1546 = vrot.slane %v1404, 1
        %v1547 = vsel %vm1512, %v1544, %v1546
        %v1548 = vrot.slane %v1405, 1
        %v1549 = vrot.slane %v1406, 1
        %v1550 = vsel %vm1512, %v1548, %v1549
        %v1551 = vrot.slane %v1407, 1
        %v1552 = vsel %vm1512, %v1549, %v1551
        %v1553 = vrot.slane %v1408, 1
        %v1554 = vrot.slane %v1409, 1
        %v1555 = vsel %vm1512, %v1553, %v1554
        %v1556 = vrot.slane %v1410, 1
        %v1557 = vsel %vm1512, %v1554, %v1556
        %v1558 = vrot.slane %v1411, 1
        %v1559 = vrot.slane %v1412, 1
        %v1560 = vsel %vm1512, %v1558, %v1559
        %v1561 = vrot.slane %v1413, 1
        %v1562 = vsel %vm1512, %v1559, %v1561
        %v1563 = vrot.slane %v1414, 1
        %v1564 = vrot.slane %v1415, 1
        %v1565 = vsel %vm1512, %v1563, %v1564
        %v1566 = vrot.slane %v1416, 1
        %v1567 = vsel %vm1512, %v1564, %v1566
        %v1568 = vrot.slane %v1417, 1
        %v1569 = vrot.slane %v1418, 1
        %v1570 = vsel %vm1512, %v1568, %v1569
        %v1571 = vrot.slane %v1419, 1
        %v1572 = vsel %vm1512, %v1569, %v1571
        %v1573 = vrot.slane %v1420, 1
        %v1574 = vrot.slane %v1421, 1
        %v1575 = vsel %vm1512, %v1573, %v1574
        %v1576 = vrot.slane %v1422, 1
        %v1577 = vsel %vm1512, %v1574, %v1576
        %v1578 = vrot.slane %v1423, 1
        %v1579 = vrot.slane %v1424, 1
        %v1580 = vsel %vm1512, %v1578, %v1579
        %v1581 = vrot.slane %v1425, 1
        %v1582 = vsel %vm1512, %v1579, %v1581
        %v1583 = vrot.slane %v1426, 1
        %v1584 = vrot.slane %v1427, 1
        %v1585 = vsel %vm1512, %v1583, %v1584
        %v1586 = vrot.slane %v1428, 1
        %v1587 = vsel %vm1512, %v1584, %v1586
        %v1588 = vrot.slane %v1429, 1
        %v1589 = vrot.slane %v1430, 1
        %v1590 = vsel %vm1512, %v1588, %v1589
        %v1591 = vrot.slane %v1431, 1
        %v1592 = vsel %vm1512, %v1589, %v1591
        %1593 = vrot.lane.b32.xlu0 %v1515, 127
        %v1594 = vpop.permute.xlu0 %1593
        %1595 = vrot.lane.b32.xlu0 %v1517, 127
        %v1596 = vpop.permute.xlu0 %1595
        %1597 = vrot.lane.b32.xlu0 %v1520, 127
        %v1598 = vpop.permute.xlu0 %1597
        %1599 = vrot.lane.b32.xlu0 %v1522, 127
        %v1600 = vpop.permute.xlu0 %1599
        %1601 = vrot.lane.b32.xlu0 %v1525, 127
        %v1602 = vpop.permute.xlu0 %1601
        %1603 = vrot.lane.b32.xlu0 %v1527, 127
        %v1604 = vpop.permute.xlu0 %1603
        %1605 = vrot.lane.b32.xlu0 %v1530, 127
        %v1606 = vpop.permute.xlu0 %1605
        %1607 = vrot.lane.b32.xlu0 %v1532, 127
        %v1608 = vpop.permute.xlu0 %1607
        %1609 = vrot.lane.b32.xlu0 %v1535, 127
        %v1610 = vpop.permute.xlu0 %1609
        %1611 = vrot.lane.b32.xlu0 %v1537, 127
        %v1612 = vpop.permute.xlu0 %1611
        %1613 = vrot.lane.b32.xlu0 %v1540, 127
        %v1614 = vpop.permute.xlu0 %1613
        %1615 = vrot.lane.b32.xlu0 %v1542, 127
        %v1616 = vpop.permute.xlu0 %1615
        %1617 = vrot.lane.b32.xlu0 %v1545, 127
        %v1618 = vpop.permute.xlu0 %1617
        %1619 = vrot.lane.b32.xlu0 %v1547, 127
        %v1620 = vpop.permute.xlu0 %1619
        %1621 = vrot.lane.b32.xlu0 %v1550, 127
        %v1622 = vpop.permute.xlu0 %1621
        %1623 = vrot.lane.b32.xlu0 %v1552, 127
        %v1624 = vpop.permute.xlu0 %1623
        %1625 = vrot.lane.b32.xlu0 %v1555, 127
        %v1626 = vpop.permute.xlu0 %1625
        %1627 = vrot.lane.b32.xlu0 %v1557, 127
        %v1628 = vpop.permute.xlu0 %1627
        %1629 = vrot.lane.b32.xlu0 %v1560, 127
        %v1630 = vpop.permute.xlu0 %1629
        %1631 = vrot.lane.b32.xlu0 %v1562, 127
        %v1632 = vpop.permute.xlu0 %1631
        %1633 = vrot.lane.b32.xlu0 %v1565, 127
        %v1634 = vpop.permute.xlu0 %1633
        %1635 = vrot.lane.b32.xlu0 %v1567, 127
        %v1636 = vpop.permute.xlu0 %1635
        %1637 = vrot.lane.b32.xlu0 %v1570, 127
        %v1638 = vpop.permute.xlu0 %1637
        %1639 = vrot.lane.b32.xlu0 %v1572, 127
        %v1640 = vpop.permute.xlu0 %1639
        %1641 = vrot.lane.b32.xlu0 %v1575, 127
        %v1642 = vpop.permute.xlu0 %1641
        %1643 = vrot.lane.b32.xlu0 %v1577, 127
        %v1644 = vpop.permute.xlu0 %1643
        %1645 = vrot.lane.b32.xlu0 %v1580, 127
        %v1646 = vpop.permute.xlu0 %1645
        %1647 = vrot.lane.b32.xlu0 %v1582, 127
        %v1648 = vpop.permute.xlu0 %1647
        %1649 = vrot.lane.b32.xlu0 %v1585, 127
        %v1650 = vpop.permute.xlu0 %1649
        %1651 = vrot.lane.b32.xlu0 %v1587, 127
        %v1652 = vpop.permute.xlu0 %1651
        %1653 = vrot.lane.b32.xlu0 %v1590, 127
        %v1654 = vpop.permute.xlu0 %1653
        %1655 = vrot.lane.b32.xlu0 %v1592, 127
        %v1656 = vpop.permute.xlu0 %1655
        %v1689 = vadd.f32 %v1432, %v1594
        %v1690 = vadd.f32 %v1433, %v1596
        %v1691 = vadd.f32 %v1434, %v1598
        %v1692 = vadd.f32 %v1435, %v1600
        %v1693 = vadd.f32 %v1436, %v1602
        %v1694 = vadd.f32 %v1437, %v1604
        %v1695 = vadd.f32 %v1438, %v1606
        %v1696 = vadd.f32 %v1439, %v1608
        %v1697 = vadd.f32 %v1440, %v1610
        %v1698 = vadd.f32 %v1441, %v1612
        %v1699 = vadd.f32 %v1442, %v1614
        %v1700 = vadd.f32 %v1443, %v1616
        %v1701 = vadd.f32 %v1444, %v1618
        %v1702 = vadd.f32 %v1445, %v1620
        %v1703 = vadd.f32 %v1446, %v1622
        %v1704 = vadd.f32 %v1447, %v1624
        %v1705 = vadd.f32 %v1448, %v1626
        %v1706 = vadd.f32 %v1449, %v1628
        %v1707 = vadd.f32 %v1450, %v1630
        %v1708 = vadd.f32 %v1451, %v1632
        %v1709 = vadd.f32 %v1452, %v1634
        %v1710 = vadd.f32 %v1453, %v1636
        %v1711 = vadd.f32 %v1454, %v1638
        %v1712 = vadd.f32 %v1455, %v1640
        %v1713 = vadd.f32 %v1456, %v1642
        %v1714 = vadd.f32 %v1457, %v1644
        %v1715 = vadd.f32 %v1458, %v1646
        %v1716 = vadd.f32 %v1459, %v1648
        %v1717 = vadd.f32 %v1460, %v1650
        %v1718 = vadd.f32 %v1461, %v1652
        %v1719 = vadd.f32 %v1462, %v1654
        %v1720 = vadd.f32 %v1463, %v1656
        %vm1721 = vcmask 1045504
        %v1722 = vrot.slane %v1384, 2
        %v1723 = vrot.slane %v1385, 2
        %v1724 = vsel %vm1721, %v1722, %v1723
        %v1725 = vrot.slane %v1386, 2
        %v1726 = vsel %vm1721, %v1723, %v1725
        %v1727 = vrot.slane %v1387, 2
        %v1728 = vrot.slane %v1388, 2
        %v1729 = vsel %vm1721, %v1727, %v1728
        %v1730 = vrot.slane %v1389, 2
        %v1731 = vsel %vm1721, %v1728, %v1730
        %v1732 = vrot.slane %v1390, 2
        %v1733 = vrot.slane %v1391, 2
        %v1734 = vsel %vm1721, %v1732, %v1733
        %v1735 = vrot.slane %v1392, 2
        %v1736 = vsel %vm1721, %v1733, %v1735
        %v1737 = vrot.slane %v1393, 2
        %v1738 = vrot.slane %v1394, 2
        %v1739 = vsel %vm1721, %v1737, %v1738
        %v1740 = vrot.slane %v1395, 2
        %v1741 = vsel %vm1721, %v1738, %v1740
        %v1742 = vrot.slane %v1396, 2
        %v1743 = vrot.slane %v1397, 2
        %v1744 = vsel %vm1721, %v1742, %v1743
        %v1745 = vrot.slane %v1398, 2
        %v1746 = vsel %vm1721, %v1743, %v1745
        %v1747 = vrot.slane %v1399, 2
        %v1748 = vrot.slane %v1400, 2
        %v1749 = vsel %vm1721, %v1747, %v1748
        %v1750 = vrot.slane %v1401, 2
        %v1751 = vsel %vm1721, %v1748, %v1750
        %v1752 = vrot.slane %v1402, 2
        %v1753 = vrot.slane %v1403, 2
        %v1754 = vsel %vm1721, %v1752, %v1753
        %v1755 = vrot.slane %v1404, 2
        %v1756 = vsel %vm1721, %v1753, %v1755
        %v1757 = vrot.slane %v1405, 2
        %v1758 = vrot.slane %v1406, 2
        %v1759 = vsel %vm1721, %v1757, %v1758
        %v1760 = vrot.slane %v1407, 2
        %v1761 = vsel %vm1721, %v1758, %v1760
        %v1762 = vrot.slane %v1408, 2
        %v1763 = vrot.slane %v1409, 2
        %v1764 = vsel %vm1721, %v1762, %v1763
        %v1765 = vrot.slane %v1410, 2
        %v1766 = vsel %vm1721, %v1763, %v1765
        %v1767 = vrot.slane %v1411, 2
        %v1768 = vrot.slane %v1412, 2
        %v1769 = vsel %vm1721, %v1767, %v1768
        %v1770 = vrot.slane %v1413, 2
        %v1771 = vsel %vm1721, %v1768, %v1770
        %v1772 = vrot.slane %v1414, 2
        %v1773 = vrot.slane %v1415, 2
        %v1774 = vsel %vm1721, %v1772, %v1773
        %v1775 = vrot.slane %v1416, 2
        %v1776 = vsel %vm1721, %v1773, %v1775
        %v1777 = vrot.slane %v1417, 2
        %v1778 = vrot.slane %v1418, 2
        %v1779 = vsel %vm1721, %v1777, %v1778
        %v1780 = vrot.slane %v1419, 2
        %v1781 = vsel %vm1721, %v1778, %v1780
        %v1782 = vrot.slane %v1420, 2
        %v1783 = vrot.slane %v1421, 2
        %v1784 = vsel %vm1721, %v1782, %v1783
        %v1785 = vrot.slane %v1422, 2
        %v1786 = vsel %vm1721, %v1783, %v1785
        %v1787 = vrot.slane %v1423, 2
        %v1788 = vrot.slane %v1424, 2
        %v1789 = vsel %vm1721, %v1787, %v1788
        %v1790 = vrot.slane %v1425, 2
        %v1791 = vsel %vm1721, %v1788, %v1790
        %v1792 = vrot.slane %v1426, 2
        %v1793 = vrot.slane %v1427, 2
        %v1794 = vsel %vm1721, %v1792, %v1793
        %v1795 = vrot.slane %v1428, 2
        %v1796 = vsel %vm1721, %v1793, %v1795
        %v1797 = vrot.slane %v1429, 2
        %v1798 = vrot.slane %v1430, 2
        %v1799 = vsel %vm1721, %v1797, %v1798
        %v1800 = vrot.slane %v1431, 2
        %v1801 = vsel %vm1721, %v1798, %v1800
        %1802 = vrot.lane.b32.xlu0 %v1724, 126
        %v1803 = vpop.permute.xlu0 %1802
        %1804 = vrot.lane.b32.xlu0 %v1726, 126
        %v1805 = vpop.permute.xlu0 %1804
        %1806 = vrot.lane.b32.xlu0 %v1729, 126
        %v1807 = vpop.permute.xlu0 %1806
        %1808 = vrot.lane.b32.xlu0 %v1731, 126
        %v1809 = vpop.permute.xlu0 %1808
        %1810 = vrot.lane.b32.xlu0 %v1734, 126
        %v1811 = vpop.permute.xlu0 %1810
        %1812 = vrot.lane.b32.xlu0 %v1736, 126
        %v1813 = vpop.permute.xlu0 %1812
        %1814 = vrot.lane.b32.xlu0 %v1739, 126
        %v1815 = vpop.permute.xlu0 %1814
        %1816 = vrot.lane.b32.xlu0 %v1741, 126
        %v1817 = vpop.permute.xlu0 %1816
        %1818 = vrot.lane.b32.xlu0 %v1744, 126
        %v1819 = vpop.permute.xlu0 %1818
        %1820 = vrot.lane.b32.xlu0 %v1746, 126
        %v1821 = vpop.permute.xlu0 %1820
        %1822 = vrot.lane.b32.xlu0 %v1749, 126
        %v1823 = vpop.permute.xlu0 %1822
        %1824 = vrot.lane.b32.xlu0 %v1751, 126
        %v1825 = vpop.permute.xlu0 %1824
        %1826 = vrot.lane.b32.xlu0 %v1754, 126
        %v1827 = vpop.permute.xlu0 %1826
        %1828 = vrot.lane.b32.xlu0 %v1756, 126
        %v1829 = vpop.permute.xlu0 %1828
        %1830 = vrot.lane.b32.xlu0 %v1759, 126
        %v1831 = vpop.permute.xlu0 %1830
        %1832 = vrot.lane.b32.xlu0 %v1761, 126
        %v1833 = vpop.permute.xlu0 %1832
        %1834 = vrot.lane.b32.xlu0 %v1764, 126
        %v1835 = vpop.permute.xlu0 %1834
        %1836 = vrot.lane.b32.xlu0 %v1766, 126
        %v1837 = vpop.permute.xlu0 %1836
        %1838 = vrot.lane.b32.xlu0 %v1769, 126
        %v1839 = vpop.permute.xlu0 %1838
        %1840 = vrot.lane.b32.xlu0 %v1771, 126
        %v1841 = vpop.permute.xlu0 %1840
        %1842 = vrot.lane.b32.xlu0 %v1774, 126
        %v1843 = vpop.permute.xlu0 %1842
        %1844 = vrot.lane.b32.xlu0 %v1776, 126
        %v1845 = vpop.permute.xlu0 %1844
        %1846 = vrot.lane.b32.xlu0 %v1779, 126
        %v1847 = vpop.permute.xlu0 %1846
        %1848 = vrot.lane.b32.xlu0 %v1781, 126
        %v1849 = vpop.permute.xlu0 %1848
        %1850 = vrot.lane.b32.xlu0 %v1784, 126
        %v1851 = vpop.permute.xlu0 %1850
        %1852 = vrot.lane.b32.xlu0 %v1786, 126
        %v1853 = vpop.permute.xlu0 %1852
        %1854 = vrot.lane.b32.xlu0 %v1789, 126
        %v1855 = vpop.permute.xlu0 %1854
        %1856 = vrot.lane.b32.xlu0 %v1791, 126
        %v1857 = vpop.permute.xlu0 %1856
        %1858 = vrot.lane.b32.xlu0 %v1794, 126
        %v1859 = vpop.permute.xlu0 %1858
        %1860 = vrot.lane.b32.xlu0 %v1796, 126
        %v1861 = vpop.permute.xlu0 %1860
        %1862 = vrot.lane.b32.xlu0 %v1799, 126
        %v1863 = vpop.permute.xlu0 %1862
        %1864 = vrot.lane.b32.xlu0 %v1801, 126
        %v1865 = vpop.permute.xlu0 %1864
        %v1898 = vadd.f32 %v1689, %v1803
        %v1899 = vadd.f32 %v1690, %v1805
        %v1900 = vadd.f32 %v1691, %v1807
        %v1901 = vadd.f32 %v1692, %v1809
        %v1902 = vadd.f32 %v1693, %v1811
        %v1903 = vadd.f32 %v1694, %v1813
        %v1904 = vadd.f32 %v1695, %v1815
        %v1905 = vadd.f32 %v1696, %v1817
        %v1906 = vadd.f32 %v1697, %v1819
        %v1907 = vadd.f32 %v1698, %v1821
        %v1908 = vadd.f32 %v1699, %v1823
        %v1909 = vadd.f32 %v1700, %v1825
        %v1910 = vadd.f32 %v1701, %v1827
        %v1911 = vadd.f32 %v1702, %v1829
        %v1912 = vadd.f32 %v1703, %v1831
        %v1913 = vadd.f32 %v1704, %v1833
        %v1914 = vadd.f32 %v1705, %v1835
        %v1915 = vadd.f32 %v1706, %v1837
        %v1916 = vadd.f32 %v1707, %v1839
        %v1917 = vadd.f32 %v1708, %v1841
        %v1918 = vadd.f32 %v1709, %v1843
        %v1919 = vadd.f32 %v1710, %v1845
        %v1920 = vadd.f32 %v1711, %v1847
        %v1921 = vadd.f32 %v1712, %v1849
        %v1922 = vadd.f32 %v1713, %v1851
        %v1923 = vadd.f32 %v1714, %v1853
        %v1924 = vadd.f32 %v1715, %v1855
        %v1925 = vadd.f32 %v1716, %v1857
        %v1926 = vadd.f32 %v1717, %v1859
        %v1927 = vadd.f32 %v1718, %v1861
        %v1928 = vadd.f32 %v1719, %v1863
        %v1929 = vadd.f32 %v1720, %v1865
        %vm1930 = vcmask 1044480
        %v1931 = vrot.slane %v1384, 3
        %v1932 = vrot.slane %v1385, 3
        %v1933 = vsel %vm1930, %v1931, %v1932
        %v1934 = vrot.slane %v1386, 3
        %v1935 = vsel %vm1930, %v1932, %v1934
        %v1936 = vrot.slane %v1387, 3
        %v1937 = vrot.slane %v1388, 3
        %v1938 = vsel %vm1930, %v1936, %v1937
        %v1939 = vrot.slane %v1389, 3
        %v1940 = vsel %vm1930, %v1937, %v1939
        %v1941 = vrot.slane %v1390, 3
        %v1942 = vrot.slane %v1391, 3
        %v1943 = vsel %vm1930, %v1941, %v1942
        %v1944 = vrot.slane %v1392, 3
        %v1945 = vsel %vm1930, %v1942, %v1944
        %v1946 = vrot.slane %v1393, 3
        %v1947 = vrot.slane %v1394, 3
        %v1948 = vsel %vm1930, %v1946, %v1947
        %v1949 = vrot.slane %v1395, 3
        %v1950 = vsel %vm1930, %v1947, %v1949
        %v1951 = vrot.slane %v1396, 3
        %v1952 = vrot.slane %v1397, 3
        %v1953 = vsel %vm1930, %v1951, %v1952
        %v1954 = vrot.slane %v1398, 3
        %v1955 = vsel %vm1930, %v1952, %v1954
        %v1956 = vrot.slane %v1399, 3
        %v1957 = vrot.slane %v1400, 3
        %v1958 = vsel %vm1930, %v1956, %v1957
        %v1959 = vrot.slane %v1401, 3
        %v1960 = vsel %vm1930, %v1957, %v1959
        %v1961 = vrot.slane %v1402, 3
        %v1962 = vrot.slane %v1403, 3
        %v1963 = vsel %vm1930, %v1961, %v1962
        %v1964 = vrot.slane %v1404, 3
        %v1965 = vsel %vm1930, %v1962, %v1964
        %v1966 = vrot.slane %v1405, 3
        %v1967 = vrot.slane %v1406, 3
        %v1968 = vsel %vm1930, %v1966, %v1967
        %v1969 = vrot.slane %v1407, 3
        %v1970 = vsel %vm1930, %v1967, %v1969
        %v1971 = vrot.slane %v1408, 3
        %v1972 = vrot.slane %v1409, 3
        %v1973 = vsel %vm1930, %v1971, %v1972
        %v1974 = vrot.slane %v1410, 3
        %v1975 = vsel %vm1930, %v1972, %v1974
        %v1976 = vrot.slane %v1411, 3
        %v1977 = vrot.slane %v1412, 3
        %v1978 = vsel %vm1930, %v1976, %v1977
        %v1979 = vrot.slane %v1413, 3
        %v1980 = vsel %vm1930, %v1977, %v1979
        %v1981 = vrot.slane %v1414, 3
        %v1982 = vrot.slane %v1415, 3
        %v1983 = vsel %vm1930, %v1981, %v1982
        %v1984 = vrot.slane %v1416, 3
        %v1985 = vsel %vm1930, %v1982, %v1984
        %v1986 = vrot.slane %v1417, 3
        %v1987 = vrot.slane %v1418, 3
        %v1988 = vsel %vm1930, %v1986, %v1987
        %v1989 = vrot.slane %v1419, 3
        %v1990 = vsel %vm1930, %v1987, %v1989
        %v1991 = vrot.slane %v1420, 3
        %v1992 = vrot.slane %v1421, 3
        %v1993 = vsel %vm1930, %v1991, %v1992
        %v1994 = vrot.slane %v1422, 3
        %v1995 = vsel %vm1930, %v1992, %v1994
        %v1996 = vrot.slane %v1423, 3
        %v1997 = vrot.slane %v1424, 3
        %v1998 = vsel %vm1930, %v1996, %v1997
        %v1999 = vrot.slane %v1425, 3
        %v2000 = vsel %vm1930, %v1997, %v1999
        %v2001 = vrot.slane %v1426, 3
        %v2002 = vrot.slane %v1427, 3
        %v2003 = vsel %vm1930, %v2001, %v2002
        %v2004 = vrot.slane %v1428, 3
        %v2005 = vsel %vm1930, %v2002, %v2004
        %v2006 = vrot.slane %v1429, 3
        %v2007 = vrot.slane %v1430, 3
        %v2008 = vsel %vm1930, %v2006, %v2007
        %v2009 = vrot.slane %v1431, 3
        %v2010 = vsel %vm1930, %v2007, %v2009
        %2011 = vrot.lane.b32.xlu0 %v1933, 125
        %v2012 = vpop.permute.xlu0 %2011
        %2013 = vrot.lane.b32.xlu0 %v1935, 125
        %v2014 = vpop.permute.xlu0 %2013
        %2015 = vrot.lane.b32.xlu0 %v1938, 125
        %v2016 = vpop.permute.xlu0 %2015
        %2017 = vrot.lane.b32.xlu0 %v1940, 125
        %v2018 = vpop.permute.xlu0 %2017
        %2019 = vrot.lane.b32.xlu0 %v1943, 125
        %v2020 = vpop.permute.xlu0 %2019
        %2021 = vrot.lane.b32.xlu0 %v1945, 125
        %v2022 = vpop.permute.xlu0 %2021
        %2023 = vrot.lane.b32.xlu0 %v1948, 125
        %v2024 = vpop.permute.xlu0 %2023
        %2025 = vrot.lane.b32.xlu0 %v1950, 125
        %v2026 = vpop.permute.xlu0 %2025
        %2027 = vrot.lane.b32.xlu0 %v1953, 125
        %v2028 = vpop.permute.xlu0 %2027
        %2029 = vrot.lane.b32.xlu0 %v1955, 125
        %v2030 = vpop.permute.xlu0 %2029
        %2031 = vrot.lane.b32.xlu0 %v1958, 125
        %v2032 = vpop.permute.xlu0 %2031
        %2033 = vrot.lane.b32.xlu0 %v1960, 125
        %v2034 = vpop.permute.xlu0 %2033
        %2035 = vrot.lane.b32.xlu0 %v1963, 125
        %v2036 = vpop.permute.xlu0 %2035
        %2037 = vrot.lane.b32.xlu0 %v1965, 125
        %v2038 = vpop.permute.xlu0 %2037
        %2039 = vrot.lane.b32.xlu0 %v1968, 125
        %v2040 = vpop.permute.xlu0 %2039
        %2041 = vrot.lane.b32.xlu0 %v1970, 125
        %v2042 = vpop.permute.xlu0 %2041
        %2043 = vrot.lane.b32.xlu0 %v1973, 125
        %v2044 = vpop.permute.xlu0 %2043
        %2045 = vrot.lane.b32.xlu0 %v1975, 125
        %v2046 = vpop.permute.xlu0 %2045
        %2047 = vrot.lane.b32.xlu0 %v1978, 125
        %v2048 = vpop.permute.xlu0 %2047
        %2049 = vrot.lane.b32.xlu0 %v1980, 125
        %v2050 = vpop.permute.xlu0 %2049
        %2051 = vrot.lane.b32.xlu0 %v1983, 125
        %v2052 = vpop.permute.xlu0 %2051
        %2053 = vrot.lane.b32.xlu0 %v1985, 125
        %v2054 = vpop.permute.xlu0 %2053
        %2055 = vrot.lane.b32.xlu0 %v1988, 125
        %v2056 = vpop.permute.xlu0 %2055
        %2057 = vrot.lane.b32.xlu0 %v1990, 125
        %v2058 = vpop.permute.xlu0 %2057
        %2059 = vrot.lane.b32.xlu0 %v1993, 125
        %v2060 = vpop.permute.xlu0 %2059
        %2061 = vrot.lane.b32.xlu0 %v1995, 125
        %v2062 = vpop.permute.xlu0 %2061
        %2063 = vrot.lane.b32.xlu0 %v1998, 125
        %v2064 = vpop.permute.xlu0 %2063
        %2065 = vrot.lane.b32.xlu0 %v2000, 125
        %v2066 = vpop.permute.xlu0 %2065
        %2067 = vrot.lane.b32.xlu0 %v2003, 125
        %v2068 = vpop.permute.xlu0 %2067
        %2069 = vrot.lane.b32.xlu0 %v2005, 125
        %v2070 = vpop.permute.xlu0 %2069
        %2071 = vrot.lane.b32.xlu0 %v2008, 125
        %v2072 = vpop.permute.xlu0 %2071
        %2073 = vrot.lane.b32.xlu0 %v2010, 125
        %v2074 = vpop.permute.xlu0 %2073
        %v2107 = vadd.f32 %v1898, %v2012
        %v2108 = vadd.f32 %v1899, %v2014
        %v2109 = vadd.f32 %v1900, %v2016
        %v2110 = vadd.f32 %v1901, %v2018
        %v2111 = vadd.f32 %v1902, %v2020
        %v2112 = vadd.f32 %v1903, %v2022
        %v2113 = vadd.f32 %v1904, %v2024
        %v2114 = vadd.f32 %v1905, %v2026
        %v2115 = vadd.f32 %v1906, %v2028
        %v2116 = vadd.f32 %v1907, %v2030
        %v2117 = vadd.f32 %v1908, %v2032
        %v2118 = vadd.f32 %v1909, %v2034
        %v2119 = vadd.f32 %v1910, %v2036
        %v2120 = vadd.f32 %v1911, %v2038
        %v2121 = vadd.f32 %v1912, %v2040
        %v2122 = vadd.f32 %v1913, %v2042
        %v2123 = vadd.f32 %v1914, %v2044
        %v2124 = vadd.f32 %v1915, %v2046
        %v2125 = vadd.f32 %v1916, %v2048
        %v2126 = vadd.f32 %v1917, %v2050
        %v2127 = vadd.f32 %v1918, %v2052
        %v2128 = vadd.f32 %v1919, %v2054
        %v2129 = vadd.f32 %v1920, %v2056
        %v2130 = vadd.f32 %v1921, %v2058
        %v2131 = vadd.f32 %v1922, %v2060
        %v2132 = vadd.f32 %v1923, %v2062
        %v2133 = vadd.f32 %v1924, %v2064
        %v2134 = vadd.f32 %v1925, %v2066
        %v2135 = vadd.f32 %v1926, %v2068
        %v2136 = vadd.f32 %v1927, %v2070
        %v2137 = vadd.f32 %v1928, %v2072
        %v2138 = vadd.f32 %v1929, %v2074
        %vm2139 = vcmask 1043456
        %v2140 = vrot.slane %v1384, 4
        %v2141 = vrot.slane %v1385, 4
        %v2142 = vsel %vm2139, %v2140, %v2141
        %v2143 = vrot.slane %v1386, 4
        %v2144 = vsel %vm2139, %v2141, %v2143
        %v2145 = vrot.slane %v1387, 4
        %v2146 = vrot.slane %v1388, 4
        %v2147 = vsel %vm2139, %v2145, %v2146
        %v2148 = vrot.slane %v1389, 4
        %v2149 = vsel %vm2139, %v2146, %v2148
        %v2150 = vrot.slane %v1390, 4
        %v2151 = vrot.slane %v1391, 4
        %v2152 = vsel %vm2139, %v2150, %v2151
        %v2153 = vrot.slane %v1392, 4
        %v2154 = vsel %vm2139, %v2151, %v2153
        %v2155 = vrot.slane %v1393, 4
        %v2156 = vrot.slane %v1394, 4
        %v2157 = vsel %vm2139, %v2155, %v2156
        %v2158 = vrot.slane %v1395, 4
        %v2159 = vsel %vm2139, %v2156, %v2158
        %v2160 = vrot.slane %v1396, 4
        %v2161 = vrot.slane %v1397, 4
        %v2162 = vsel %vm2139, %v2160, %v2161
        %v2163 = vrot.slane %v1398, 4
        %v2164 = vsel %vm2139, %v2161, %v2163
        %v2165 = vrot.slane %v1399, 4
        %v2166 = vrot.slane %v1400, 4
        %v2167 = vsel %vm2139, %v2165, %v2166
        %v2168 = vrot.slane %v1401, 4
        %v2169 = vsel %vm2139, %v2166, %v2168
        %v2170 = vrot.slane %v1402, 4
        %v2171 = vrot.slane %v1403, 4
        %v2172 = vsel %vm2139, %v2170, %v2171
        %v2173 = vrot.slane %v1404, 4
        %v2174 = vsel %vm2139, %v2171, %v2173
        %v2175 = vrot.slane %v1405, 4
        %v2176 = vrot.slane %v1406, 4
        %v2177 = vsel %vm2139, %v2175, %v2176
        %v2178 = vrot.slane %v1407, 4
        %v2179 = vsel %vm2139, %v2176, %v2178
        %v2180 = vrot.slane %v1408, 4
        %v2181 = vrot.slane %v1409, 4
        %v2182 = vsel %vm2139, %v2180, %v2181
        %v2183 = vrot.slane %v1410, 4
        %v2184 = vsel %vm2139, %v2181, %v2183
        %v2185 = vrot.slane %v1411, 4
        %v2186 = vrot.slane %v1412, 4
        %v2187 = vsel %vm2139, %v2185, %v2186
        %v2188 = vrot.slane %v1413, 4
        %v2189 = vsel %vm2139, %v2186, %v2188
        %v2190 = vrot.slane %v1414, 4
        %v2191 = vrot.slane %v1415, 4
        %v2192 = vsel %vm2139, %v2190, %v2191
        %v2193 = vrot.slane %v1416, 4
        %v2194 = vsel %vm2139, %v2191, %v2193
        %v2195 = vrot.slane %v1417, 4
        %v2196 = vrot.slane %v1418, 4
        %v2197 = vsel %vm2139, %v2195, %v2196
        %v2198 = vrot.slane %v1419, 4
        %v2199 = vsel %vm2139, %v2196, %v2198
        %v2200 = vrot.slane %v1420, 4
        %v2201 = vrot.slane %v1421, 4
        %v2202 = vsel %vm2139, %v2200, %v2201
        %v2203 = vrot.slane %v1422, 4
        %v2204 = vsel %vm2139, %v2201, %v2203
        %v2205 = vrot.slane %v1423, 4
        %v2206 = vrot.slane %v1424, 4
        %v2207 = vsel %vm2139, %v2205, %v2206
        %v2208 = vrot.slane %v1425, 4
        %v2209 = vsel %vm2139, %v2206, %v2208
        %v2210 = vrot.slane %v1426, 4
        %v2211 = vrot.slane %v1427, 4
        %v2212 = vsel %vm2139, %v2210, %v2211
        %v2213 = vrot.slane %v1428, 4
        %v2214 = vsel %vm2139, %v2211, %v2213
        %v2215 = vrot.slane %v1429, 4
        %v2216 = vrot.slane %v1430, 4
        %v2217 = vsel %vm2139, %v2215, %v2216
        %v2218 = vrot.slane %v1431, 4
        %v2219 = vsel %vm2139, %v2216, %v2218
        %2220 = vrot.lane.b32.xlu0 %v2142, 124
        %v2221 = vpop.permute.xlu0 %2220
        %2222 = vrot.lane.b32.xlu0 %v2144, 124
        %v2223 = vpop.permute.xlu0 %2222
        %2224 = vrot.lane.b32.xlu0 %v2147, 124
        %v2225 = vpop.permute.xlu0 %2224
        %2226 = vrot.lane.b32.xlu0 %v2149, 124
        %v2227 = vpop.permute.xlu0 %2226
        %2228 = vrot.lane.b32.xlu0 %v2152, 124
        %v2229 = vpop.permute.xlu0 %2228
        %2230 = vrot.lane.b32.xlu0 %v2154, 124
        %v2231 = vpop.permute.xlu0 %2230
        %2232 = vrot.lane.b32.xlu0 %v2157, 124
        %v2233 = vpop.permute.xlu0 %2232
        %2234 = vrot.lane.b32.xlu0 %v2159, 124
        %v2235 = vpop.permute.xlu0 %2234
        %2236 = vrot.lane.b32.xlu0 %v2162, 124
        %v2237 = vpop.permute.xlu0 %2236
        %2238 = vrot.lane.b32.xlu0 %v2164, 124
        %v2239 = vpop.permute.xlu0 %2238
        %2240 = vrot.lane.b32.xlu0 %v2167, 124
        %v2241 = vpop.permute.xlu0 %2240
        %2242 = vrot.lane.b32.xlu0 %v2169, 124
        %v2243 = vpop.permute.xlu0 %2242
        %2244 = vrot.lane.b32.xlu0 %v2172, 124
        %v2245 = vpop.permute.xlu0 %2244
        %2246 = vrot.lane.b32.xlu0 %v2174, 124
        %v2247 = vpop.permute.xlu0 %2246
        %2248 = vrot.lane.b32.xlu0 %v2177, 124
        %v2249 = vpop.permute.xlu0 %2248
        %2250 = vrot.lane.b32.xlu0 %v2179, 124
        %v2251 = vpop.permute.xlu0 %2250
        %2252 = vrot.lane.b32.xlu0 %v2182, 124
        %v2253 = vpop.permute.xlu0 %2252
        %2254 = vrot.lane.b32.xlu0 %v2184, 124
        %v2255 = vpop.permute.xlu0 %2254
        %2256 = vrot.lane.b32.xlu0 %v2187, 124
        %v2257 = vpop.permute.xlu0 %2256
        %2258 = vrot.lane.b32.xlu0 %v2189, 124
        %v2259 = vpop.permute.xlu0 %2258
        %2260 = vrot.lane.b32.xlu0 %v2192, 124
        %v2261 = vpop.permute.xlu0 %2260
        %2262 = vrot.lane.b32.xlu0 %v2194, 124
        %v2263 = vpop.permute.xlu0 %2262
        %2264 = vrot.lane.b32.xlu0 %v2197, 124
        %v2265 = vpop.permute.xlu0 %2264
        %2266 = vrot.lane.b32.xlu0 %v2199, 124
        %v2267 = vpop.permute.xlu0 %2266
        %2268 = vrot.lane.b32.xlu0 %v2202, 124
        %v2269 = vpop.permute.xlu0 %2268
        %2270 = vrot.lane.b32.xlu0 %v2204, 124
        %v2271 = vpop.permute.xlu0 %2270
        %2272 = vrot.lane.b32.xlu0 %v2207, 124
        %v2273 = vpop.permute.xlu0 %2272
        %2274 = vrot.lane.b32.xlu0 %v2209, 124
        %v2275 = vpop.permute.xlu0 %2274
        %2276 = vrot.lane.b32.xlu0 %v2212, 124
        %v2277 = vpop.permute.xlu0 %2276
        %2278 = vrot.lane.b32.xlu0 %v2214, 124
        %v2279 = vpop.permute.xlu0 %2278
        %2280 = vrot.lane.b32.xlu0 %v2217, 124
        %v2281 = vpop.permute.xlu0 %2280
        %2282 = vrot.lane.b32.xlu0 %v2219, 124
        %v2283 = vpop.permute.xlu0 %2282
        %v2316 = vadd.f32 %v2107, %v2221
        %v2317 = vadd.f32 %v2108, %v2223
        %v2318 = vadd.f32 %v2109, %v2225
        %v2319 = vadd.f32 %v2110, %v2227
        %v2320 = vadd.f32 %v2111, %v2229
        %v2321 = vadd.f32 %v2112, %v2231
        %v2322 = vadd.f32 %v2113, %v2233
        %v2323 = vadd.f32 %v2114, %v2235
        %v2324 = vadd.f32 %v2115, %v2237
        %v2325 = vadd.f32 %v2116, %v2239
        %v2326 = vadd.f32 %v2117, %v2241
        %v2327 = vadd.f32 %v2118, %v2243
        %v2328 = vadd.f32 %v2119, %v2245
        %v2329 = vadd.f32 %v2120, %v2247
        %v2330 = vadd.f32 %v2121, %v2249
        %v2331 = vadd.f32 %v2122, %v2251
        %v2332 = vadd.f32 %v2123, %v2253
        %v2333 = vadd.f32 %v2124, %v2255
        %v2334 = vadd.f32 %v2125, %v2257
        %v2335 = vadd.f32 %v2126, %v2259
        %v2336 = vadd.f32 %v2127, %v2261
        %v2337 = vadd.f32 %v2128, %v2263
        %v2338 = vadd.f32 %v2129, %v2265
        %v2339 = vadd.f32 %v2130, %v2267
        %v2340 = vadd.f32 %v2131, %v2269
        %v2341 = vadd.f32 %v2132, %v2271
        %v2342 = vadd.f32 %v2133, %v2273
        %v2343 = vadd.f32 %v2134, %v2275
        %v2344 = vadd.f32 %v2135, %v2277
        %v2345 = vadd.f32 %v2136, %v2279
        %v2346 = vadd.f32 %v2137, %v2281
        %v2347 = vadd.f32 %v2138, %v2283
        %v2348 = vld [vmem:[%s1368] sm:$0xff]
        %v2349 = vld [vmem:[%s1368 + $0x8] sm:$0xff]
        %v2350 = vld [vmem:[%s1368 + $0x10] sm:$0xf]
        %v2351 = vld [vmem:[%s1368 + $0x18] sm:$0xff]
        %v2352 = vld [vmem:[%s1368 + $0x20] sm:$0xff]
        %v2353 = vld [vmem:[%s1368 + $0x28] sm:$0xf]
        %v2354 = vld [vmem:[%s1368 + $0x30] sm:$0xff]
        %v2355 = vld [vmem:[%s1368 + $0x38] sm:$0xff]
        %v2356 = vld [vmem:[%s1368 + $0x40] sm:$0xf]
        %v2357 = vld [vmem:[%s1368 + $0x48] sm:$0xff]
        %v2358 = vld [vmem:[%s1368 + $0x50] sm:$0xff]
        %v2359 = vld [vmem:[%s1368 + $0x58] sm:$0xf]
        %v2360 = vld [vmem:[%s1368 + $0x60] sm:$0xff]
        %v2361 = vld [vmem:[%s1368 + $0x68] sm:$0xff]
        %v2362 = vld [vmem:[%s1368 + $0x70] sm:$0xf]
        %v2363 = vld [vmem:[%s1368 + $0x78] sm:$0xff]
        %v2364 = vld [vmem:[%s1368 + $0x80] sm:$0xff]
        %v2365 = vld [vmem:[%s1368 + $0x88] sm:$0xf]
        %v2366 = vld [vmem:[%s1368 + $0x90] sm:$0xff]
        %v2367 = vld [vmem:[%s1368 + $0x98] sm:$0xff]
        %v2368 = vld [vmem:[%s1368 + $0xa0] sm:$0xf]
        %v2369 = vld [vmem:[%s1368 + $0xa8] sm:$0xff]
        %v2370 = vld [vmem:[%s1368 + $0xb0] sm:$0xff]
        %v2371 = vld [vmem:[%s1368 + $0xb8] sm:$0xf]
        %v2372 = vld [vmem:[%s1368 + $0xc0] sm:$0xff]
        %v2373 = vld [vmem:[%s1368 + $0xc8] sm:$0xff]
        %v2374 = vld [vmem:[%s1368 + $0xd0] sm:$0xf]
        %v2375 = vld [vmem:[%s1368 + $0xd8] sm:$0xff]
        %v2376 = vld [vmem:[%s1368 + $0xe0] sm:$0xff]
        %v2377 = vld [vmem:[%s1368 + $0xe8] sm:$0xf]
        %v2378 = vld [vmem:[%s1368 + $0xf0] sm:$0xff]
        %v2379 = vld [vmem:[%s1368 + $0xf8] sm:$0xff]
        %v2380 = vld [vmem:[%s1368 + $0x100] sm:$0xf]
        %v2381 = vld [vmem:[%s1368 + $0x108] sm:$0xff]
        %v2382 = vld [vmem:[%s1368 + $0x110] sm:$0xff]
        %v2383 = vld [vmem:[%s1368 + $0x118] sm:$0xf]
        %v2384 = vld [vmem:[%s1368 + $0x120] sm:$0xff]
        %v2385 = vld [vmem:[%s1368 + $0x128] sm:$0xff]
        %v2386 = vld [vmem:[%s1368 + $0x130] sm:$0xf]
        %v2387 = vld [vmem:[%s1368 + $0x138] sm:$0xff]
        %v2388 = vld [vmem:[%s1368 + $0x140] sm:$0xff]
        %v2389 = vld [vmem:[%s1368 + $0x148] sm:$0xf]
        %v2390 = vld [vmem:[%s1368 + $0x150] sm:$0xff]
        %v2391 = vld [vmem:[%s1368 + $0x158] sm:$0xff]
        %v2392 = vld [vmem:[%s1368 + $0x160] sm:$0xf]
        %v2393 = vld [vmem:[%s1368 + $0x168] sm:$0xff]
        %v2394 = vld [vmem:[%s1368 + $0x170] sm:$0xff]
        %v2395 = vld [vmem:[%s1368 + $0x178] sm:$0xf]
        %2428 = vrot.lane.b32.xlu0 %v2348, 123
        %v2429 = vpop.permute.xlu0 %2428
        %2430 = vrot.lane.b32.xlu0 %v2349, 123
        %v2431 = vpop.permute.xlu0 %2430
        %2432 = vrot.lane.b32.xlu0 %v2351, 123
        %v2433 = vpop.permute.xlu0 %2432
        %2434 = vrot.lane.b32.xlu0 %v2352, 123
        %v2435 = vpop.permute.xlu0 %2434
        %2436 = vrot.lane.b32.xlu0 %v2354, 123
        %v2437 = vpop.permute.xlu0 %2436
        %2438 = vrot.lane.b32.xlu0 %v2355, 123
        %v2439 = vpop.permute.xlu0 %2438
        %2440 = vrot.lane.b32.xlu0 %v2357, 123
        %v2441 = vpop.permute.xlu0 %2440
        %2442 = vrot.lane.b32.xlu0 %v2358, 123
        %v2443 = vpop.permute.xlu0 %2442
        %2444 = vrot.lane.b32.xlu0 %v2360, 123
        %v2445 = vpop.permute.xlu0 %2444
        %2446 = vrot.lane.b32.xlu0 %v2361, 123
        %v2447 = vpop.permute.xlu0 %2446
        %2448 = vrot.lane.b32.xlu0 %v2363, 123
        %v2449 = vpop.permute.xlu0 %2448
        %2450 = vrot.lane.b32.xlu0 %v2364, 123
        %v2451 = vpop.permute.xlu0 %2450
        %2452 = vrot.lane.b32.xlu0 %v2366, 123
        %v2453 = vpop.permute.xlu0 %2452
        %2454 = vrot.lane.b32.xlu0 %v2367, 123
        %v2455 = vpop.permute.xlu0 %2454
        %2456 = vrot.lane.b32.xlu0 %v2369, 123
        %v2457 = vpop.permute.xlu0 %2456
        %2458 = vrot.lane.b32.xlu0 %v2370, 123
        %v2459 = vpop.permute.xlu0 %2458
        %2460 = vrot.lane.b32.xlu0 %v2372, 123
        %v2461 = vpop.permute.xlu0 %2460
        %2462 = vrot.lane.b32.xlu0 %v2373, 123
        %v2463 = vpop.permute.xlu0 %2462
        %2464 = vrot.lane.b32.xlu0 %v2375, 123
        %v2465 = vpop.permute.xlu0 %2464
        %2466 = vrot.lane.b32.xlu0 %v2376, 123
        %v2467 = vpop.permute.xlu0 %2466
        %2468 = vrot.lane.b32.xlu0 %v2378, 123
        %v2469 = vpop.permute.xlu0 %2468
        %2470 = vrot.lane.b32.xlu0 %v2379, 123
        %v2471 = vpop.permute.xlu0 %2470
        %2472 = vrot.lane.b32.xlu0 %v2381, 123
        %v2473 = vpop.permute.xlu0 %2472
        %2474 = vrot.lane.b32.xlu0 %v2382, 123
        %v2475 = vpop.permute.xlu0 %2474
        %2476 = vrot.lane.b32.xlu0 %v2384, 123
        %v2477 = vpop.permute.xlu0 %2476
        %2478 = vrot.lane.b32.xlu0 %v2385, 123
        %v2479 = vpop.permute.xlu0 %2478
        %2480 = vrot.lane.b32.xlu0 %v2387, 123
        %v2481 = vpop.permute.xlu0 %2480
        %2482 = vrot.lane.b32.xlu0 %v2388, 123
        %v2483 = vpop.permute.xlu0 %2482
        %2484 = vrot.lane.b32.xlu0 %v2390, 123
        %v2485 = vpop.permute.xlu0 %2484
        %2486 = vrot.lane.b32.xlu0 %v2391, 123
        %v2487 = vpop.permute.xlu0 %2486
        %2488 = vrot.lane.b32.xlu0 %v2393, 123
        %v2489 = vpop.permute.xlu0 %2488
        %2490 = vrot.lane.b32.xlu0 %v2394, 123
        %v2491 = vpop.permute.xlu0 %2490
        %v2524 = vadd.f32 %v2316, %v2429
        %v2525 = vadd.f32 %v2317, %v2431
        %v2526 = vadd.f32 %v2318, %v2433
        %v2527 = vadd.f32 %v2319, %v2435
        %v2528 = vadd.f32 %v2320, %v2437
        %v2529 = vadd.f32 %v2321, %v2439
        %v2530 = vadd.f32 %v2322, %v2441
        %v2531 = vadd.f32 %v2323, %v2443
        %v2532 = vadd.f32 %v2324, %v2445
        %v2533 = vadd.f32 %v2325, %v2447
        %v2534 = vadd.f32 %v2326, %v2449
        %v2535 = vadd.f32 %v2327, %v2451
        %v2536 = vadd.f32 %v2328, %v2453
        %v2537 = vadd.f32 %v2329, %v2455
        %v2538 = vadd.f32 %v2330, %v2457
        %v2539 = vadd.f32 %v2331, %v2459
        %v2540 = vadd.f32 %v2332, %v2461
        %v2541 = vadd.f32 %v2333, %v2463
        %v2542 = vadd.f32 %v2334, %v2465
        %v2543 = vadd.f32 %v2335, %v2467
        %v2544 = vadd.f32 %v2336, %v2469
        %v2545 = vadd.f32 %v2337, %v2471
        %v2546 = vadd.f32 %v2338, %v2473
        %v2547 = vadd.f32 %v2339, %v2475
        %v2548 = vadd.f32 %v2340, %v2477
        %v2549 = vadd.f32 %v2341, %v2479
        %v2550 = vadd.f32 %v2342, %v2481
        %v2551 = vadd.f32 %v2343, %v2483
        %v2552 = vadd.f32 %v2344, %v2485
        %v2553 = vadd.f32 %v2345, %v2487
        %v2554 = vadd.f32 %v2346, %v2489
        %v2555 = vadd.f32 %v2347, %v2491
        %v2572 = vrot.slane %v2348, 1
        %v2573 = vrot.slane %v2349, 1
        %v2574 = vsel %vm1512, %v2572, %v2573
        %v2575 = vrot.slane %v2350, 1
        %v2576 = vsel %vm1512, %v2573, %v2575
        %v2577 = vrot.slane %v2351, 1
        %v2578 = vrot.slane %v2352, 1
        %v2579 = vsel %vm1512, %v2577, %v2578
        %v2580 = vrot.slane %v2353, 1
        %v2581 = vsel %vm1512, %v2578, %v2580
        %v2582 = vrot.slane %v2354, 1
        %v2583 = vrot.slane %v2355, 1
        %v2584 = vsel %vm1512, %v2582, %v2583
        %v2585 = vrot.slane %v2356, 1
        %v2586 = vsel %vm1512, %v2583, %v2585
        %v2587 = vrot.slane %v2357, 1
        %v2588 = vrot.slane %v2358, 1
        %v2589 = vsel %vm1512, %v2587, %v2588
        %v2590 = vrot.slane %v2359, 1
        %v2591 = vsel %vm1512, %v2588, %v2590
        %v2592 = vrot.slane %v2360, 1
        %v2593 = vrot.slane %v2361, 1
        %v2594 = vsel %vm1512, %v2592, %v2593
        %v2595 = vrot.slane %v2362, 1
        %v2596 = vsel %vm1512, %v2593, %v2595
        %v2597 = vrot.slane %v2363, 1
        %v2598 = vrot.slane %v2364, 1
        %v2599 = vsel %vm1512, %v2597, %v2598
        %v2600 = vrot.slane %v2365, 1
        %v2601 = vsel %vm1512, %v2598, %v2600
        %v2602 = vrot.slane %v2366, 1
        %v2603 = vrot.slane %v2367, 1
        %v2604 = vsel %vm1512, %v2602, %v2603
        %v2605 = vrot.slane %v2368, 1
        %v2606 = vsel %vm1512, %v2603, %v2605
        %v2607 = vrot.slane %v2369, 1
        %v2608 = vrot.slane %v2370, 1
        %v2609 = vsel %vm1512, %v2607, %v2608
        %v2610 = vrot.slane %v2371, 1
        %v2611 = vsel %vm1512, %v2608, %v2610
        %v2612 = vrot.slane %v2372, 1
        %v2613 = vrot.slane %v2373, 1
        %v2614 = vsel %vm1512, %v2612, %v2613
        %v2615 = vrot.slane %v2374, 1
        %v2616 = vsel %vm1512, %v2613, %v2615
        %v2617 = vrot.slane %v2375, 1
        %v2618 = vrot.slane %v2376, 1
        %v2619 = vsel %vm1512, %v2617, %v2618
        %v2620 = vrot.slane %v2377, 1
        %v2621 = vsel %vm1512, %v2618, %v2620
        %v2622 = vrot.slane %v2378, 1
        %v2623 = vrot.slane %v2379, 1
        %v2624 = vsel %vm1512, %v2622, %v2623
        %v2625 = vrot.slane %v2380, 1
        %v2626 = vsel %vm1512, %v2623, %v2625
        %v2627 = vrot.slane %v2381, 1
        %v2628 = vrot.slane %v2382, 1
        %v2629 = vsel %vm1512, %v2627, %v2628
        %v2630 = vrot.slane %v2383, 1
        %v2631 = vsel %vm1512, %v2628, %v2630
        %v2632 = vrot.slane %v2384, 1
        %v2633 = vrot.slane %v2385, 1
        %v2634 = vsel %vm1512, %v2632, %v2633
        %v2635 = vrot.slane %v2386, 1
        %v2636 = vsel %vm1512, %v2633, %v2635
        %v2637 = vrot.slane %v2387, 1
        %v2638 = vrot.slane %v2388, 1
        %v2639 = vsel %vm1512, %v2637, %v2638
        %v2640 = vrot.slane %v2389, 1
        %v2641 = vsel %vm1512, %v2638, %v2640
        %v2642 = vrot.slane %v2390, 1
        %v2643 = vrot.slane %v2391, 1
        %v2644 = vsel %vm1512, %v2642, %v2643
        %v2645 = vrot.slane %v2392, 1
        %v2646 = vsel %vm1512, %v2643, %v2645
        %v2647 = vrot.slane %v2393, 1
        %v2648 = vrot.slane %v2394, 1
        %v2649 = vsel %vm1512, %v2647, %v2648
        %v2650 = vrot.slane %v2395, 1
        %v2651 = vsel %vm1512, %v2648, %v2650
        %2652 = vrot.lane.b32.xlu0 %v2574, 122
        %v2653 = vpop.permute.xlu0 %2652
        %2654 = vrot.lane.b32.xlu0 %v2576, 122
        %v2655 = vpop.permute.xlu0 %2654
        %2656 = vrot.lane.b32.xlu0 %v2579, 122
        %v2657 = vpop.permute.xlu0 %2656
        %2658 = vrot.lane.b32.xlu0 %v2581, 122
        %v2659 = vpop.permute.xlu0 %2658
        %2660 = vrot.lane.b32.xlu0 %v2584, 122
        %v2661 = vpop.permute.xlu0 %2660
        %2662 = vrot.lane.b32.xlu0 %v2586, 122
        %v2663 = vpop.permute.xlu0 %2662
        %2664 = vrot.lane.b32.xlu0 %v2589, 122
        %v2665 = vpop.permute.xlu0 %2664
        %2666 = vrot.lane.b32.xlu0 %v2591, 122
        %v2667 = vpop.permute.xlu0 %2666
        %2668 = vrot.lane.b32.xlu0 %v2594, 122
        %v2669 = vpop.permute.xlu0 %2668
        %2670 = vrot.lane.b32.xlu0 %v2596, 122
        %v2671 = vpop.permute.xlu0 %2670
        %2672 = vrot.lane.b32.xlu0 %v2599, 122
        %v2673 = vpop.permute.xlu0 %2672
        %2674 = vrot.lane.b32.xlu0 %v2601, 122
        %v2675 = vpop.permute.xlu0 %2674
        %2676 = vrot.lane.b32.xlu0 %v2604, 122
        %v2677 = vpop.permute.xlu0 %2676
        %2678 = vrot.lane.b32.xlu0 %v2606, 122
        %v2679 = vpop.permute.xlu0 %2678
        %2680 = vrot.lane.b32.xlu0 %v2609, 122
        %v2681 = vpop.permute.xlu0 %2680
        %2682 = vrot.lane.b32.xlu0 %v2611, 122
        %v2683 = vpop.permute.xlu0 %2682
        %2684 = vrot.lane.b32.xlu0 %v2614, 122
        %v2685 = vpop.permute.xlu0 %2684
        %2686 = vrot.lane.b32.xlu0 %v2616, 122
        %v2687 = vpop.permute.xlu0 %2686
        %2688 = vrot.lane.b32.xlu0 %v2619, 122
        %v2689 = vpop.permute.xlu0 %2688
        %2690 = vrot.lane.b32.xlu0 %v2621, 122
        %v2691 = vpop.permute.xlu0 %2690
        %2692 = vrot.lane.b32.xlu0 %v2624, 122
        %v2693 = vpop.permute.xlu0 %2692
        %2694 = vrot.lane.b32.xlu0 %v2626, 122
        %v2695 = vpop.permute.xlu0 %2694
        %2696 = vrot.lane.b32.xlu0 %v2629, 122
        %v2697 = vpop.permute.xlu0 %2696
        %2698 = vrot.lane.b32.xlu0 %v2631, 122
        %v2699 = vpop.permute.xlu0 %2698
        %2700 = vrot.lane.b32.xlu0 %v2634, 122
        %v2701 = vpop.permute.xlu0 %2700
        %2702 = vrot.lane.b32.xlu0 %v2636, 122
        %v2703 = vpop.permute.xlu0 %2702
        %2704 = vrot.lane.b32.xlu0 %v2639, 122
        %v2705 = vpop.permute.xlu0 %2704
        %2706 = vrot.lane.b32.xlu0 %v2641, 122
        %v2707 = vpop.permute.xlu0 %2706
        %2708 = vrot.lane.b32.xlu0 %v2644, 122
        %v2709 = vpop.permute.xlu0 %2708
        %2710 = vrot.lane.b32.xlu0 %v2646, 122
        %v2711 = vpop.permute.xlu0 %2710
        %2712 = vrot.lane.b32.xlu0 %v2649, 122
        %v2713 = vpop.permute.xlu0 %2712
        %2714 = vrot.lane.b32.xlu0 %v2651, 122
        %v2715 = vpop.permute.xlu0 %2714
        %v2748 = vadd.f32 %v2524, %v2653
        %v2749 = vadd.f32 %v2525, %v2655
        %v2750 = vadd.f32 %v2526, %v2657
        %v2751 = vadd.f32 %v2527, %v2659
        %v2752 = vadd.f32 %v2528, %v2661
        %v2753 = vadd.f32 %v2529, %v2663
        %v2754 = vadd.f32 %v2530, %v2665
        %v2755 = vadd.f32 %v2531, %v2667
        %v2756 = vadd.f32 %v2532, %v2669
        %v2757 = vadd.f32 %v2533, %v2671
        %v2758 = vadd.f32 %v2534, %v2673
        %v2759 = vadd.f32 %v2535, %v2675
        %v2760 = vadd.f32 %v2536, %v2677
        %v2761 = vadd.f32 %v2537, %v2679
        %v2762 = vadd.f32 %v2538, %v2681
        %v2763 = vadd.f32 %v2539, %v2683
        %v2764 = vadd.f32 %v2540, %v2685
        %v2765 = vadd.f32 %v2541, %v2687
        %v2766 = vadd.f32 %v2542, %v2689
        %v2767 = vadd.f32 %v2543, %v2691
        %v2768 = vadd.f32 %v2544, %v2693
        %v2769 = vadd.f32 %v2545, %v2695
        %v2770 = vadd.f32 %v2546, %v2697
        %v2771 = vadd.f32 %v2547, %v2699
        %v2772 = vadd.f32 %v2548, %v2701
        %v2773 = vadd.f32 %v2549, %v2703
        %v2774 = vadd.f32 %v2550, %v2705
        %v2775 = vadd.f32 %v2551, %v2707
        %v2776 = vadd.f32 %v2552, %v2709
        %v2777 = vadd.f32 %v2553, %v2711
        %v2778 = vadd.f32 %v2554, %v2713
        %v2779 = vadd.f32 %v2555, %v2715
        %v2780 = vrot.slane %v2348, 2
        %v2781 = vrot.slane %v2349, 2
        %v2782 = vsel %vm1721, %v2780, %v2781
        %v2783 = vrot.slane %v2350, 2
        %v2784 = vsel %vm1721, %v2781, %v2783
        %v2785 = vrot.slane %v2351, 2
        %v2786 = vrot.slane %v2352, 2
        %v2787 = vsel %vm1721, %v2785, %v2786
        %v2788 = vrot.slane %v2353, 2
        %v2789 = vsel %vm1721, %v2786, %v2788
        %v2790 = vrot.slane %v2354, 2
        %v2791 = vrot.slane %v2355, 2
        %v2792 = vsel %vm1721, %v2790, %v2791
        %v2793 = vrot.slane %v2356, 2
        %v2794 = vsel %vm1721, %v2791, %v2793
        %v2795 = vrot.slane %v2357, 2
        %v2796 = vrot.slane %v2358, 2
        %v2797 = vsel %vm1721, %v2795, %v2796
        %v2798 = vrot.slane %v2359, 2
        %v2799 = vsel %vm1721, %v2796, %v2798
        %v2800 = vrot.slane %v2360, 2
        %v2801 = vrot.slane %v2361, 2
        %v2802 = vsel %vm1721, %v2800, %v2801
        %v2803 = vrot.slane %v2362, 2
        %v2804 = vsel %vm1721, %v2801, %v2803
        %v2805 = vrot.slane %v2363, 2
        %v2806 = vrot.slane %v2364, 2
        %v2807 = vsel %vm1721, %v2805, %v2806
        %v2808 = vrot.slane %v2365, 2
        %v2809 = vsel %vm1721, %v2806, %v2808
        %v2810 = vrot.slane %v2366, 2
        %v2811 = vrot.slane %v2367, 2
        %v2812 = vsel %vm1721, %v2810, %v2811
        %v2813 = vrot.slane %v2368, 2
        %v2814 = vsel %vm1721, %v2811, %v2813
        %v2815 = vrot.slane %v2369, 2
        %v2816 = vrot.slane %v2370, 2
        %v2817 = vsel %vm1721, %v2815, %v2816
        %v2818 = vrot.slane %v2371, 2
        %v2819 = vsel %vm1721, %v2816, %v2818
        %v2820 = vrot.slane %v2372, 2
        %v2821 = vrot.slane %v2373, 2
        %v2822 = vsel %vm1721, %v2820, %v2821
        %v2823 = vrot.slane %v2374, 2
        %v2824 = vsel %vm1721, %v2821, %v2823
        %v2825 = vrot.slane %v2375, 2
        %v2826 = vrot.slane %v2376, 2
        %v2827 = vsel %vm1721, %v2825, %v2826
        %v2828 = vrot.slane %v2377, 2
        %v2829 = vsel %vm1721, %v2826, %v2828
        %v2830 = vrot.slane %v2378, 2
        %v2831 = vrot.slane %v2379, 2
        %v2832 = vsel %vm1721, %v2830, %v2831
        %v2833 = vrot.slane %v2380, 2
        %v2834 = vsel %vm1721, %v2831, %v2833
        %v2835 = vrot.slane %v2381, 2
        %v2836 = vrot.slane %v2382, 2
        %v2837 = vsel %vm1721, %v2835, %v2836
        %v2838 = vrot.slane %v2383, 2
        %v2839 = vsel %vm1721, %v2836, %v2838
        %v2840 = vrot.slane %v2384, 2
        %v2841 = vrot.slane %v2385, 2
        %v2842 = vsel %vm1721, %v2840, %v2841
        %v2843 = vrot.slane %v2386, 2
        %v2844 = vsel %vm1721, %v2841, %v2843
        %v2845 = vrot.slane %v2387, 2
        %v2846 = vrot.slane %v2388, 2
        %v2847 = vsel %vm1721, %v2845, %v2846
        %v2848 = vrot.slane %v2389, 2
        %v2849 = vsel %vm1721, %v2846, %v2848
        %v2850 = vrot.slane %v2390, 2
        %v2851 = vrot.slane %v2391, 2
        %v2852 = vsel %vm1721, %v2850, %v2851
        %v2853 = vrot.slane %v2392, 2
        %v2854 = vsel %vm1721, %v2851, %v2853
        %v2855 = vrot.slane %v2393, 2
        %v2856 = vrot.slane %v2394, 2
        %v2857 = vsel %vm1721, %v2855, %v2856
        %v2858 = vrot.slane %v2395, 2
        %v2859 = vsel %vm1721, %v2856, %v2858
        %2860 = vrot.lane.b32.xlu0 %v2782, 121
        %v2861 = vpop.permute.xlu0 %2860
        %2862 = vrot.lane.b32.xlu0 %v2784, 121
        %v2863 = vpop.permute.xlu0 %2862
        %2864 = vrot.lane.b32.xlu0 %v2787, 121
        %v2865 = vpop.permute.xlu0 %2864
        %2866 = vrot.lane.b32.xlu0 %v2789, 121
        %v2867 = vpop.permute.xlu0 %2866
        %2868 = vrot.lane.b32.xlu0 %v2792, 121
        %v2869 = vpop.permute.xlu0 %2868
        %2870 = vrot.lane.b32.xlu0 %v2794, 121
        %v2871 = vpop.permute.xlu0 %2870
        %2872 = vrot.lane.b32.xlu0 %v2797, 121
        %v2873 = vpop.permute.xlu0 %2872
        %2874 = vrot.lane.b32.xlu0 %v2799, 121
        %v2875 = vpop.permute.xlu0 %2874
        %2876 = vrot.lane.b32.xlu0 %v2802, 121
        %v2877 = vpop.permute.xlu0 %2876
        %2878 = vrot.lane.b32.xlu0 %v2804, 121
        %v2879 = vpop.permute.xlu0 %2878
        %2880 = vrot.lane.b32.xlu0 %v2807, 121
        %v2881 = vpop.permute.xlu0 %2880
        %2882 = vrot.lane.b32.xlu0 %v2809, 121
        %v2883 = vpop.permute.xlu0 %2882
        %2884 = vrot.lane.b32.xlu0 %v2812, 121
        %v2885 = vpop.permute.xlu0 %2884
        %2886 = vrot.lane.b32.xlu0 %v2814, 121
        %v2887 = vpop.permute.xlu0 %2886
        %2888 = vrot.lane.b32.xlu0 %v2817, 121
        %v2889 = vpop.permute.xlu0 %2888
        %2890 = vrot.lane.b32.xlu0 %v2819, 121
        %v2891 = vpop.permute.xlu0 %2890
        %2892 = vrot.lane.b32.xlu0 %v2822, 121
        %v2893 = vpop.permute.xlu0 %2892
        %2894 = vrot.lane.b32.xlu0 %v2824, 121
        %v2895 = vpop.permute.xlu0 %2894
        %2896 = vrot.lane.b32.xlu0 %v2827, 121
        %v2897 = vpop.permute.xlu0 %2896
        %2898 = vrot.lane.b32.xlu0 %v2829, 121
        %v2899 = vpop.permute.xlu0 %2898
        %2900 = vrot.lane.b32.xlu0 %v2832, 121
        %v2901 = vpop.permute.xlu0 %2900
        %2902 = vrot.lane.b32.xlu0 %v2834, 121
        %v2903 = vpop.permute.xlu0 %2902
        %2904 = vrot.lane.b32.xlu0 %v2837, 121
        %v2905 = vpop.permute.xlu0 %2904
        %2906 = vrot.lane.b32.xlu0 %v2839, 121
        %v2907 = vpop.permute.xlu0 %2906
        %2908 = vrot.lane.b32.xlu0 %v2842, 121
        %v2909 = vpop.permute.xlu0 %2908
        %2910 = vrot.lane.b32.xlu0 %v2844, 121
        %v2911 = vpop.permute.xlu0 %2910
        %2912 = vrot.lane.b32.xlu0 %v2847, 121
        %v2913 = vpop.permute.xlu0 %2912
        %2914 = vrot.lane.b32.xlu0 %v2849, 121
        %v2915 = vpop.permute.xlu0 %2914
        %2916 = vrot.lane.b32.xlu0 %v2852, 121
        %v2917 = vpop.permute.xlu0 %2916
        %2918 = vrot.lane.b32.xlu0 %v2854, 121
        %v2919 = vpop.permute.xlu0 %2918
        %2920 = vrot.lane.b32.xlu0 %v2857, 121
        %v2921 = vpop.permute.xlu0 %2920
        %2922 = vrot.lane.b32.xlu0 %v2859, 121
        %v2923 = vpop.permute.xlu0 %2922
        %v2956 = vadd.f32 %v2748, %v2861
        %v2957 = vadd.f32 %v2749, %v2863
        %v2958 = vadd.f32 %v2750, %v2865
        %v2959 = vadd.f32 %v2751, %v2867
        %v2960 = vadd.f32 %v2752, %v2869
        %v2961 = vadd.f32 %v2753, %v2871
        %v2962 = vadd.f32 %v2754, %v2873
        %v2963 = vadd.f32 %v2755, %v2875
        %v2964 = vadd.f32 %v2756, %v2877
        %v2965 = vadd.f32 %v2757, %v2879
        %v2966 = vadd.f32 %v2758, %v2881
        %v2967 = vadd.f32 %v2759, %v2883
        %v2968 = vadd.f32 %v2760, %v2885
        %v2969 = vadd.f32 %v2761, %v2887
        %v2970 = vadd.f32 %v2762, %v2889
        %v2971 = vadd.f32 %v2763, %v2891
        %v2972 = vadd.f32 %v2764, %v2893
        %v2973 = vadd.f32 %v2765, %v2895
        %v2974 = vadd.f32 %v2766, %v2897
        %v2975 = vadd.f32 %v2767, %v2899
        %v2976 = vadd.f32 %v2768, %v2901
        %v2977 = vadd.f32 %v2769, %v2903
        %v2978 = vadd.f32 %v2770, %v2905
        %v2979 = vadd.f32 %v2771, %v2907
        %v2980 = vadd.f32 %v2772, %v2909
        %v2981 = vadd.f32 %v2773, %v2911
        %v2982 = vadd.f32 %v2774, %v2913
        %v2983 = vadd.f32 %v2775, %v2915
        %v2984 = vadd.f32 %v2776, %v2917
        %v2985 = vadd.f32 %v2777, %v2919
        %v2986 = vadd.f32 %v2778, %v2921
        %v2987 = vadd.f32 %v2779, %v2923
        %v2988 = vrot.slane %v2348, 3
        %v2989 = vrot.slane %v2349, 3
        %v2990 = vsel %vm1930, %v2988, %v2989
        %v2991 = vrot.slane %v2350, 3
        %v2992 = vsel %vm1930, %v2989, %v2991
        %v2993 = vrot.slane %v2351, 3
        %v2994 = vrot.slane %v2352, 3
        %v2995 = vsel %vm1930, %v2993, %v2994
        %v2996 = vrot.slane %v2353, 3
        %v2997 = vsel %vm1930, %v2994, %v2996
        %v2998 = vrot.slane %v2354, 3
        %v2999 = vrot.slane %v2355, 3
        %v3000 = vsel %vm1930, %v2998, %v2999
        %v3001 = vrot.slane %v2356, 3
        %v3002 = vsel %vm1930, %v2999, %v3001
        %v3003 = vrot.slane %v2357, 3
        %v3004 = vrot.slane %v2358, 3
        %v3005 = vsel %vm1930, %v3003, %v3004
        %v3006 = vrot.slane %v2359, 3
        %v3007 = vsel %vm1930, %v3004, %v3006
        %v3008 = vrot.slane %v2360, 3
        %v3009 = vrot.slane %v2361, 3
        %v3010 = vsel %vm1930, %v3008, %v3009
        %v3011 = vrot.slane %v2362, 3
        %v3012 = vsel %vm1930, %v3009, %v3011
        %v3013 = vrot.slane %v2363, 3
        %v3014 = vrot.slane %v2364, 3
        %v3015 = vsel %vm1930, %v3013, %v3014
        %v3016 = vrot.slane %v2365, 3
        %v3017 = vsel %vm1930, %v3014, %v3016
        %v3018 = vrot.slane %v2366, 3
        %v3019 = vrot.slane %v2367, 3
        %v3020 = vsel %vm1930, %v3018, %v3019
        %v3021 = vrot.slane %v2368, 3
        %v3022 = vsel %vm1930, %v3019, %v3021
        %v3023 = vrot.slane %v2369, 3
        %v3024 = vrot.slane %v2370, 3
        %v3025 = vsel %vm1930, %v3023, %v3024
        %v3026 = vrot.slane %v2371, 3
        %v3027 = vsel %vm1930, %v3024, %v3026
        %v3028 = vrot.slane %v2372, 3
        %v3029 = vrot.slane %v2373, 3
        %v3030 = vsel %vm1930, %v3028, %v3029
        %v3031 = vrot.slane %v2374, 3
        %v3032 = vsel %vm1930, %v3029, %v3031
        %v3033 = vrot.slane %v2375, 3
        %v3034 = vrot.slane %v2376, 3
        %v3035 = vsel %vm1930, %v3033, %v3034
        %v3036 = vrot.slane %v2377, 3
        %v3037 = vsel %vm1930, %v3034, %v3036
        %v3038 = vrot.slane %v2378, 3
        %v3039 = vrot.slane %v2379, 3
        %v3040 = vsel %vm1930, %v3038, %v3039
        %v3041 = vrot.slane %v2380, 3
        %v3042 = vsel %vm1930, %v3039, %v3041
        %v3043 = vrot.slane %v2381, 3
        %v3044 = vrot.slane %v2382, 3
        %v3045 = vsel %vm1930, %v3043, %v3044
        %v3046 = vrot.slane %v2383, 3
        %v3047 = vsel %vm1930, %v3044, %v3046
        %v3048 = vrot.slane %v2384, 3
        %v3049 = vrot.slane %v2385, 3
        %v3050 = vsel %vm1930, %v3048, %v3049
        %v3051 = vrot.slane %v2386, 3
        %v3052 = vsel %vm1930, %v3049, %v3051
        %v3053 = vrot.slane %v2387, 3
        %v3054 = vrot.slane %v2388, 3
        %v3055 = vsel %vm1930, %v3053, %v3054
        %v3056 = vrot.slane %v2389, 3
        %v3057 = vsel %vm1930, %v3054, %v3056
        %v3058 = vrot.slane %v2390, 3
        %v3059 = vrot.slane %v2391, 3
        %v3060 = vsel %vm1930, %v3058, %v3059
        %v3061 = vrot.slane %v2392, 3
        %v3062 = vsel %vm1930, %v3059, %v3061
        %v3063 = vrot.slane %v2393, 3
        %v3064 = vrot.slane %v2394, 3
        %v3065 = vsel %vm1930, %v3063, %v3064
        %v3066 = vrot.slane %v2395, 3
        %v3067 = vsel %vm1930, %v3064, %v3066
        %3068 = vrot.lane.b32.xlu0 %v2990, 120
        %v3069 = vpop.permute.xlu0 %3068
        %3070 = vrot.lane.b32.xlu0 %v2992, 120
        %v3071 = vpop.permute.xlu0 %3070
        %3072 = vrot.lane.b32.xlu0 %v2995, 120
        %v3073 = vpop.permute.xlu0 %3072
        %3074 = vrot.lane.b32.xlu0 %v2997, 120
        %v3075 = vpop.permute.xlu0 %3074
        %3076 = vrot.lane.b32.xlu0 %v3000, 120
        %v3077 = vpop.permute.xlu0 %3076
        %3078 = vrot.lane.b32.xlu0 %v3002, 120
        %v3079 = vpop.permute.xlu0 %3078
        %3080 = vrot.lane.b32.xlu0 %v3005, 120
        %v3081 = vpop.permute.xlu0 %3080
        %3082 = vrot.lane.b32.xlu0 %v3007, 120
        %v3083 = vpop.permute.xlu0 %3082
        %3084 = vrot.lane.b32.xlu0 %v3010, 120
        %v3085 = vpop.permute.xlu0 %3084
        %3086 = vrot.lane.b32.xlu0 %v3012, 120
        %v3087 = vpop.permute.xlu0 %3086
        %3088 = vrot.lane.b32.xlu0 %v3015, 120
        %v3089 = vpop.permute.xlu0 %3088
        %3090 = vrot.lane.b32.xlu0 %v3017, 120
        %v3091 = vpop.permute.xlu0 %3090
        %3092 = vrot.lane.b32.xlu0 %v3020, 120
        %v3093 = vpop.permute.xlu0 %3092
        %3094 = vrot.lane.b32.xlu0 %v3022, 120
        %v3095 = vpop.permute.xlu0 %3094
        %3096 = vrot.lane.b32.xlu0 %v3025, 120
        %v3097 = vpop.permute.xlu0 %3096
        %3098 = vrot.lane.b32.xlu0 %v3027, 120
        %v3099 = vpop.permute.xlu0 %3098
        %3100 = vrot.lane.b32.xlu0 %v3030, 120
        %v3101 = vpop.permute.xlu0 %3100
        %3102 = vrot.lane.b32.xlu0 %v3032, 120
        %v3103 = vpop.permute.xlu0 %3102
        %3104 = vrot.lane.b32.xlu0 %v3035, 120
        %v3105 = vpop.permute.xlu0 %3104
        %3106 = vrot.lane.b32.xlu0 %v3037, 120
        %v3107 = vpop.permute.xlu0 %3106
        %3108 = vrot.lane.b32.xlu0 %v3040, 120
        %v3109 = vpop.permute.xlu0 %3108
        %3110 = vrot.lane.b32.xlu0 %v3042, 120
        %v3111 = vpop.permute.xlu0 %3110
        %3112 = vrot.lane.b32.xlu0 %v3045, 120
        %v3113 = vpop.permute.xlu0 %3112
        %3114 = vrot.lane.b32.xlu0 %v3047, 120
        %v3115 = vpop.permute.xlu0 %3114
        %3116 = vrot.lane.b32.xlu0 %v3050, 120
        %v3117 = vpop.permute.xlu0 %3116
        %3118 = vrot.lane.b32.xlu0 %v3052, 120
        %v3119 = vpop.permute.xlu0 %3118
        %3120 = vrot.lane.b32.xlu0 %v3055, 120
        %v3121 = vpop.permute.xlu0 %3120
        %3122 = vrot.lane.b32.xlu0 %v3057, 120
        %v3123 = vpop.permute.xlu0 %3122
        %3124 = vrot.lane.b32.xlu0 %v3060, 120
        %v3125 = vpop.permute.xlu0 %3124
        %3126 = vrot.lane.b32.xlu0 %v3062, 120
        %v3127 = vpop.permute.xlu0 %3126
        %3128 = vrot.lane.b32.xlu0 %v3065, 120
        %v3129 = vpop.permute.xlu0 %3128
        %3130 = vrot.lane.b32.xlu0 %v3067, 120
        %v3131 = vpop.permute.xlu0 %3130
        %v3164 = vadd.f32 %v2956, %v3069
        %v3165 = vadd.f32 %v2957, %v3071
        %v3166 = vadd.f32 %v2958, %v3073
        %v3167 = vadd.f32 %v2959, %v3075
        %v3168 = vadd.f32 %v2960, %v3077
        %v3169 = vadd.f32 %v2961, %v3079
        %v3170 = vadd.f32 %v2962, %v3081
        %v3171 = vadd.f32 %v2963, %v3083
        %v3172 = vadd.f32 %v2964, %v3085
        %v3173 = vadd.f32 %v2965, %v3087
        %v3174 = vadd.f32 %v2966, %v3089
        %v3175 = vadd.f32 %v2967, %v3091
        %v3176 = vadd.f32 %v2968, %v3093
        %v3177 = vadd.f32 %v2969, %v3095
        %v3178 = vadd.f32 %v2970, %v3097
        %v3179 = vadd.f32 %v2971, %v3099
        %v3180 = vadd.f32 %v2972, %v3101
        %v3181 = vadd.f32 %v2973, %v3103
        %v3182 = vadd.f32 %v2974, %v3105
        %v3183 = vadd.f32 %v2975, %v3107
        %v3184 = vadd.f32 %v2976, %v3109
        %v3185 = vadd.f32 %v2977, %v3111
        %v3186 = vadd.f32 %v2978, %v3113
        %v3187 = vadd.f32 %v2979, %v3115
        %v3188 = vadd.f32 %v2980, %v3117
        %v3189 = vadd.f32 %v2981, %v3119
        %v3190 = vadd.f32 %v2982, %v3121
        %v3191 = vadd.f32 %v2983, %v3123
        %v3192 = vadd.f32 %v2984, %v3125
        %v3193 = vadd.f32 %v2985, %v3127
        %v3194 = vadd.f32 %v2986, %v3129
        %v3195 = vadd.f32 %v2987, %v3131
        %v3196 = vrot.slane %v2348, 4
        %v3197 = vrot.slane %v2349, 4
        %v3198 = vsel %vm2139, %v3196, %v3197
        %v3199 = vrot.slane %v2350, 4
        %v3200 = vsel %vm2139, %v3197, %v3199
        %v3201 = vrot.slane %v2351, 4
        %v3202 = vrot.slane %v2352, 4
        %v3203 = vsel %vm2139, %v3201, %v3202
        %v3204 = vrot.slane %v2353, 4
        %v3205 = vsel %vm2139, %v3202, %v3204
        %v3206 = vrot.slane %v2354, 4
        %v3207 = vrot.slane %v2355, 4
        %v3208 = vsel %vm2139, %v3206, %v3207
        %v3209 = vrot.slane %v2356, 4
        %v3210 = vsel %vm2139, %v3207, %v3209
        %v3211 = vrot.slane %v2357, 4
        %v3212 = vrot.slane %v2358, 4
        %v3213 = vsel %vm2139, %v3211, %v3212
        %v3214 = vrot.slane %v2359, 4
        %v3215 = vsel %vm2139, %v3212, %v3214
        %v3216 = vrot.slane %v2360, 4
        %v3217 = vrot.slane %v2361, 4
        %v3218 = vsel %vm2139, %v3216, %v3217
        %v3219 = vrot.slane %v2362, 4
        %v3220 = vsel %vm2139, %v3217, %v3219
        %v3221 = vrot.slane %v2363, 4
        %v3222 = vrot.slane %v2364, 4
        %v3223 = vsel %vm2139, %v3221, %v3222
        %v3224 = vrot.slane %v2365, 4
        %v3225 = vsel %vm2139, %v3222, %v3224
        %v3226 = vrot.slane %v2366, 4
        %v3227 = vrot.slane %v2367, 4
        %v3228 = vsel %vm2139, %v3226, %v3227
        %v3229 = vrot.slane %v2368, 4
        %v3230 = vsel %vm2139, %v3227, %v3229
        %v3231 = vrot.slane %v2369, 4
        %v3232 = vrot.slane %v2370, 4
        %v3233 = vsel %vm2139, %v3231, %v3232
        %v3234 = vrot.slane %v2371, 4
        %v3235 = vsel %vm2139, %v3232, %v3234
        %v3236 = vrot.slane %v2372, 4
        %v3237 = vrot.slane %v2373, 4
        %v3238 = vsel %vm2139, %v3236, %v3237
        %v3239 = vrot.slane %v2374, 4
        %v3240 = vsel %vm2139, %v3237, %v3239
        %v3241 = vrot.slane %v2375, 4
        %v3242 = vrot.slane %v2376, 4
        %v3243 = vsel %vm2139, %v3241, %v3242
        %v3244 = vrot.slane %v2377, 4
        %v3245 = vsel %vm2139, %v3242, %v3244
        %v3246 = vrot.slane %v2378, 4
        %v3247 = vrot.slane %v2379, 4
        %v3248 = vsel %vm2139, %v3246, %v3247
        %v3249 = vrot.slane %v2380, 4
        %v3250 = vsel %vm2139, %v3247, %v3249
        %v3251 = vrot.slane %v2381, 4
        %v3252 = vrot.slane %v2382, 4
        %v3253 = vsel %vm2139, %v3251, %v3252
        %v3254 = vrot.slane %v2383, 4
        %v3255 = vsel %vm2139, %v3252, %v3254
        %v3256 = vrot.slane %v2384, 4
        %v3257 = vrot.slane %v2385, 4
        %v3258 = vsel %vm2139, %v3256, %v3257
        %v3259 = vrot.slane %v2386, 4
        %v3260 = vsel %vm2139, %v3257, %v3259
        %v3261 = vrot.slane %v2387, 4
        %v3262 = vrot.slane %v2388, 4
        %v3263 = vsel %vm2139, %v3261, %v3262
        %v3264 = vrot.slane %v2389, 4
        %v3265 = vsel %vm2139, %v3262, %v3264
        %v3266 = vrot.slane %v2390, 4
        %v3267 = vrot.slane %v2391, 4
        %v3268 = vsel %vm2139, %v3266, %v3267
        %v3269 = vrot.slane %v2392, 4
        %v3270 = vsel %vm2139, %v3267, %v3269
        %v3271 = vrot.slane %v2393, 4
        %v3272 = vrot.slane %v2394, 4
        %v3273 = vsel %vm2139, %v3271, %v3272
        %v3274 = vrot.slane %v2395, 4
        %v3275 = vsel %vm2139, %v3272, %v3274
        %3276 = vrot.lane.b32.xlu0 %v3198, 119
        %v3277 = vpop.permute.xlu0 %3276
        %3278 = vrot.lane.b32.xlu0 %v3200, 119
        %v3279 = vpop.permute.xlu0 %3278
        %3280 = vrot.lane.b32.xlu0 %v3203, 119
        %v3281 = vpop.permute.xlu0 %3280
        %3282 = vrot.lane.b32.xlu0 %v3205, 119
        %v3283 = vpop.permute.xlu0 %3282
        %3284 = vrot.lane.b32.xlu0 %v3208, 119
        %v3285 = vpop.permute.xlu0 %3284
        %3286 = vrot.lane.b32.xlu0 %v3210, 119
        %v3287 = vpop.permute.xlu0 %3286
        %3288 = vrot.lane.b32.xlu0 %v3213, 119
        %v3289 = vpop.permute.xlu0 %3288
        %3290 = vrot.lane.b32.xlu0 %v3215, 119
        %v3291 = vpop.permute.xlu0 %3290
        %3292 = vrot.lane.b32.xlu0 %v3218, 119
        %v3293 = vpop.permute.xlu0 %3292
        %3294 = vrot.lane.b32.xlu0 %v3220, 119
        %v3295 = vpop.permute.xlu0 %3294
        %3296 = vrot.lane.b32.xlu0 %v3223, 119
        %v3297 = vpop.permute.xlu0 %3296
        %3298 = vrot.lane.b32.xlu0 %v3225, 119
        %v3299 = vpop.permute.xlu0 %3298
        %3300 = vrot.lane.b32.xlu0 %v3228, 119
        %v3301 = vpop.permute.xlu0 %3300
        %3302 = vrot.lane.b32.xlu0 %v3230, 119
        %v3303 = vpop.permute.xlu0 %3302
        %3304 = vrot.lane.b32.xlu0 %v3233, 119
        %v3305 = vpop.permute.xlu0 %3304
        %3306 = vrot.lane.b32.xlu0 %v3235, 119
        %v3307 = vpop.permute.xlu0 %3306
        %3308 = vrot.lane.b32.xlu0 %v3238, 119
        %v3309 = vpop.permute.xlu0 %3308
        %3310 = vrot.lane.b32.xlu0 %v3240, 119
        %v3311 = vpop.permute.xlu0 %3310
        %3312 = vrot.lane.b32.xlu0 %v3243, 119
        %v3313 = vpop.permute.xlu0 %3312
        %3314 = vrot.lane.b32.xlu0 %v3245, 119
        %v3315 = vpop.permute.xlu0 %3314
        %3316 = vrot.lane.b32.xlu0 %v3248, 119
        %v3317 = vpop.permute.xlu0 %3316
        %3318 = vrot.lane.b32.xlu0 %v3250, 119
        %v3319 = vpop.permute.xlu0 %3318
        %3320 = vrot.lane.b32.xlu0 %v3253, 119
        %v3321 = vpop.permute.xlu0 %3320
        %3322 = vrot.lane.b32.xlu0 %v3255, 119
        %v3323 = vpop.permute.xlu0 %3322
        %3324 = vrot.lane.b32.xlu0 %v3258, 119
        %v3325 = vpop.permute.xlu0 %3324
        %3326 = vrot.lane.b32.xlu0 %v3260, 119
        %v3327 = vpop.permute.xlu0 %3326
        %3328 = vrot.lane.b32.xlu0 %v3263, 119
        %v3329 = vpop.permute.xlu0 %3328
        %3330 = vrot.lane.b32.xlu0 %v3265, 119
        %v3331 = vpop.permute.xlu0 %3330
        %3332 = vrot.lane.b32.xlu0 %v3268, 119
        %v3333 = vpop.permute.xlu0 %3332
        %3334 = vrot.lane.b32.xlu0 %v3270, 119
        %v3335 = vpop.permute.xlu0 %3334
        %3336 = vrot.lane.b32.xlu0 %v3273, 119
        %v3337 = vpop.permute.xlu0 %3336
        %3338 = vrot.lane.b32.xlu0 %v3275, 119
        %v3339 = vpop.permute.xlu0 %3338
        %v3372 = vadd.f32 %v3164, %v3277
        %v3373 = vadd.f32 %v3165, %v3279
        %v3374 = vadd.f32 %v3166, %v3281
        %v3375 = vadd.f32 %v3167, %v3283
        %v3376 = vadd.f32 %v3168, %v3285
        %v3377 = vadd.f32 %v3169, %v3287
        %v3378 = vadd.f32 %v3170, %v3289
        %v3379 = vadd.f32 %v3171, %v3291
        %v3380 = vadd.f32 %v3172, %v3293
        %v3381 = vadd.f32 %v3173, %v3295
        %v3382 = vadd.f32 %v3174, %v3297
        %v3383 = vadd.f32 %v3175, %v3299
        %v3384 = vadd.f32 %v3176, %v3301
        %v3385 = vadd.f32 %v3177, %v3303
        %v3386 = vadd.f32 %v3178, %v3305
        %v3387 = vadd.f32 %v3179, %v3307
        %v3388 = vadd.f32 %v3180, %v3309
        %v3389 = vadd.f32 %v3181, %v3311
        %v3390 = vadd.f32 %v3182, %v3313
        %v3391 = vadd.f32 %v3183, %v3315
        %v3392 = vadd.f32 %v3184, %v3317
        %v3393 = vadd.f32 %v3185, %v3319
        %v3394 = vadd.f32 %v3186, %v3321
        %v3395 = vadd.f32 %v3187, %v3323
        %v3396 = vadd.f32 %v3188, %v3325
        %v3397 = vadd.f32 %v3189, %v3327
        %v3398 = vadd.f32 %v3190, %v3329
        %v3399 = vadd.f32 %v3191, %v3331
        %v3400 = vadd.f32 %v3192, %v3333
        %v3401 = vadd.f32 %v3193, %v3335
        %v3402 = vadd.f32 %v3194, %v3337
        %v3403 = vadd.f32 %v3195, %v3339
        %v3404 = vld [vmem:[%s1230] sm:$0xff]
        %v3405 = vld [vmem:[%s1230 + $0x8] sm:$0xff]
        %v3406 = vld [vmem:[%s1230 + $0x10] sm:$0xf]
        %v3407 = vld [vmem:[%s1230 + $0x18] sm:$0xff]
        %v3408 = vld [vmem:[%s1230 + $0x20] sm:$0xff]
        %v3409 = vld [vmem:[%s1230 + $0x28] sm:$0xf]
        %v3410 = vld [vmem:[%s1230 + $0x30] sm:$0xff]
        %v3411 = vld [vmem:[%s1230 + $0x38] sm:$0xff]
        %v3412 = vld [vmem:[%s1230 + $0x40] sm:$0xf]
        %v3413 = vld [vmem:[%s1230 + $0x48] sm:$0xff]
        %v3414 = vld [vmem:[%s1230 + $0x50] sm:$0xff]
        %v3415 = vld [vmem:[%s1230 + $0x58] sm:$0xf]
        %v3416 = vld [vmem:[%s1230 + $0x60] sm:$0xff]
        %v3417 = vld [vmem:[%s1230 + $0x68] sm:$0xff]
        %v3418 = vld [vmem:[%s1230 + $0x70] sm:$0xf]
        %v3419 = vld [vmem:[%s1230 + $0x78] sm:$0xff]
        %v3420 = vld [vmem:[%s1230 + $0x80] sm:$0xff]
        %v3421 = vld [vmem:[%s1230 + $0x88] sm:$0xf]
        %v3422 = vld [vmem:[%s1230 + $0x90] sm:$0xff]
        %v3423 = vld [vmem:[%s1230 + $0x98] sm:$0xff]
        %v3424 = vld [vmem:[%s1230 + $0xa0] sm:$0xf]
        %v3425 = vld [vmem:[%s1230 + $0xa8] sm:$0xff]
        %v3426 = vld [vmem:[%s1230 + $0xb0] sm:$0xff]
        %v3427 = vld [vmem:[%s1230 + $0xb8] sm:$0xf]
        %v3428 = vld [vmem:[%s1230 + $0xc0] sm:$0xff]
        %v3429 = vld [vmem:[%s1230 + $0xc8] sm:$0xff]
        %v3430 = vld [vmem:[%s1230 + $0xd0] sm:$0xf]
        %v3431 = vld [vmem:[%s1230 + $0xd8] sm:$0xff]
        %v3432 = vld [vmem:[%s1230 + $0xe0] sm:$0xff]
        %v3433 = vld [vmem:[%s1230 + $0xe8] sm:$0xf]
        %v3434 = vld [vmem:[%s1230 + $0xf0] sm:$0xff]
        %v3435 = vld [vmem:[%s1230 + $0xf8] sm:$0xff]
        %v3436 = vld [vmem:[%s1230 + $0x100] sm:$0xf]
        %v3437 = vld [vmem:[%s1230 + $0x108] sm:$0xff]
        %v3438 = vld [vmem:[%s1230 + $0x110] sm:$0xff]
        %v3439 = vld [vmem:[%s1230 + $0x118] sm:$0xf]
        %v3440 = vld [vmem:[%s1230 + $0x120] sm:$0xff]
        %v3441 = vld [vmem:[%s1230 + $0x128] sm:$0xff]
        %v3442 = vld [vmem:[%s1230 + $0x130] sm:$0xf]
        %v3443 = vld [vmem:[%s1230 + $0x138] sm:$0xff]
        %v3444 = vld [vmem:[%s1230 + $0x140] sm:$0xff]
        %v3445 = vld [vmem:[%s1230 + $0x148] sm:$0xf]
        %v3446 = vld [vmem:[%s1230 + $0x150] sm:$0xff]
        %v3447 = vld [vmem:[%s1230 + $0x158] sm:$0xff]
        %v3448 = vld [vmem:[%s1230 + $0x160] sm:$0xf]
        %v3449 = vld [vmem:[%s1230 + $0x168] sm:$0xff]
        %v3450 = vld [vmem:[%s1230 + $0x170] sm:$0xff]
        %v3451 = vld [vmem:[%s1230 + $0x178] sm:$0xf]
        %3484 = vrot.lane.b32.xlu0 %v3404, 118
        %v3485 = vpop.permute.xlu0 %3484
        %3486 = vrot.lane.b32.xlu0 %v3405, 118
        %v3487 = vpop.permute.xlu0 %3486
        %3488 = vrot.lane.b32.xlu0 %v3407, 118
        %v3489 = vpop.permute.xlu0 %3488
        %3490 = vrot.lane.b32.xlu0 %v3408, 118
        %v3491 = vpop.permute.xlu0 %3490
        %3492 = vrot.lane.b32.xlu0 %v3410, 118
        %v3493 = vpop.permute.xlu0 %3492
        %3494 = vrot.lane.b32.xlu0 %v3411, 118
        %v3495 = vpop.permute.xlu0 %3494
        %3496 = vrot.lane.b32.xlu0 %v3413, 118
        %v3497 = vpop.permute.xlu0 %3496
        %3498 = vrot.lane.b32.xlu0 %v3414, 118
        %v3499 = vpop.permute.xlu0 %3498
        %3500 = vrot.lane.b32.xlu0 %v3416, 118
        %v3501 = vpop.permute.xlu0 %3500
        %3502 = vrot.lane.b32.xlu0 %v3417, 118
        %v3503 = vpop.permute.xlu0 %3502
        %3504 = vrot.lane.b32.xlu0 %v3419, 118
        %v3505 = vpop.permute.xlu0 %3504
        %3506 = vrot.lane.b32.xlu0 %v3420, 118
        %v3507 = vpop.permute.xlu0 %3506
        %3508 = vrot.lane.b32.xlu0 %v3422, 118
        %v3509 = vpop.permute.xlu0 %3508
        %3510 = vrot.lane.b32.xlu0 %v3423, 118
        %v3511 = vpop.permute.xlu0 %3510
        %3512 = vrot.lane.b32.xlu0 %v3425, 118
        %v3513 = vpop.permute.xlu0 %3512
        %3514 = vrot.lane.b32.xlu0 %v3426, 118
        %v3515 = vpop.permute.xlu0 %3514
        %3516 = vrot.lane.b32.xlu0 %v3428, 118
        %v3517 = vpop.permute.xlu0 %3516
        %3518 = vrot.lane.b32.xlu0 %v3429, 118
        %v3519 = vpop.permute.xlu0 %3518
        %3520 = vrot.lane.b32.xlu0 %v3431, 118
        %v3521 = vpop.permute.xlu0 %3520
        %3522 = vrot.lane.b32.xlu0 %v3432, 118
        %v3523 = vpop.permute.xlu0 %3522
        %3524 = vrot.lane.b32.xlu0 %v3434, 118
        %v3525 = vpop.permute.xlu0 %3524
        %3526 = vrot.lane.b32.xlu0 %v3435, 118
        %v3527 = vpop.permute.xlu0 %3526
        %3528 = vrot.lane.b32.xlu0 %v3437, 118
        %v3529 = vpop.permute.xlu0 %3528
        %3530 = vrot.lane.b32.xlu0 %v3438, 118
        %v3531 = vpop.permute.xlu0 %3530
        %3532 = vrot.lane.b32.xlu0 %v3440, 118
        %v3533 = vpop.permute.xlu0 %3532
        %3534 = vrot.lane.b32.xlu0 %v3441, 118
        %v3535 = vpop.permute.xlu0 %3534
        %3536 = vrot.lane.b32.xlu0 %v3443, 118
        %v3537 = vpop.permute.xlu0 %3536
        %3538 = vrot.lane.b32.xlu0 %v3444, 118
        %v3539 = vpop.permute.xlu0 %3538
        %3540 = vrot.lane.b32.xlu0 %v3446, 118
        %v3541 = vpop.permute.xlu0 %3540
        %3542 = vrot.lane.b32.xlu0 %v3447, 118
        %v3543 = vpop.permute.xlu0 %3542
        %3544 = vrot.lane.b32.xlu0 %v3449, 118
        %v3545 = vpop.permute.xlu0 %3544
        %3546 = vrot.lane.b32.xlu0 %v3450, 118
        %v3547 = vpop.permute.xlu0 %3546
        %v3580 = vadd.f32 %v3372, %v3485
        %v3581 = vadd.f32 %v3373, %v3487
        %v3582 = vadd.f32 %v3374, %v3489
        %v3583 = vadd.f32 %v3375, %v3491
        %v3584 = vadd.f32 %v3376, %v3493
        %v3585 = vadd.f32 %v3377, %v3495
        %v3586 = vadd.f32 %v3378, %v3497
        %v3587 = vadd.f32 %v3379, %v3499
        %v3588 = vadd.f32 %v3380, %v3501
        %v3589 = vadd.f32 %v3381, %v3503
        %v3590 = vadd.f32 %v3382, %v3505
        %v3591 = vadd.f32 %v3383, %v3507
        %v3592 = vadd.f32 %v3384, %v3509
        %v3593 = vadd.f32 %v3385, %v3511
        %v3594 = vadd.f32 %v3386, %v3513
        %v3595 = vadd.f32 %v3387, %v3515
        %v3596 = vadd.f32 %v3388, %v3517
        %v3597 = vadd.f32 %v3389, %v3519
        %v3598 = vadd.f32 %v3390, %v3521
        %v3599 = vadd.f32 %v3391, %v3523
        %v3600 = vadd.f32 %v3392, %v3525
        %v3601 = vadd.f32 %v3393, %v3527
        %v3602 = vadd.f32 %v3394, %v3529
        %v3603 = vadd.f32 %v3395, %v3531
        %v3604 = vadd.f32 %v3396, %v3533
        %v3605 = vadd.f32 %v3397, %v3535
        %v3606 = vadd.f32 %v3398, %v3537
        %v3607 = vadd.f32 %v3399, %v3539
        %v3608 = vadd.f32 %v3400, %v3541
        %v3609 = vadd.f32 %v3401, %v3543
        %v3610 = vadd.f32 %v3402, %v3545
        %v3611 = vadd.f32 %v3403, %v3547
        %v3628 = vrot.slane %v3404, 1
        %v3629 = vrot.slane %v3405, 1
        %v3630 = vsel %vm1512, %v3628, %v3629
        %v3631 = vrot.slane %v3406, 1
        %v3632 = vsel %vm1512, %v3629, %v3631
        %v3633 = vrot.slane %v3407, 1
        %v3634 = vrot.slane %v3408, 1
        %v3635 = vsel %vm1512, %v3633, %v3634
        %v3636 = vrot.slane %v3409, 1
        %v3637 = vsel %vm1512, %v3634, %v3636
        %v3638 = vrot.slane %v3410, 1
        %v3639 = vrot.slane %v3411, 1
        %v3640 = vsel %vm1512, %v3638, %v3639
        %v3641 = vrot.slane %v3412, 1
        %v3642 = vsel %vm1512, %v3639, %v3641
        %v3643 = vrot.slane %v3413, 1
        %v3644 = vrot.slane %v3414, 1
        %v3645 = vsel %vm1512, %v3643, %v3644
        %v3646 = vrot.slane %v3415, 1
        %v3647 = vsel %vm1512, %v3644, %v3646
        %v3648 = vrot.slane %v3416, 1
        %v3649 = vrot.slane %v3417, 1
        %v3650 = vsel %vm1512, %v3648, %v3649
        %v3651 = vrot.slane %v3418, 1
        %v3652 = vsel %vm1512, %v3649, %v3651
        %v3653 = vrot.slane %v3419, 1
        %v3654 = vrot.slane %v3420, 1
        %v3655 = vsel %vm1512, %v3653, %v3654
        %v3656 = vrot.slane %v3421, 1
        %v3657 = vsel %vm1512, %v3654, %v3656
        %v3658 = vrot.slane %v3422, 1
        %v3659 = vrot.slane %v3423, 1
        %v3660 = vsel %vm1512, %v3658, %v3659
        %v3661 = vrot.slane %v3424, 1
        %v3662 = vsel %vm1512, %v3659, %v3661
        %v3663 = vrot.slane %v3425, 1
        %v3664 = vrot.slane %v3426, 1
        %v3665 = vsel %vm1512, %v3663, %v3664
        %v3666 = vrot.slane %v3427, 1
        %v3667 = vsel %vm1512, %v3664, %v3666
        %v3668 = vrot.slane %v3428, 1
        %v3669 = vrot.slane %v3429, 1
        %v3670 = vsel %vm1512, %v3668, %v3669
        %v3671 = vrot.slane %v3430, 1
        %v3672 = vsel %vm1512, %v3669, %v3671
        %v3673 = vrot.slane %v3431, 1
        %v3674 = vrot.slane %v3432, 1
        %v3675 = vsel %vm1512, %v3673, %v3674
        %v3676 = vrot.slane %v3433, 1
        %v3677 = vsel %vm1512, %v3674, %v3676
        %v3678 = vrot.slane %v3434, 1
        %v3679 = vrot.slane %v3435, 1
        %v3680 = vsel %vm1512, %v3678, %v3679
        %v3681 = vrot.slane %v3436, 1
        %v3682 = vsel %vm1512, %v3679, %v3681
        %v3683 = vrot.slane %v3437, 1
        %v3684 = vrot.slane %v3438, 1
        %v3685 = vsel %vm1512, %v3683, %v3684
        %v3686 = vrot.slane %v3439, 1
        %v3687 = vsel %vm1512, %v3684, %v3686
        %v3688 = vrot.slane %v3440, 1
        %v3689 = vrot.slane %v3441, 1
        %v3690 = vsel %vm1512, %v3688, %v3689
        %v3691 = vrot.slane %v3442, 1
        %v3692 = vsel %vm1512, %v3689, %v3691
        %v3693 = vrot.slane %v3443, 1
        %v3694 = vrot.slane %v3444, 1
        %v3695 = vsel %vm1512, %v3693, %v3694
        %v3696 = vrot.slane %v3445, 1
        %v3697 = vsel %vm1512, %v3694, %v3696
        %v3698 = vrot.slane %v3446, 1
        %v3699 = vrot.slane %v3447, 1
        %v3700 = vsel %vm1512, %v3698, %v3699
        %v3701 = vrot.slane %v3448, 1
        %v3702 = vsel %vm1512, %v3699, %v3701
        %v3703 = vrot.slane %v3449, 1
        %v3704 = vrot.slane %v3450, 1
        %v3705 = vsel %vm1512, %v3703, %v3704
        %v3706 = vrot.slane %v3451, 1
        %v3707 = vsel %vm1512, %v3704, %v3706
        %3708 = vrot.lane.b32.xlu0 %v3630, 117
        %v3709 = vpop.permute.xlu0 %3708
        %3710 = vrot.lane.b32.xlu0 %v3632, 117
        %v3711 = vpop.permute.xlu0 %3710
        %3712 = vrot.lane.b32.xlu0 %v3635, 117
        %v3713 = vpop.permute.xlu0 %3712
        %3714 = vrot.lane.b32.xlu0 %v3637, 117
        %v3715 = vpop.permute.xlu0 %3714
        %3716 = vrot.lane.b32.xlu0 %v3640, 117
        %v3717 = vpop.permute.xlu0 %3716
        %3718 = vrot.lane.b32.xlu0 %v3642, 117
        %v3719 = vpop.permute.xlu0 %3718
        %3720 = vrot.lane.b32.xlu0 %v3645, 117
        %v3721 = vpop.permute.xlu0 %3720
        %3722 = vrot.lane.b32.xlu0 %v3647, 117
        %v3723 = vpop.permute.xlu0 %3722
        %3724 = vrot.lane.b32.xlu0 %v3650, 117
        %v3725 = vpop.permute.xlu0 %3724
        %3726 = vrot.lane.b32.xlu0 %v3652, 117
        %v3727 = vpop.permute.xlu0 %3726
        %3728 = vrot.lane.b32.xlu0 %v3655, 117
        %v3729 = vpop.permute.xlu0 %3728
        %3730 = vrot.lane.b32.xlu0 %v3657, 117
        %v3731 = vpop.permute.xlu0 %3730
        %3732 = vrot.lane.b32.xlu0 %v3660, 117
        %v3733 = vpop.permute.xlu0 %3732
        %3734 = vrot.lane.b32.xlu0 %v3662, 117
        %v3735 = vpop.permute.xlu0 %3734
        %3736 = vrot.lane.b32.xlu0 %v3665, 117
        %v3737 = vpop.permute.xlu0 %3736
        %3738 = vrot.lane.b32.xlu0 %v3667, 117
        %v3739 = vpop.permute.xlu0 %3738
        %3740 = vrot.lane.b32.xlu0 %v3670, 117
        %v3741 = vpop.permute.xlu0 %3740
        %3742 = vrot.lane.b32.xlu0 %v3672, 117
        %v3743 = vpop.permute.xlu0 %3742
        %3744 = vrot.lane.b32.xlu0 %v3675, 117
        %v3745 = vpop.permute.xlu0 %3744
        %3746 = vrot.lane.b32.xlu0 %v3677, 117
        %v3747 = vpop.permute.xlu0 %3746
        %3748 = vrot.lane.b32.xlu0 %v3680, 117
        %v3749 = vpop.permute.xlu0 %3748
        %3750 = vrot.lane.b32.xlu0 %v3682, 117
        %v3751 = vpop.permute.xlu0 %3750
        %3752 = vrot.lane.b32.xlu0 %v3685, 117
        %v3753 = vpop.permute.xlu0 %3752
        %3754 = vrot.lane.b32.xlu0 %v3687, 117
        %v3755 = vpop.permute.xlu0 %3754
        %3756 = vrot.lane.b32.xlu0 %v3690, 117
        %v3757 = vpop.permute.xlu0 %3756
        %3758 = vrot.lane.b32.xlu0 %v3692, 117
        %v3759 = vpop.permute.xlu0 %3758
        %3760 = vrot.lane.b32.xlu0 %v3695, 117
        %v3761 = vpop.permute.xlu0 %3760
        %3762 = vrot.lane.b32.xlu0 %v3697, 117
        %v3763 = vpop.permute.xlu0 %3762
        %3764 = vrot.lane.b32.xlu0 %v3700, 117
        %v3765 = vpop.permute.xlu0 %3764
        %3766 = vrot.lane.b32.xlu0 %v3702, 117
        %v3767 = vpop.permute.xlu0 %3766
        %3768 = vrot.lane.b32.xlu0 %v3705, 117
        %v3769 = vpop.permute.xlu0 %3768
        %3770 = vrot.lane.b32.xlu0 %v3707, 117
        %v3771 = vpop.permute.xlu0 %3770
        %v3804 = vadd.f32 %v3580, %v3709
        %v3805 = vadd.f32 %v3581, %v3711
        %v3806 = vadd.f32 %v3582, %v3713
        %v3807 = vadd.f32 %v3583, %v3715
        %v3808 = vadd.f32 %v3584, %v3717
        %v3809 = vadd.f32 %v3585, %v3719
        %v3810 = vadd.f32 %v3586, %v3721
        %v3811 = vadd.f32 %v3587, %v3723
        %v3812 = vadd.f32 %v3588, %v3725
        %v3813 = vadd.f32 %v3589, %v3727
        %v3814 = vadd.f32 %v3590, %v3729
        %v3815 = vadd.f32 %v3591, %v3731
        %v3816 = vadd.f32 %v3592, %v3733
        %v3817 = vadd.f32 %v3593, %v3735
        %v3818 = vadd.f32 %v3594, %v3737
        %v3819 = vadd.f32 %v3595, %v3739
        %v3820 = vadd.f32 %v3596, %v3741
        %v3821 = vadd.f32 %v3597, %v3743
        %v3822 = vadd.f32 %v3598, %v3745
        %v3823 = vadd.f32 %v3599, %v3747
        %v3824 = vadd.f32 %v3600, %v3749
        %v3825 = vadd.f32 %v3601, %v3751
        %v3826 = vadd.f32 %v3602, %v3753
        %v3827 = vadd.f32 %v3603, %v3755
        %v3828 = vadd.f32 %v3604, %v3757
        %v3829 = vadd.f32 %v3605, %v3759
        %v3830 = vadd.f32 %v3606, %v3761
        %v3831 = vadd.f32 %v3607, %v3763
        %v3832 = vadd.f32 %v3608, %v3765
        %v3833 = vadd.f32 %v3609, %v3767
        %v3834 = vadd.f32 %v3610, %v3769
        %v3835 = vadd.f32 %v3611, %v3771
        %v3836 = vrot.slane %v3404, 2
        %v3837 = vrot.slane %v3405, 2
        %v3838 = vsel %vm1721, %v3836, %v3837
        %v3839 = vrot.slane %v3406, 2
        %v3840 = vsel %vm1721, %v3837, %v3839
        %v3841 = vrot.slane %v3407, 2
        %v3842 = vrot.slane %v3408, 2
        %v3843 = vsel %vm1721, %v3841, %v3842
        %v3844 = vrot.slane %v3409, 2
        %v3845 = vsel %vm1721, %v3842, %v3844
        %v3846 = vrot.slane %v3410, 2
        %v3847 = vrot.slane %v3411, 2
        %v3848 = vsel %vm1721, %v3846, %v3847
        %v3849 = vrot.slane %v3412, 2
        %v3850 = vsel %vm1721, %v3847, %v3849
        %v3851 = vrot.slane %v3413, 2
        %v3852 = vrot.slane %v3414, 2
        %v3853 = vsel %vm1721, %v3851, %v3852
        %v3854 = vrot.slane %v3415, 2
        %v3855 = vsel %vm1721, %v3852, %v3854
        %v3856 = vrot.slane %v3416, 2
        %v3857 = vrot.slane %v3417, 2
        %v3858 = vsel %vm1721, %v3856, %v3857
        %v3859 = vrot.slane %v3418, 2
        %v3860 = vsel %vm1721, %v3857, %v3859
        %v3861 = vrot.slane %v3419, 2
        %v3862 = vrot.slane %v3420, 2
        %v3863 = vsel %vm1721, %v3861, %v3862
        %v3864 = vrot.slane %v3421, 2
        %v3865 = vsel %vm1721, %v3862, %v3864
        %v3866 = vrot.slane %v3422, 2
        %v3867 = vrot.slane %v3423, 2
        %v3868 = vsel %vm1721, %v3866, %v3867
        %v3869 = vrot.slane %v3424, 2
        %v3870 = vsel %vm1721, %v3867, %v3869
        %v3871 = vrot.slane %v3425, 2
        %v3872 = vrot.slane %v3426, 2
        %v3873 = vsel %vm1721, %v3871, %v3872
        %v3874 = vrot.slane %v3427, 2
        %v3875 = vsel %vm1721, %v3872, %v3874
        %v3876 = vrot.slane %v3428, 2
        %v3877 = vrot.slane %v3429, 2
        %v3878 = vsel %vm1721, %v3876, %v3877
        %v3879 = vrot.slane %v3430, 2
        %v3880 = vsel %vm1721, %v3877, %v3879
        %v3881 = vrot.slane %v3431, 2
        %v3882 = vrot.slane %v3432, 2
        %v3883 = vsel %vm1721, %v3881, %v3882
        %v3884 = vrot.slane %v3433, 2
        %v3885 = vsel %vm1721, %v3882, %v3884
        %v3886 = vrot.slane %v3434, 2
        %v3887 = vrot.slane %v3435, 2
        %v3888 = vsel %vm1721, %v3886, %v3887
        %v3889 = vrot.slane %v3436, 2
        %v3890 = vsel %vm1721, %v3887, %v3889
        %v3891 = vrot.slane %v3437, 2
        %v3892 = vrot.slane %v3438, 2
        %v3893 = vsel %vm1721, %v3891, %v3892
        %v3894 = vrot.slane %v3439, 2
        %v3895 = vsel %vm1721, %v3892, %v3894
        %v3896 = vrot.slane %v3440, 2
        %v3897 = vrot.slane %v3441, 2
        %v3898 = vsel %vm1721, %v3896, %v3897
        %v3899 = vrot.slane %v3442, 2
        %v3900 = vsel %vm1721, %v3897, %v3899
        %v3901 = vrot.slane %v3443, 2
        %v3902 = vrot.slane %v3444, 2
        %v3903 = vsel %vm1721, %v3901, %v3902
        %v3904 = vrot.slane %v3445, 2
        %v3905 = vsel %vm1721, %v3902, %v3904
        %v3906 = vrot.slane %v3446, 2
        %v3907 = vrot.slane %v3447, 2
        %v3908 = vsel %vm1721, %v3906, %v3907
        %v3909 = vrot.slane %v3448, 2
        %v3910 = vsel %vm1721, %v3907, %v3909
        %v3911 = vrot.slane %v3449, 2
        %v3912 = vrot.slane %v3450, 2
        %v3913 = vsel %vm1721, %v3911, %v3912
        %v3914 = vrot.slane %v3451, 2
        %v3915 = vsel %vm1721, %v3912, %v3914
        %3916 = vrot.lane.b32.xlu0 %v3838, 116
        %v3917 = vpop.permute.xlu0 %3916
        %3918 = vrot.lane.b32.xlu0 %v3840, 116
        %v3919 = vpop.permute.xlu0 %3918
        %3920 = vrot.lane.b32.xlu0 %v3843, 116
        %v3921 = vpop.permute.xlu0 %3920
        %3922 = vrot.lane.b32.xlu0 %v3845, 116
        %v3923 = vpop.permute.xlu0 %3922
        %3924 = vrot.lane.b32.xlu0 %v3848, 116
        %v3925 = vpop.permute.xlu0 %3924
        %3926 = vrot.lane.b32.xlu0 %v3850, 116
        %v3927 = vpop.permute.xlu0 %3926
        %3928 = vrot.lane.b32.xlu0 %v3853, 116
        %v3929 = vpop.permute.xlu0 %3928
        %3930 = vrot.lane.b32.xlu0 %v3855, 116
        %v3931 = vpop.permute.xlu0 %3930
        %3932 = vrot.lane.b32.xlu0 %v3858, 116
        %v3933 = vpop.permute.xlu0 %3932
        %3934 = vrot.lane.b32.xlu0 %v3860, 116
        %v3935 = vpop.permute.xlu0 %3934
        %3936 = vrot.lane.b32.xlu0 %v3863, 116
        %v3937 = vpop.permute.xlu0 %3936
        %3938 = vrot.lane.b32.xlu0 %v3865, 116
        %v3939 = vpop.permute.xlu0 %3938
        %3940 = vrot.lane.b32.xlu0 %v3868, 116
        %v3941 = vpop.permute.xlu0 %3940
        %3942 = vrot.lane.b32.xlu0 %v3870, 116
        %v3943 = vpop.permute.xlu0 %3942
        %3944 = vrot.lane.b32.xlu0 %v3873, 116
        %v3945 = vpop.permute.xlu0 %3944
        %3946 = vrot.lane.b32.xlu0 %v3875, 116
        %v3947 = vpop.permute.xlu0 %3946
        %3948 = vrot.lane.b32.xlu0 %v3878, 116
        %v3949 = vpop.permute.xlu0 %3948
        %3950 = vrot.lane.b32.xlu0 %v3880, 116
        %v3951 = vpop.permute.xlu0 %3950
        %3952 = vrot.lane.b32.xlu0 %v3883, 116
        %v3953 = vpop.permute.xlu0 %3952
        %3954 = vrot.lane.b32.xlu0 %v3885, 116
        %v3955 = vpop.permute.xlu0 %3954
        %3956 = vrot.lane.b32.xlu0 %v3888, 116
        %v3957 = vpop.permute.xlu0 %3956
        %3958 = vrot.lane.b32.xlu0 %v3890, 116
        %v3959 = vpop.permute.xlu0 %3958
        %3960 = vrot.lane.b32.xlu0 %v3893, 116
        %v3961 = vpop.permute.xlu0 %3960
        %3962 = vrot.lane.b32.xlu0 %v3895, 116
        %v3963 = vpop.permute.xlu0 %3962
        %3964 = vrot.lane.b32.xlu0 %v3898, 116
        %v3965 = vpop.permute.xlu0 %3964
        %3966 = vrot.lane.b32.xlu0 %v3900, 116
        %v3967 = vpop.permute.xlu0 %3966
        %3968 = vrot.lane.b32.xlu0 %v3903, 116
        %v3969 = vpop.permute.xlu0 %3968
        %3970 = vrot.lane.b32.xlu0 %v3905, 116
        %v3971 = vpop.permute.xlu0 %3970
        %3972 = vrot.lane.b32.xlu0 %v3908, 116
        %v3973 = vpop.permute.xlu0 %3972
        %3974 = vrot.lane.b32.xlu0 %v3910, 116
        %v3975 = vpop.permute.xlu0 %3974
        %3976 = vrot.lane.b32.xlu0 %v3913, 116
        %v3977 = vpop.permute.xlu0 %3976
        %3978 = vrot.lane.b32.xlu0 %v3915, 116
        %v3979 = vpop.permute.xlu0 %3978
        %v4012 = vadd.f32 %v3804, %v3917
        %v4013 = vadd.f32 %v3805, %v3919
        %v4014 = vadd.f32 %v3806, %v3921
        %v4015 = vadd.f32 %v3807, %v3923
        %v4016 = vadd.f32 %v3808, %v3925
        %v4017 = vadd.f32 %v3809, %v3927
        %v4018 = vadd.f32 %v3810, %v3929
        %v4019 = vadd.f32 %v3811, %v3931
        %v4020 = vadd.f32 %v3812, %v3933
        %v4021 = vadd.f32 %v3813, %v3935
        %v4022 = vadd.f32 %v3814, %v3937
        %v4023 = vadd.f32 %v3815, %v3939
        %v4024 = vadd.f32 %v3816, %v3941
        %v4025 = vadd.f32 %v3817, %v3943
        %v4026 = vadd.f32 %v3818, %v3945
        %v4027 = vadd.f32 %v3819, %v3947
        %v4028 = vadd.f32 %v3820, %v3949
        %v4029 = vadd.f32 %v3821, %v3951
        %v4030 = vadd.f32 %v3822, %v3953
        %v4031 = vadd.f32 %v3823, %v3955
        %v4032 = vadd.f32 %v3824, %v3957
        %v4033 = vadd.f32 %v3825, %v3959
        %v4034 = vadd.f32 %v3826, %v3961
        %v4035 = vadd.f32 %v3827, %v3963
        %v4036 = vadd.f32 %v3828, %v3965
        %v4037 = vadd.f32 %v3829, %v3967
        %v4038 = vadd.f32 %v3830, %v3969
        %v4039 = vadd.f32 %v3831, %v3971
        %v4040 = vadd.f32 %v3832, %v3973
        %v4041 = vadd.f32 %v3833, %v3975
        %v4042 = vadd.f32 %v3834, %v3977
        %v4043 = vadd.f32 %v3835, %v3979
        %v4044 = vrot.slane %v3404, 3
        %v4045 = vrot.slane %v3405, 3
        %v4046 = vsel %vm1930, %v4044, %v4045
        %v4047 = vrot.slane %v3406, 3
        %v4048 = vsel %vm1930, %v4045, %v4047
        %v4049 = vrot.slane %v3407, 3
        %v4050 = vrot.slane %v3408, 3
        %v4051 = vsel %vm1930, %v4049, %v4050
        %v4052 = vrot.slane %v3409, 3
        %v4053 = vsel %vm1930, %v4050, %v4052
        %v4054 = vrot.slane %v3410, 3
        %v4055 = vrot.slane %v3411, 3
        %v4056 = vsel %vm1930, %v4054, %v4055
        %v4057 = vrot.slane %v3412, 3
        %v4058 = vsel %vm1930, %v4055, %v4057
        %v4059 = vrot.slane %v3413, 3
        %v4060 = vrot.slane %v3414, 3
        %v4061 = vsel %vm1930, %v4059, %v4060
        %v4062 = vrot.slane %v3415, 3
        %v4063 = vsel %vm1930, %v4060, %v4062
        %v4064 = vrot.slane %v3416, 3
        %v4065 = vrot.slane %v3417, 3
        %v4066 = vsel %vm1930, %v4064, %v4065
        %v4067 = vrot.slane %v3418, 3
        %v4068 = vsel %vm1930, %v4065, %v4067
        %v4069 = vrot.slane %v3419, 3
        %v4070 = vrot.slane %v3420, 3
        %v4071 = vsel %vm1930, %v4069, %v4070
        %v4072 = vrot.slane %v3421, 3
        %v4073 = vsel %vm1930, %v4070, %v4072
        %v4074 = vrot.slane %v3422, 3
        %v4075 = vrot.slane %v3423, 3
        %v4076 = vsel %vm1930, %v4074, %v4075
        %v4077 = vrot.slane %v3424, 3
        %v4078 = vsel %vm1930, %v4075, %v4077
        %v4079 = vrot.slane %v3425, 3
        %v4080 = vrot.slane %v3426, 3
        %v4081 = vsel %vm1930, %v4079, %v4080
        %v4082 = vrot.slane %v3427, 3
        %v4083 = vsel %vm1930, %v4080, %v4082
        %v4084 = vrot.slane %v3428, 3
        %v4085 = vrot.slane %v3429, 3
        %v4086 = vsel %vm1930, %v4084, %v4085
        %v4087 = vrot.slane %v3430, 3
        %v4088 = vsel %vm1930, %v4085, %v4087
        %v4089 = vrot.slane %v3431, 3
        %v4090 = vrot.slane %v3432, 3
        %v4091 = vsel %vm1930, %v4089, %v4090
        %v4092 = vrot.slane %v3433, 3
        %v4093 = vsel %vm1930, %v4090, %v4092
        %v4094 = vrot.slane %v3434, 3
        %v4095 = vrot.slane %v3435, 3
        %v4096 = vsel %vm1930, %v4094, %v4095
        %v4097 = vrot.slane %v3436, 3
        %v4098 = vsel %vm1930, %v4095, %v4097
        %v4099 = vrot.slane %v3437, 3
        %v4100 = vrot.slane %v3438, 3
        %v4101 = vsel %vm1930, %v4099, %v4100
        %v4102 = vrot.slane %v3439, 3
        %v4103 = vsel %vm1930, %v4100, %v4102
        %v4104 = vrot.slane %v3440, 3
        %v4105 = vrot.slane %v3441, 3
        %v4106 = vsel %vm1930, %v4104, %v4105
        %v4107 = vrot.slane %v3442, 3
        %v4108 = vsel %vm1930, %v4105, %v4107
        %v4109 = vrot.slane %v3443, 3
        %v4110 = vrot.slane %v3444, 3
        %v4111 = vsel %vm1930, %v4109, %v4110
        %v4112 = vrot.slane %v3445, 3
        %v4113 = vsel %vm1930, %v4110, %v4112
        %v4114 = vrot.slane %v3446, 3
        %v4115 = vrot.slane %v3447, 3
        %v4116 = vsel %vm1930, %v4114, %v4115
        %v4117 = vrot.slane %v3448, 3
        %v4118 = vsel %vm1930, %v4115, %v4117
        %v4119 = vrot.slane %v3449, 3
        %v4120 = vrot.slane %v3450, 3
        %v4121 = vsel %vm1930, %v4119, %v4120
        %v4122 = vrot.slane %v3451, 3
        %v4123 = vsel %vm1930, %v4120, %v4122
        %4124 = vrot.lane.b32.xlu0 %v4046, 115
        %v4125 = vpop.permute.xlu0 %4124
        %4126 = vrot.lane.b32.xlu0 %v4048, 115
        %v4127 = vpop.permute.xlu0 %4126
        %4128 = vrot.lane.b32.xlu0 %v4051, 115
        %v4129 = vpop.permute.xlu0 %4128
        %4130 = vrot.lane.b32.xlu0 %v4053, 115
        %v4131 = vpop.permute.xlu0 %4130
        %4132 = vrot.lane.b32.xlu0 %v4056, 115
        %v4133 = vpop.permute.xlu0 %4132
        %4134 = vrot.lane.b32.xlu0 %v4058, 115
        %v4135 = vpop.permute.xlu0 %4134
        %4136 = vrot.lane.b32.xlu0 %v4061, 115
        %v4137 = vpop.permute.xlu0 %4136
        %4138 = vrot.lane.b32.xlu0 %v4063, 115
        %v4139 = vpop.permute.xlu0 %4138
        %4140 = vrot.lane.b32.xlu0 %v4066, 115
        %v4141 = vpop.permute.xlu0 %4140
        %4142 = vrot.lane.b32.xlu0 %v4068, 115
        %v4143 = vpop.permute.xlu0 %4142
        %4144 = vrot.lane.b32.xlu0 %v4071, 115
        %v4145 = vpop.permute.xlu0 %4144
        %4146 = vrot.lane.b32.xlu0 %v4073, 115
        %v4147 = vpop.permute.xlu0 %4146
        %4148 = vrot.lane.b32.xlu0 %v4076, 115
        %v4149 = vpop.permute.xlu0 %4148
        %4150 = vrot.lane.b32.xlu0 %v4078, 115
        %v4151 = vpop.permute.xlu0 %4150
        %4152 = vrot.lane.b32.xlu0 %v4081, 115
        %v4153 = vpop.permute.xlu0 %4152
        %4154 = vrot.lane.b32.xlu0 %v4083, 115
        %v4155 = vpop.permute.xlu0 %4154
        %4156 = vrot.lane.b32.xlu0 %v4086, 115
        %v4157 = vpop.permute.xlu0 %4156
        %4158 = vrot.lane.b32.xlu0 %v4088, 115
        %v4159 = vpop.permute.xlu0 %4158
        %4160 = vrot.lane.b32.xlu0 %v4091, 115
        %v4161 = vpop.permute.xlu0 %4160
        %4162 = vrot.lane.b32.xlu0 %v4093, 115
        %v4163 = vpop.permute.xlu0 %4162
        %4164 = vrot.lane.b32.xlu0 %v4096, 115
        %v4165 = vpop.permute.xlu0 %4164
        %4166 = vrot.lane.b32.xlu0 %v4098, 115
        %v4167 = vpop.permute.xlu0 %4166
        %4168 = vrot.lane.b32.xlu0 %v4101, 115
        %v4169 = vpop.permute.xlu0 %4168
        %4170 = vrot.lane.b32.xlu0 %v4103, 115
        %v4171 = vpop.permute.xlu0 %4170
        %4172 = vrot.lane.b32.xlu0 %v4106, 115
        %v4173 = vpop.permute.xlu0 %4172
        %4174 = vrot.lane.b32.xlu0 %v4108, 115
        %v4175 = vpop.permute.xlu0 %4174
        %4176 = vrot.lane.b32.xlu0 %v4111, 115
        %v4177 = vpop.permute.xlu0 %4176
        %4178 = vrot.lane.b32.xlu0 %v4113, 115
        %v4179 = vpop.permute.xlu0 %4178
        %4180 = vrot.lane.b32.xlu0 %v4116, 115
        %v4181 = vpop.permute.xlu0 %4180
        %4182 = vrot.lane.b32.xlu0 %v4118, 115
        %v4183 = vpop.permute.xlu0 %4182
        %4184 = vrot.lane.b32.xlu0 %v4121, 115
        %v4185 = vpop.permute.xlu0 %4184
        %4186 = vrot.lane.b32.xlu0 %v4123, 115
        %v4187 = vpop.permute.xlu0 %4186
        %v4220 = vadd.f32 %v4012, %v4125
        %v4221 = vadd.f32 %v4013, %v4127
        %v4222 = vadd.f32 %v4014, %v4129
        %v4223 = vadd.f32 %v4015, %v4131
        %v4224 = vadd.f32 %v4016, %v4133
        %v4225 = vadd.f32 %v4017, %v4135
        %v4226 = vadd.f32 %v4018, %v4137
        %v4227 = vadd.f32 %v4019, %v4139
        %v4228 = vadd.f32 %v4020, %v4141
        %v4229 = vadd.f32 %v4021, %v4143
        %v4230 = vadd.f32 %v4022, %v4145
        %v4231 = vadd.f32 %v4023, %v4147
        %v4232 = vadd.f32 %v4024, %v4149
        %v4233 = vadd.f32 %v4025, %v4151
        %v4234 = vadd.f32 %v4026, %v4153
        %v4235 = vadd.f32 %v4027, %v4155
        %v4236 = vadd.f32 %v4028, %v4157
        %v4237 = vadd.f32 %v4029, %v4159
        %v4238 = vadd.f32 %v4030, %v4161
        %v4239 = vadd.f32 %v4031, %v4163
        %v4240 = vadd.f32 %v4032, %v4165
        %v4241 = vadd.f32 %v4033, %v4167
        %v4242 = vadd.f32 %v4034, %v4169
        %v4243 = vadd.f32 %v4035, %v4171
        %v4244 = vadd.f32 %v4036, %v4173
        %v4245 = vadd.f32 %v4037, %v4175
        %v4246 = vadd.f32 %v4038, %v4177
        %v4247 = vadd.f32 %v4039, %v4179
        %v4248 = vadd.f32 %v4040, %v4181
        %v4249 = vadd.f32 %v4041, %v4183
        %v4250 = vadd.f32 %v4042, %v4185
        %v4251 = vadd.f32 %v4043, %v4187
        %v4252 = vrot.slane %v3404, 4
        %v4253 = vrot.slane %v3405, 4
        %v4254 = vsel %vm2139, %v4252, %v4253
        %v4255 = vrot.slane %v3406, 4
        %v4256 = vsel %vm2139, %v4253, %v4255
        %v4257 = vrot.slane %v3407, 4
        %v4258 = vrot.slane %v3408, 4
        %v4259 = vsel %vm2139, %v4257, %v4258
        %v4260 = vrot.slane %v3409, 4
        %v4261 = vsel %vm2139, %v4258, %v4260
        %v4262 = vrot.slane %v3410, 4
        %v4263 = vrot.slane %v3411, 4
        %v4264 = vsel %vm2139, %v4262, %v4263
        %v4265 = vrot.slane %v3412, 4
        %v4266 = vsel %vm2139, %v4263, %v4265
        %v4267 = vrot.slane %v3413, 4
        %v4268 = vrot.slane %v3414, 4
        %v4269 = vsel %vm2139, %v4267, %v4268
        %v4270 = vrot.slane %v3415, 4
        %v4271 = vsel %vm2139, %v4268, %v4270
        %v4272 = vrot.slane %v3416, 4
        %v4273 = vrot.slane %v3417, 4
        %v4274 = vsel %vm2139, %v4272, %v4273
        %v4275 = vrot.slane %v3418, 4
        %v4276 = vsel %vm2139, %v4273, %v4275
        %v4277 = vrot.slane %v3419, 4
        %v4278 = vrot.slane %v3420, 4
        %v4279 = vsel %vm2139, %v4277, %v4278
        %v4280 = vrot.slane %v3421, 4
        %v4281 = vsel %vm2139, %v4278, %v4280
        %v4282 = vrot.slane %v3422, 4
        %v4283 = vrot.slane %v3423, 4
        %v4284 = vsel %vm2139, %v4282, %v4283
        %v4285 = vrot.slane %v3424, 4
        %v4286 = vsel %vm2139, %v4283, %v4285
        %v4287 = vrot.slane %v3425, 4
        %v4288 = vrot.slane %v3426, 4
        %v4289 = vsel %vm2139, %v4287, %v4288
        %v4290 = vrot.slane %v3427, 4
        %v4291 = vsel %vm2139, %v4288, %v4290
        %v4292 = vrot.slane %v3428, 4
        %v4293 = vrot.slane %v3429, 4
        %v4294 = vsel %vm2139, %v4292, %v4293
        %v4295 = vrot.slane %v3430, 4
        %v4296 = vsel %vm2139, %v4293, %v4295
        %v4297 = vrot.slane %v3431, 4
        %v4298 = vrot.slane %v3432, 4
        %v4299 = vsel %vm2139, %v4297, %v4298
        %v4300 = vrot.slane %v3433, 4
        %v4301 = vsel %vm2139, %v4298, %v4300
        %v4302 = vrot.slane %v3434, 4
        %v4303 = vrot.slane %v3435, 4
        %v4304 = vsel %vm2139, %v4302, %v4303
        %v4305 = vrot.slane %v3436, 4
        %v4306 = vsel %vm2139, %v4303, %v4305
        %v4307 = vrot.slane %v3437, 4
        %v4308 = vrot.slane %v3438, 4
        %v4309 = vsel %vm2139, %v4307, %v4308
        %v4310 = vrot.slane %v3439, 4
        %v4311 = vsel %vm2139, %v4308, %v4310
        %v4312 = vrot.slane %v3440, 4
        %v4313 = vrot.slane %v3441, 4
        %v4314 = vsel %vm2139, %v4312, %v4313
        %v4315 = vrot.slane %v3442, 4
        %v4316 = vsel %vm2139, %v4313, %v4315
        %v4317 = vrot.slane %v3443, 4
        %v4318 = vrot.slane %v3444, 4
        %v4319 = vsel %vm2139, %v4317, %v4318
        %v4320 = vrot.slane %v3445, 4
        %v4321 = vsel %vm2139, %v4318, %v4320
        %v4322 = vrot.slane %v3446, 4
        %v4323 = vrot.slane %v3447, 4
        %v4324 = vsel %vm2139, %v4322, %v4323
        %v4325 = vrot.slane %v3448, 4
        %v4326 = vsel %vm2139, %v4323, %v4325
        %v4327 = vrot.slane %v3449, 4
        %v4328 = vrot.slane %v3450, 4
        %v4329 = vsel %vm2139, %v4327, %v4328
        %v4330 = vrot.slane %v3451, 4
        %v4331 = vsel %vm2139, %v4328, %v4330
        %4332 = vrot.lane.b32.xlu0 %v4254, 114
        %v4333 = vpop.permute.xlu0 %4332
        %4334 = vrot.lane.b32.xlu0 %v4256, 114
        %v4335 = vpop.permute.xlu0 %4334
        %4336 = vrot.lane.b32.xlu0 %v4259, 114
        %v4337 = vpop.permute.xlu0 %4336
        %4338 = vrot.lane.b32.xlu0 %v4261, 114
        %v4339 = vpop.permute.xlu0 %4338
        %4340 = vrot.lane.b32.xlu0 %v4264, 114
        %v4341 = vpop.permute.xlu0 %4340
        %4342 = vrot.lane.b32.xlu0 %v4266, 114
        %v4343 = vpop.permute.xlu0 %4342
        %4344 = vrot.lane.b32.xlu0 %v4269, 114
        %v4345 = vpop.permute.xlu0 %4344
        %4346 = vrot.lane.b32.xlu0 %v4271, 114
        %v4347 = vpop.permute.xlu0 %4346
        %4348 = vrot.lane.b32.xlu0 %v4274, 114
        %v4349 = vpop.permute.xlu0 %4348
        %4350 = vrot.lane.b32.xlu0 %v4276, 114
        %v4351 = vpop.permute.xlu0 %4350
        %4352 = vrot.lane.b32.xlu0 %v4279, 114
        %v4353 = vpop.permute.xlu0 %4352
        %4354 = vrot.lane.b32.xlu0 %v4281, 114
        %v4355 = vpop.permute.xlu0 %4354
        %4356 = vrot.lane.b32.xlu0 %v4284, 114
        %v4357 = vpop.permute.xlu0 %4356
        %4358 = vrot.lane.b32.xlu0 %v4286, 114
        %v4359 = vpop.permute.xlu0 %4358
        %4360 = vrot.lane.b32.xlu0 %v4289, 114
        %v4361 = vpop.permute.xlu0 %4360
        %4362 = vrot.lane.b32.xlu0 %v4291, 114
        %v4363 = vpop.permute.xlu0 %4362
        %4364 = vrot.lane.b32.xlu0 %v4294, 114
        %v4365 = vpop.permute.xlu0 %4364
        %4366 = vrot.lane.b32.xlu0 %v4296, 114
        %v4367 = vpop.permute.xlu0 %4366
        %4368 = vrot.lane.b32.xlu0 %v4299, 114
        %v4369 = vpop.permute.xlu0 %4368
        %4370 = vrot.lane.b32.xlu0 %v4301, 114
        %v4371 = vpop.permute.xlu0 %4370
        %4372 = vrot.lane.b32.xlu0 %v4304, 114
        %v4373 = vpop.permute.xlu0 %4372
        %4374 = vrot.lane.b32.xlu0 %v4306, 114
        %v4375 = vpop.permute.xlu0 %4374
        %4376 = vrot.lane.b32.xlu0 %v4309, 114
        %v4377 = vpop.permute.xlu0 %4376
        %4378 = vrot.lane.b32.xlu0 %v4311, 114
        %v4379 = vpop.permute.xlu0 %4378
        %4380 = vrot.lane.b32.xlu0 %v4314, 114
        %v4381 = vpop.permute.xlu0 %4380
        %4382 = vrot.lane.b32.xlu0 %v4316, 114
        %v4383 = vpop.permute.xlu0 %4382
        %4384 = vrot.lane.b32.xlu0 %v4319, 114
        %v4385 = vpop.permute.xlu0 %4384
        %4386 = vrot.lane.b32.xlu0 %v4321, 114
        %v4387 = vpop.permute.xlu0 %4386
        %4388 = vrot.lane.b32.xlu0 %v4324, 114
        %v4389 = vpop.permute.xlu0 %4388
        %4390 = vrot.lane.b32.xlu0 %v4326, 114
        %v4391 = vpop.permute.xlu0 %4390
        %4392 = vrot.lane.b32.xlu0 %v4329, 114
        %v4393 = vpop.permute.xlu0 %4392
        %4394 = vrot.lane.b32.xlu0 %v4331, 114
        %v4395 = vpop.permute.xlu0 %4394
        %v4428 = vadd.f32 %v4220, %v4333
        %v4429 = vadd.f32 %v4221, %v4335
        %v4430 = vadd.f32 %v4222, %v4337
        %v4431 = vadd.f32 %v4223, %v4339
        %v4432 = vadd.f32 %v4224, %v4341
        %v4433 = vadd.f32 %v4225, %v4343
        %v4434 = vadd.f32 %v4226, %v4345
        %v4435 = vadd.f32 %v4227, %v4347
        %v4436 = vadd.f32 %v4228, %v4349
        %v4437 = vadd.f32 %v4229, %v4351
        %v4438 = vadd.f32 %v4230, %v4353
        %v4439 = vadd.f32 %v4231, %v4355
        %v4440 = vadd.f32 %v4232, %v4357
        %v4441 = vadd.f32 %v4233, %v4359
        %v4442 = vadd.f32 %v4234, %v4361
        %v4443 = vadd.f32 %v4235, %v4363
        %v4444 = vadd.f32 %v4236, %v4365
        %v4445 = vadd.f32 %v4237, %v4367
        %v4446 = vadd.f32 %v4238, %v4369
        %v4447 = vadd.f32 %v4239, %v4371
        %v4448 = vadd.f32 %v4240, %v4373
        %v4449 = vadd.f32 %v4241, %v4375
        %v4450 = vadd.f32 %v4242, %v4377
        %v4451 = vadd.f32 %v4243, %v4379
        %v4452 = vadd.f32 %v4244, %v4381
        %v4453 = vadd.f32 %v4245, %v4383
        %v4454 = vadd.f32 %v4246, %v4385
        %v4455 = vadd.f32 %v4247, %v4387
        %v4456 = vadd.f32 %v4248, %v4389
        %v4457 = vadd.f32 %v4249, %v4391
        %v4458 = vadd.f32 %v4250, %v4393
        %v4459 = vadd.f32 %v4251, %v4395
        %s4460 = scalar_lea.vmem [#allocation2], 72
        %v4461 = vld [vmem:[%s4460] sm:$0xff]
        %v4462 = vld [vmem:[%s4460 + $0x8] sm:$0xff]
        %v4463 = vld [vmem:[%s4460 + $0x10] sm:$0xf]
        %v4464 = vld [vmem:[%s4460 + $0x18] sm:$0xff]
        %v4465 = vld [vmem:[%s4460 + $0x20] sm:$0xff]
        %v4466 = vld [vmem:[%s4460 + $0x28] sm:$0xf]
        %v4467 = vld [vmem:[%s4460 + $0x30] sm:$0xff]
        %v4468 = vld [vmem:[%s4460 + $0x38] sm:$0xff]
        %v4469 = vld [vmem:[%s4460 + $0x40] sm:$0xf]
        %v4470 = vld [vmem:[%s4460 + $0x48] sm:$0xff]
        %v4471 = vld [vmem:[%s4460 + $0x50] sm:$0xff]
        %v4472 = vld [vmem:[%s4460 + $0x58] sm:$0xf]
        %v4473 = vld [vmem:[%s4460 + $0x60] sm:$0xff]
        %v4474 = vld [vmem:[%s4460 + $0x68] sm:$0xff]
        %v4475 = vld [vmem:[%s4460 + $0x70] sm:$0xf]
        %v4476 = vld [vmem:[%s4460 + $0x78] sm:$0xff]
        %v4477 = vld [vmem:[%s4460 + $0x80] sm:$0xff]
        %v4478 = vld [vmem:[%s4460 + $0x88] sm:$0xf]
        %v4479 = vld [vmem:[%s4460 + $0x90] sm:$0xff]
        %v4480 = vld [vmem:[%s4460 + $0x98] sm:$0xff]
        %v4481 = vld [vmem:[%s4460 + $0xa0] sm:$0xf]
        %v4482 = vld [vmem:[%s4460 + $0xa8] sm:$0xff]
        %v4483 = vld [vmem:[%s4460 + $0xb0] sm:$0xff]
        %v4484 = vld [vmem:[%s4460 + $0xb8] sm:$0xf]
        %v4485 = vld [vmem:[%s4460 + $0xc0] sm:$0xff]
        %v4486 = vld [vmem:[%s4460 + $0xc8] sm:$0xff]
        %v4487 = vld [vmem:[%s4460 + $0xd0] sm:$0xf]
        %v4488 = vld [vmem:[%s4460 + $0xd8] sm:$0xff]
        %v4489 = vld [vmem:[%s4460 + $0xe0] sm:$0xff]
        %v4490 = vld [vmem:[%s4460 + $0xe8] sm:$0xf]
        %v4491 = vld [vmem:[%s4460 + $0xf0] sm:$0xff]
        %v4492 = vld [vmem:[%s4460 + $0xf8] sm:$0xff]
        %v4493 = vld [vmem:[%s4460 + $0x100] sm:$0xf]
        %v4494 = vld [vmem:[%s4460 + $0x108] sm:$0xff]
        %v4495 = vld [vmem:[%s4460 + $0x110] sm:$0xff]
        %v4496 = vld [vmem:[%s4460 + $0x118] sm:$0xf]
        %v4497 = vld [vmem:[%s4460 + $0x120] sm:$0xff]
        %v4498 = vld [vmem:[%s4460 + $0x128] sm:$0xff]
        %v4499 = vld [vmem:[%s4460 + $0x130] sm:$0xf]
        %v4500 = vld [vmem:[%s4460 + $0x138] sm:$0xff]
        %v4501 = vld [vmem:[%s4460 + $0x140] sm:$0xff]
        %v4502 = vld [vmem:[%s4460 + $0x148] sm:$0xf]
        %v4503 = vld [vmem:[%s4460 + $0x150] sm:$0xff]
        %v4504 = vld [vmem:[%s4460 + $0x158] sm:$0xff]
        %v4505 = vld [vmem:[%s4460 + $0x160] sm:$0xf]
        %v4506 = vld [vmem:[%s4460 + $0x168] sm:$0xff]
        %v4507 = vld [vmem:[%s4460 + $0x170] sm:$0xff]
        %v4508 = vld [vmem:[%s4460 + $0x178] sm:$0xf]
        %4541 = vrot.lane.b32.xlu0 %v4461, 113
        %v4542 = vpop.permute.xlu0 %4541
        %4543 = vrot.lane.b32.xlu0 %v4462, 113
        %v4544 = vpop.permute.xlu0 %4543
        %4545 = vrot.lane.b32.xlu0 %v4464, 113
        %v4546 = vpop.permute.xlu0 %4545
        %4547 = vrot.lane.b32.xlu0 %v4465, 113
        %v4548 = vpop.permute.xlu0 %4547
        %4549 = vrot.lane.b32.xlu0 %v4467, 113
        %v4550 = vpop.permute.xlu0 %4549
        %4551 = vrot.lane.b32.xlu0 %v4468, 113
        %v4552 = vpop.permute.xlu0 %4551
        %4553 = vrot.lane.b32.xlu0 %v4470, 113
        %v4554 = vpop.permute.xlu0 %4553
        %4555 = vrot.lane.b32.xlu0 %v4471, 113
        %v4556 = vpop.permute.xlu0 %4555
        %4557 = vrot.lane.b32.xlu0 %v4473, 113
        %v4558 = vpop.permute.xlu0 %4557
        %4559 = vrot.lane.b32.xlu0 %v4474, 113
        %v4560 = vpop.permute.xlu0 %4559
        %4561 = vrot.lane.b32.xlu0 %v4476, 113
        %v4562 = vpop.permute.xlu0 %4561
        %4563 = vrot.lane.b32.xlu0 %v4477, 113
        %v4564 = vpop.permute.xlu0 %4563
        %4565 = vrot.lane.b32.xlu0 %v4479, 113
        %v4566 = vpop.permute.xlu0 %4565
        %4567 = vrot.lane.b32.xlu0 %v4480, 113
        %v4568 = vpop.permute.xlu0 %4567
        %4569 = vrot.lane.b32.xlu0 %v4482, 113
        %v4570 = vpop.permute.xlu0 %4569
        %4571 = vrot.lane.b32.xlu0 %v4483, 113
        %v4572 = vpop.permute.xlu0 %4571
        %4573 = vrot.lane.b32.xlu0 %v4485, 113
        %v4574 = vpop.permute.xlu0 %4573
        %4575 = vrot.lane.b32.xlu0 %v4486, 113
        %v4576 = vpop.permute.xlu0 %4575
        %4577 = vrot.lane.b32.xlu0 %v4488, 113
        %v4578 = vpop.permute.xlu0 %4577
        %4579 = vrot.lane.b32.xlu0 %v4489, 113
        %v4580 = vpop.permute.xlu0 %4579
        %4581 = vrot.lane.b32.xlu0 %v4491, 113
        %v4582 = vpop.permute.xlu0 %4581
        %4583 = vrot.lane.b32.xlu0 %v4492, 113
        %v4584 = vpop.permute.xlu0 %4583
        %4585 = vrot.lane.b32.xlu0 %v4494, 113
        %v4586 = vpop.permute.xlu0 %4585
        %4587 = vrot.lane.b32.xlu0 %v4495, 113
        %v4588 = vpop.permute.xlu0 %4587
        %4589 = vrot.lane.b32.xlu0 %v4497, 113
        %v4590 = vpop.permute.xlu0 %4589
        %4591 = vrot.lane.b32.xlu0 %v4498, 113
        %v4592 = vpop.permute.xlu0 %4591
        %4593 = vrot.lane.b32.xlu0 %v4500, 113
        %v4594 = vpop.permute.xlu0 %4593
        %4595 = vrot.lane.b32.xlu0 %v4501, 113
        %v4596 = vpop.permute.xlu0 %4595
        %4597 = vrot.lane.b32.xlu0 %v4503, 113
        %v4598 = vpop.permute.xlu0 %4597
        %4599 = vrot.lane.b32.xlu0 %v4504, 113
        %v4600 = vpop.permute.xlu0 %4599
        %4601 = vrot.lane.b32.xlu0 %v4506, 113
        %v4602 = vpop.permute.xlu0 %4601
        %4603 = vrot.lane.b32.xlu0 %v4507, 113
        %v4604 = vpop.permute.xlu0 %4603
        %v4637 = vadd.f32 %v4428, %v4542
        %v4638 = vadd.f32 %v4429, %v4544
        %v4639 = vadd.f32 %v4430, %v4546
        %v4640 = vadd.f32 %v4431, %v4548
        %v4641 = vadd.f32 %v4432, %v4550
        %v4642 = vadd.f32 %v4433, %v4552
        %v4643 = vadd.f32 %v4434, %v4554
        %v4644 = vadd.f32 %v4435, %v4556
        %v4645 = vadd.f32 %v4436, %v4558
        %v4646 = vadd.f32 %v4437, %v4560
        %v4647 = vadd.f32 %v4438, %v4562
        %v4648 = vadd.f32 %v4439, %v4564
        %v4649 = vadd.f32 %v4440, %v4566
        %v4650 = vadd.f32 %v4441, %v4568
        %v4651 = vadd.f32 %v4442, %v4570
        %v4652 = vadd.f32 %v4443, %v4572
        %v4653 = vadd.f32 %v4444, %v4574
        %v4654 = vadd.f32 %v4445, %v4576
        %v4655 = vadd.f32 %v4446, %v4578
        %v4656 = vadd.f32 %v4447, %v4580
        %v4657 = vadd.f32 %v4448, %v4582
        %v4658 = vadd.f32 %v4449, %v4584
        %v4659 = vadd.f32 %v4450, %v4586
        %v4660 = vadd.f32 %v4451, %v4588
        %v4661 = vadd.f32 %v4452, %v4590
        %v4662 = vadd.f32 %v4453, %v4592
        %v4663 = vadd.f32 %v4454, %v4594
        %v4664 = vadd.f32 %v4455, %v4596
        %v4665 = vadd.f32 %v4456, %v4598
        %v4666 = vadd.f32 %v4457, %v4600
        %v4667 = vadd.f32 %v4458, %v4602
        %v4668 = vadd.f32 %v4459, %v4604
        %v4685 = vrot.slane %v4461, 1
        %v4686 = vrot.slane %v4462, 1
        %v4687 = vsel %vm1512, %v4685, %v4686
        %v4688 = vrot.slane %v4463, 1
        %v4689 = vsel %vm1512, %v4686, %v4688
        %v4690 = vrot.slane %v4464, 1
        %v4691 = vrot.slane %v4465, 1
        %v4692 = vsel %vm1512, %v4690, %v4691
        %v4693 = vrot.slane %v4466, 1
        %v4694 = vsel %vm1512, %v4691, %v4693
        %v4695 = vrot.slane %v4467, 1
        %v4696 = vrot.slane %v4468, 1
        %v4697 = vsel %vm1512, %v4695, %v4696
        %v4698 = vrot.slane %v4469, 1
        %v4699 = vsel %vm1512, %v4696, %v4698
        %v4700 = vrot.slane %v4470, 1
        %v4701 = vrot.slane %v4471, 1
        %v4702 = vsel %vm1512, %v4700, %v4701
        %v4703 = vrot.slane %v4472, 1
        %v4704 = vsel %vm1512, %v4701, %v4703
        %v4705 = vrot.slane %v4473, 1
        %v4706 = vrot.slane %v4474, 1
        %v4707 = vsel %vm1512, %v4705, %v4706
        %v4708 = vrot.slane %v4475, 1
        %v4709 = vsel %vm1512, %v4706, %v4708
        %v4710 = vrot.slane %v4476, 1
        %v4711 = vrot.slane %v4477, 1
        %v4712 = vsel %vm1512, %v4710, %v4711
        %v4713 = vrot.slane %v4478, 1
        %v4714 = vsel %vm1512, %v4711, %v4713
        %v4715 = vrot.slane %v4479, 1
        %v4716 = vrot.slane %v4480, 1
        %v4717 = vsel %vm1512, %v4715, %v4716
        %v4718 = vrot.slane %v4481, 1
        %v4719 = vsel %vm1512, %v4716, %v4718
        %v4720 = vrot.slane %v4482, 1
        %v4721 = vrot.slane %v4483, 1
        %v4722 = vsel %vm1512, %v4720, %v4721
        %v4723 = vrot.slane %v4484, 1
        %v4724 = vsel %vm1512, %v4721, %v4723
        %v4725 = vrot.slane %v4485, 1
        %v4726 = vrot.slane %v4486, 1
        %v4727 = vsel %vm1512, %v4725, %v4726
        %v4728 = vrot.slane %v4487, 1
        %v4729 = vsel %vm1512, %v4726, %v4728
        %v4730 = vrot.slane %v4488, 1
        %v4731 = vrot.slane %v4489, 1
        %v4732 = vsel %vm1512, %v4730, %v4731
        %v4733 = vrot.slane %v4490, 1
        %v4734 = vsel %vm1512, %v4731, %v4733
        %v4735 = vrot.slane %v4491, 1
        %v4736 = vrot.slane %v4492, 1
        %v4737 = vsel %vm1512, %v4735, %v4736
        %v4738 = vrot.slane %v4493, 1
        %v4739 = vsel %vm1512, %v4736, %v4738
        %v4740 = vrot.slane %v4494, 1
        %v4741 = vrot.slane %v4495, 1
        %v4742 = vsel %vm1512, %v4740, %v4741
        %v4743 = vrot.slane %v4496, 1
        %v4744 = vsel %vm1512, %v4741, %v4743
        %v4745 = vrot.slane %v4497, 1
        %v4746 = vrot.slane %v4498, 1
        %v4747 = vsel %vm1512, %v4745, %v4746
        %v4748 = vrot.slane %v4499, 1
        %v4749 = vsel %vm1512, %v4746, %v4748
        %v4750 = vrot.slane %v4500, 1
        %v4751 = vrot.slane %v4501, 1
        %v4752 = vsel %vm1512, %v4750, %v4751
        %v4753 = vrot.slane %v4502, 1
        %v4754 = vsel %vm1512, %v4751, %v4753
        %v4755 = vrot.slane %v4503, 1
        %v4756 = vrot.slane %v4504, 1
        %v4757 = vsel %vm1512, %v4755, %v4756
        %v4758 = vrot.slane %v4505, 1
        %v4759 = vsel %vm1512, %v4756, %v4758
        %v4760 = vrot.slane %v4506, 1
        %v4761 = vrot.slane %v4507, 1
        %v4762 = vsel %vm1512, %v4760, %v4761
        %v4763 = vrot.slane %v4508, 1
        %v4764 = vsel %vm1512, %v4761, %v4763
        %4765 = vrot.lane.b32.xlu0 %v4687, 112
        %v4766 = vpop.permute.xlu0 %4765
        %4767 = vrot.lane.b32.xlu0 %v4689, 112
        %v4768 = vpop.permute.xlu0 %4767
        %4769 = vrot.lane.b32.xlu0 %v4692, 112
        %v4770 = vpop.permute.xlu0 %4769
        %4771 = vrot.lane.b32.xlu0 %v4694, 112
        %v4772 = vpop.permute.xlu0 %4771
        %4773 = vrot.lane.b32.xlu0 %v4697, 112
        %v4774 = vpop.permute.xlu0 %4773
        %4775 = vrot.lane.b32.xlu0 %v4699, 112
        %v4776 = vpop.permute.xlu0 %4775
        %4777 = vrot.lane.b32.xlu0 %v4702, 112
        %v4778 = vpop.permute.xlu0 %4777
        %4779 = vrot.lane.b32.xlu0 %v4704, 112
        %v4780 = vpop.permute.xlu0 %4779
        %4781 = vrot.lane.b32.xlu0 %v4707, 112
        %v4782 = vpop.permute.xlu0 %4781
        %4783 = vrot.lane.b32.xlu0 %v4709, 112
        %v4784 = vpop.permute.xlu0 %4783
        %4785 = vrot.lane.b32.xlu0 %v4712, 112
        %v4786 = vpop.permute.xlu0 %4785
        %4787 = vrot.lane.b32.xlu0 %v4714, 112
        %v4788 = vpop.permute.xlu0 %4787
        %4789 = vrot.lane.b32.xlu0 %v4717, 112
        %v4790 = vpop.permute.xlu0 %4789
        %4791 = vrot.lane.b32.xlu0 %v4719, 112
        %v4792 = vpop.permute.xlu0 %4791
        %4793 = vrot.lane.b32.xlu0 %v4722, 112
        %v4794 = vpop.permute.xlu0 %4793
        %4795 = vrot.lane.b32.xlu0 %v4724, 112
        %v4796 = vpop.permute.xlu0 %4795
        %4797 = vrot.lane.b32.xlu0 %v4727, 112
        %v4798 = vpop.permute.xlu0 %4797
        %4799 = vrot.lane.b32.xlu0 %v4729, 112
        %v4800 = vpop.permute.xlu0 %4799
        %4801 = vrot.lane.b32.xlu0 %v4732, 112
        %v4802 = vpop.permute.xlu0 %4801
        %4803 = vrot.lane.b32.xlu0 %v4734, 112
        %v4804 = vpop.permute.xlu0 %4803
        %4805 = vrot.lane.b32.xlu0 %v4737, 112
        %v4806 = vpop.permute.xlu0 %4805
        %4807 = vrot.lane.b32.xlu0 %v4739, 112
        %v4808 = vpop.permute.xlu0 %4807
        %4809 = vrot.lane.b32.xlu0 %v4742, 112
        %v4810 = vpop.permute.xlu0 %4809
        %4811 = vrot.lane.b32.xlu0 %v4744, 112
        %v4812 = vpop.permute.xlu0 %4811
        %4813 = vrot.lane.b32.xlu0 %v4747, 112
        %v4814 = vpop.permute.xlu0 %4813
        %4815 = vrot.lane.b32.xlu0 %v4749, 112
        %v4816 = vpop.permute.xlu0 %4815
        %4817 = vrot.lane.b32.xlu0 %v4752, 112
        %v4818 = vpop.permute.xlu0 %4817
        %4819 = vrot.lane.b32.xlu0 %v4754, 112
        %v4820 = vpop.permute.xlu0 %4819
        %4821 = vrot.lane.b32.xlu0 %v4757, 112
        %v4822 = vpop.permute.xlu0 %4821
        %4823 = vrot.lane.b32.xlu0 %v4759, 112
        %v4824 = vpop.permute.xlu0 %4823
        %4825 = vrot.lane.b32.xlu0 %v4762, 112
        %v4826 = vpop.permute.xlu0 %4825
        %4827 = vrot.lane.b32.xlu0 %v4764, 112
        %v4828 = vpop.permute.xlu0 %4827
        %v4861 = vadd.f32 %v4637, %v4766
        %v4862 = vadd.f32 %v4638, %v4768
        %v4863 = vadd.f32 %v4639, %v4770
        %v4864 = vadd.f32 %v4640, %v4772
        %v4865 = vadd.f32 %v4641, %v4774
        %v4866 = vadd.f32 %v4642, %v4776
        %v4867 = vadd.f32 %v4643, %v4778
        %v4868 = vadd.f32 %v4644, %v4780
        %v4869 = vadd.f32 %v4645, %v4782
        %v4870 = vadd.f32 %v4646, %v4784
        %v4871 = vadd.f32 %v4647, %v4786
        %v4872 = vadd.f32 %v4648, %v4788
        %v4873 = vadd.f32 %v4649, %v4790
        %v4874 = vadd.f32 %v4650, %v4792
        %v4875 = vadd.f32 %v4651, %v4794
        %v4876 = vadd.f32 %v4652, %v4796
        %v4877 = vadd.f32 %v4653, %v4798
        %v4878 = vadd.f32 %v4654, %v4800
        %v4879 = vadd.f32 %v4655, %v4802
        %v4880 = vadd.f32 %v4656, %v4804
        %v4881 = vadd.f32 %v4657, %v4806
        %v4882 = vadd.f32 %v4658, %v4808
        %v4883 = vadd.f32 %v4659, %v4810
        %v4884 = vadd.f32 %v4660, %v4812
        %v4885 = vadd.f32 %v4661, %v4814
        %v4886 = vadd.f32 %v4662, %v4816
        %v4887 = vadd.f32 %v4663, %v4818
        %v4888 = vadd.f32 %v4664, %v4820
        %v4889 = vadd.f32 %v4665, %v4822
        %v4890 = vadd.f32 %v4666, %v4824
        %v4891 = vadd.f32 %v4667, %v4826
        %v4892 = vadd.f32 %v4668, %v4828
        %v4893 = vrot.slane %v4461, 2
        %v4894 = vrot.slane %v4462, 2
        %v4895 = vsel %vm1721, %v4893, %v4894
        %v4896 = vrot.slane %v4463, 2
        %v4897 = vsel %vm1721, %v4894, %v4896
        %v4898 = vrot.slane %v4464, 2
        %v4899 = vrot.slane %v4465, 2
        %v4900 = vsel %vm1721, %v4898, %v4899
        %v4901 = vrot.slane %v4466, 2
        %v4902 = vsel %vm1721, %v4899, %v4901
        %v4903 = vrot.slane %v4467, 2
        %v4904 = vrot.slane %v4468, 2
        %v4905 = vsel %vm1721, %v4903, %v4904
        %v4906 = vrot.slane %v4469, 2
        %v4907 = vsel %vm1721, %v4904, %v4906
        %v4908 = vrot.slane %v4470, 2
        %v4909 = vrot.slane %v4471, 2
        %v4910 = vsel %vm1721, %v4908, %v4909
        %v4911 = vrot.slane %v4472, 2
        %v4912 = vsel %vm1721, %v4909, %v4911
        %v4913 = vrot.slane %v4473, 2
        %v4914 = vrot.slane %v4474, 2
        %v4915 = vsel %vm1721, %v4913, %v4914
        %v4916 = vrot.slane %v4475, 2
        %v4917 = vsel %vm1721, %v4914, %v4916
        %v4918 = vrot.slane %v4476, 2
        %v4919 = vrot.slane %v4477, 2
        %v4920 = vsel %vm1721, %v4918, %v4919
        %v4921 = vrot.slane %v4478, 2
        %v4922 = vsel %vm1721, %v4919, %v4921
        %v4923 = vrot.slane %v4479, 2
        %v4924 = vrot.slane %v4480, 2
        %v4925 = vsel %vm1721, %v4923, %v4924
        %v4926 = vrot.slane %v4481, 2
        %v4927 = vsel %vm1721, %v4924, %v4926
        %v4928 = vrot.slane %v4482, 2
        %v4929 = vrot.slane %v4483, 2
        %v4930 = vsel %vm1721, %v4928, %v4929
        %v4931 = vrot.slane %v4484, 2
        %v4932 = vsel %vm1721, %v4929, %v4931
        %v4933 = vrot.slane %v4485, 2
        %v4934 = vrot.slane %v4486, 2
        %v4935 = vsel %vm1721, %v4933, %v4934
        %v4936 = vrot.slane %v4487, 2
        %v4937 = vsel %vm1721, %v4934, %v4936
        %v4938 = vrot.slane %v4488, 2
        %v4939 = vrot.slane %v4489, 2
        %v4940 = vsel %vm1721, %v4938, %v4939
        %v4941 = vrot.slane %v4490, 2
        %v4942 = vsel %vm1721, %v4939, %v4941
        %v4943 = vrot.slane %v4491, 2
        %v4944 = vrot.slane %v4492, 2
        %v4945 = vsel %vm1721, %v4943, %v4944
        %v4946 = vrot.slane %v4493, 2
        %v4947 = vsel %vm1721, %v4944, %v4946
        %v4948 = vrot.slane %v4494, 2
        %v4949 = vrot.slane %v4495, 2
        %v4950 = vsel %vm1721, %v4948, %v4949
        %v4951 = vrot.slane %v4496, 2
        %v4952 = vsel %vm1721, %v4949, %v4951
        %v4953 = vrot.slane %v4497, 2
        %v4954 = vrot.slane %v4498, 2
        %v4955 = vsel %vm1721, %v4953, %v4954
        %v4956 = vrot.slane %v4499, 2
        %v4957 = vsel %vm1721, %v4954, %v4956
        %v4958 = vrot.slane %v4500, 2
        %v4959 = vrot.slane %v4501, 2
        %v4960 = vsel %vm1721, %v4958, %v4959
        %v4961 = vrot.slane %v4502, 2
        %v4962 = vsel %vm1721, %v4959, %v4961
        %v4963 = vrot.slane %v4503, 2
        %v4964 = vrot.slane %v4504, 2
        %v4965 = vsel %vm1721, %v4963, %v4964
        %v4966 = vrot.slane %v4505, 2
        %v4967 = vsel %vm1721, %v4964, %v4966
        %v4968 = vrot.slane %v4506, 2
        %v4969 = vrot.slane %v4507, 2
        %v4970 = vsel %vm1721, %v4968, %v4969
        %v4971 = vrot.slane %v4508, 2
        %v4972 = vsel %vm1721, %v4969, %v4971
        %4973 = vrot.lane.b32.xlu0 %v4895, 111
        %v4974 = vpop.permute.xlu0 %4973
        %4975 = vrot.lane.b32.xlu0 %v4897, 111
        %v4976 = vpop.permute.xlu0 %4975
        %4977 = vrot.lane.b32.xlu0 %v4900, 111
        %v4978 = vpop.permute.xlu0 %4977
        %4979 = vrot.lane.b32.xlu0 %v4902, 111
        %v4980 = vpop.permute.xlu0 %4979
        %4981 = vrot.lane.b32.xlu0 %v4905, 111
        %v4982 = vpop.permute.xlu0 %4981
        %4983 = vrot.lane.b32.xlu0 %v4907, 111
        %v4984 = vpop.permute.xlu0 %4983
        %4985 = vrot.lane.b32.xlu0 %v4910, 111
        %v4986 = vpop.permute.xlu0 %4985
        %4987 = vrot.lane.b32.xlu0 %v4912, 111
        %v4988 = vpop.permute.xlu0 %4987
        %4989 = vrot.lane.b32.xlu0 %v4915, 111
        %v4990 = vpop.permute.xlu0 %4989
        %4991 = vrot.lane.b32.xlu0 %v4917, 111
        %v4992 = vpop.permute.xlu0 %4991
        %4993 = vrot.lane.b32.xlu0 %v4920, 111
        %v4994 = vpop.permute.xlu0 %4993
        %4995 = vrot.lane.b32.xlu0 %v4922, 111
        %v4996 = vpop.permute.xlu0 %4995
        %4997 = vrot.lane.b32.xlu0 %v4925, 111
        %v4998 = vpop.permute.xlu0 %4997
        %4999 = vrot.lane.b32.xlu0 %v4927, 111
        %v5000 = vpop.permute.xlu0 %4999
        %5001 = vrot.lane.b32.xlu0 %v4930, 111
        %v5002 = vpop.permute.xlu0 %5001
        %5003 = vrot.lane.b32.xlu0 %v4932, 111
        %v5004 = vpop.permute.xlu0 %5003
        %5005 = vrot.lane.b32.xlu0 %v4935, 111
        %v5006 = vpop.permute.xlu0 %5005
        %5007 = vrot.lane.b32.xlu0 %v4937, 111
        %v5008 = vpop.permute.xlu0 %5007
        %5009 = vrot.lane.b32.xlu0 %v4940, 111
        %v5010 = vpop.permute.xlu0 %5009
        %5011 = vrot.lane.b32.xlu0 %v4942, 111
        %v5012 = vpop.permute.xlu0 %5011
        %5013 = vrot.lane.b32.xlu0 %v4945, 111
        %v5014 = vpop.permute.xlu0 %5013
        %5015 = vrot.lane.b32.xlu0 %v4947, 111
        %v5016 = vpop.permute.xlu0 %5015
        %5017 = vrot.lane.b32.xlu0 %v4950, 111
        %v5018 = vpop.permute.xlu0 %5017
        %5019 = vrot.lane.b32.xlu0 %v4952, 111
        %v5020 = vpop.permute.xlu0 %5019
        %5021 = vrot.lane.b32.xlu0 %v4955, 111
        %v5022 = vpop.permute.xlu0 %5021
        %5023 = vrot.lane.b32.xlu0 %v4957, 111
        %v5024 = vpop.permute.xlu0 %5023
        %5025 = vrot.lane.b32.xlu0 %v4960, 111
        %v5026 = vpop.permute.xlu0 %5025
        %5027 = vrot.lane.b32.xlu0 %v4962, 111
        %v5028 = vpop.permute.xlu0 %5027
        %5029 = vrot.lane.b32.xlu0 %v4965, 111
        %v5030 = vpop.permute.xlu0 %5029
        %5031 = vrot.lane.b32.xlu0 %v4967, 111
        %v5032 = vpop.permute.xlu0 %5031
        %5033 = vrot.lane.b32.xlu0 %v4970, 111
        %v5034 = vpop.permute.xlu0 %5033
        %5035 = vrot.lane.b32.xlu0 %v4972, 111
        %v5036 = vpop.permute.xlu0 %5035
        %v5069 = vadd.f32 %v4861, %v4974
        %v5070 = vadd.f32 %v4862, %v4976
        %v5071 = vadd.f32 %v4863, %v4978
        %v5072 = vadd.f32 %v4864, %v4980
        %v5073 = vadd.f32 %v4865, %v4982
        %v5074 = vadd.f32 %v4866, %v4984
        %v5075 = vadd.f32 %v4867, %v4986
        %v5076 = vadd.f32 %v4868, %v4988
        %v5077 = vadd.f32 %v4869, %v4990
        %v5078 = vadd.f32 %v4870, %v4992
        %v5079 = vadd.f32 %v4871, %v4994
        %v5080 = vadd.f32 %v4872, %v4996
        %v5081 = vadd.f32 %v4873, %v4998
        %v5082 = vadd.f32 %v4874, %v5000
        %v5083 = vadd.f32 %v4875, %v5002
        %v5084 = vadd.f32 %v4876, %v5004
        %v5085 = vadd.f32 %v4877, %v5006
        %v5086 = vadd.f32 %v4878, %v5008
        %v5087 = vadd.f32 %v4879, %v5010
        %v5088 = vadd.f32 %v4880, %v5012
        %v5089 = vadd.f32 %v4881, %v5014
        %v5090 = vadd.f32 %v4882, %v5016
        %v5091 = vadd.f32 %v4883, %v5018
        %v5092 = vadd.f32 %v4884, %v5020
        %v5093 = vadd.f32 %v4885, %v5022
        %v5094 = vadd.f32 %v4886, %v5024
        %v5095 = vadd.f32 %v4887, %v5026
        %v5096 = vadd.f32 %v4888, %v5028
        %v5097 = vadd.f32 %v4889, %v5030
        %v5098 = vadd.f32 %v4890, %v5032
        %v5099 = vadd.f32 %v4891, %v5034
        %v5100 = vadd.f32 %v4892, %v5036
        %v5101 = vrot.slane %v4461, 3
        %v5102 = vrot.slane %v4462, 3
        %v5103 = vsel %vm1930, %v5101, %v5102
        %v5104 = vrot.slane %v4463, 3
        %v5105 = vsel %vm1930, %v5102, %v5104
        %v5106 = vrot.slane %v4464, 3
        %v5107 = vrot.slane %v4465, 3
        %v5108 = vsel %vm1930, %v5106, %v5107
        %v5109 = vrot.slane %v4466, 3
        %v5110 = vsel %vm1930, %v5107, %v5109
        %v5111 = vrot.slane %v4467, 3
        %v5112 = vrot.slane %v4468, 3
        %v5113 = vsel %vm1930, %v5111, %v5112
        %v5114 = vrot.slane %v4469, 3
        %v5115 = vsel %vm1930, %v5112, %v5114
        %v5116 = vrot.slane %v4470, 3
        %v5117 = vrot.slane %v4471, 3
        %v5118 = vsel %vm1930, %v5116, %v5117
        %v5119 = vrot.slane %v4472, 3
        %v5120 = vsel %vm1930, %v5117, %v5119
        %v5121 = vrot.slane %v4473, 3
        %v5122 = vrot.slane %v4474, 3
        %v5123 = vsel %vm1930, %v5121, %v5122
        %v5124 = vrot.slane %v4475, 3
        %v5125 = vsel %vm1930, %v5122, %v5124
        %v5126 = vrot.slane %v4476, 3
        %v5127 = vrot.slane %v4477, 3
        %v5128 = vsel %vm1930, %v5126, %v5127
        %v5129 = vrot.slane %v4478, 3
        %v5130 = vsel %vm1930, %v5127, %v5129
        %v5131 = vrot.slane %v4479, 3
        %v5132 = vrot.slane %v4480, 3
        %v5133 = vsel %vm1930, %v5131, %v5132
        %v5134 = vrot.slane %v4481, 3
        %v5135 = vsel %vm1930, %v5132, %v5134
        %v5136 = vrot.slane %v4482, 3
        %v5137 = vrot.slane %v4483, 3
        %v5138 = vsel %vm1930, %v5136, %v5137
        %v5139 = vrot.slane %v4484, 3
        %v5140 = vsel %vm1930, %v5137, %v5139
        %v5141 = vrot.slane %v4485, 3
        %v5142 = vrot.slane %v4486, 3
        %v5143 = vsel %vm1930, %v5141, %v5142
        %v5144 = vrot.slane %v4487, 3
        %v5145 = vsel %vm1930, %v5142, %v5144
        %v5146 = vrot.slane %v4488, 3
        %v5147 = vrot.slane %v4489, 3
        %v5148 = vsel %vm1930, %v5146, %v5147
        %v5149 = vrot.slane %v4490, 3
        %v5150 = vsel %vm1930, %v5147, %v5149
        %v5151 = vrot.slane %v4491, 3
        %v5152 = vrot.slane %v4492, 3
        %v5153 = vsel %vm1930, %v5151, %v5152
        %v5154 = vrot.slane %v4493, 3
        %v5155 = vsel %vm1930, %v5152, %v5154
        %v5156 = vrot.slane %v4494, 3
        %v5157 = vrot.slane %v4495, 3
        %v5158 = vsel %vm1930, %v5156, %v5157
        %v5159 = vrot.slane %v4496, 3
        %v5160 = vsel %vm1930, %v5157, %v5159
        %v5161 = vrot.slane %v4497, 3
        %v5162 = vrot.slane %v4498, 3
        %v5163 = vsel %vm1930, %v5161, %v5162
        %v5164 = vrot.slane %v4499, 3
        %v5165 = vsel %vm1930, %v5162, %v5164
        %v5166 = vrot.slane %v4500, 3
        %v5167 = vrot.slane %v4501, 3
        %v5168 = vsel %vm1930, %v5166, %v5167
        %v5169 = vrot.slane %v4502, 3
        %v5170 = vsel %vm1930, %v5167, %v5169
        %v5171 = vrot.slane %v4503, 3
        %v5172 = vrot.slane %v4504, 3
        %v5173 = vsel %vm1930, %v5171, %v5172
        %v5174 = vrot.slane %v4505, 3
        %v5175 = vsel %vm1930, %v5172, %v5174
        %v5176 = vrot.slane %v4506, 3
        %v5177 = vrot.slane %v4507, 3
        %v5178 = vsel %vm1930, %v5176, %v5177
        %v5179 = vrot.slane %v4508, 3
        %v5180 = vsel %vm1930, %v5177, %v5179
        %5181 = vrot.lane.b32.xlu0 %v5103, 110
        %v5182 = vpop.permute.xlu0 %5181
        %5183 = vrot.lane.b32.xlu0 %v5105, 110
        %v5184 = vpop.permute.xlu0 %5183
        %5185 = vrot.lane.b32.xlu0 %v5108, 110
        %v5186 = vpop.permute.xlu0 %5185
        %5187 = vrot.lane.b32.xlu0 %v5110, 110
        %v5188 = vpop.permute.xlu0 %5187
        %5189 = vrot.lane.b32.xlu0 %v5113, 110
        %v5190 = vpop.permute.xlu0 %5189
        %5191 = vrot.lane.b32.xlu0 %v5115, 110
        %v5192 = vpop.permute.xlu0 %5191
        %5193 = vrot.lane.b32.xlu0 %v5118, 110
        %v5194 = vpop.permute.xlu0 %5193
        %5195 = vrot.lane.b32.xlu0 %v5120, 110
        %v5196 = vpop.permute.xlu0 %5195
        %5197 = vrot.lane.b32.xlu0 %v5123, 110
        %v5198 = vpop.permute.xlu0 %5197
        %5199 = vrot.lane.b32.xlu0 %v5125, 110
        %v5200 = vpop.permute.xlu0 %5199
        %5201 = vrot.lane.b32.xlu0 %v5128, 110
        %v5202 = vpop.permute.xlu0 %5201
        %5203 = vrot.lane.b32.xlu0 %v5130, 110
        %v5204 = vpop.permute.xlu0 %5203
        %5205 = vrot.lane.b32.xlu0 %v5133, 110
        %v5206 = vpop.permute.xlu0 %5205
        %5207 = vrot.lane.b32.xlu0 %v5135, 110
        %v5208 = vpop.permute.xlu0 %5207
        %5209 = vrot.lane.b32.xlu0 %v5138, 110
        %v5210 = vpop.permute.xlu0 %5209
        %5211 = vrot.lane.b32.xlu0 %v5140, 110
        %v5212 = vpop.permute.xlu0 %5211
        %5213 = vrot.lane.b32.xlu0 %v5143, 110
        %v5214 = vpop.permute.xlu0 %5213
        %5215 = vrot.lane.b32.xlu0 %v5145, 110
        %v5216 = vpop.permute.xlu0 %5215
        %5217 = vrot.lane.b32.xlu0 %v5148, 110
        %v5218 = vpop.permute.xlu0 %5217
        %5219 = vrot.lane.b32.xlu0 %v5150, 110
        %v5220 = vpop.permute.xlu0 %5219
        %5221 = vrot.lane.b32.xlu0 %v5153, 110
        %v5222 = vpop.permute.xlu0 %5221
        %5223 = vrot.lane.b32.xlu0 %v5155, 110
        %v5224 = vpop.permute.xlu0 %5223
        %5225 = vrot.lane.b32.xlu0 %v5158, 110
        %v5226 = vpop.permute.xlu0 %5225
        %5227 = vrot.lane.b32.xlu0 %v5160, 110
        %v5228 = vpop.permute.xlu0 %5227
        %5229 = vrot.lane.b32.xlu0 %v5163, 110
        %v5230 = vpop.permute.xlu0 %5229
        %5231 = vrot.lane.b32.xlu0 %v5165, 110
        %v5232 = vpop.permute.xlu0 %5231
        %5233 = vrot.lane.b32.xlu0 %v5168, 110
        %v5234 = vpop.permute.xlu0 %5233
        %5235 = vrot.lane.b32.xlu0 %v5170, 110
        %v5236 = vpop.permute.xlu0 %5235
        %5237 = vrot.lane.b32.xlu0 %v5173, 110
        %v5238 = vpop.permute.xlu0 %5237
        %5239 = vrot.lane.b32.xlu0 %v5175, 110
        %v5240 = vpop.permute.xlu0 %5239
        %5241 = vrot.lane.b32.xlu0 %v5178, 110
        %v5242 = vpop.permute.xlu0 %5241
        %5243 = vrot.lane.b32.xlu0 %v5180, 110
        %v5244 = vpop.permute.xlu0 %5243
        %v5277 = vadd.f32 %v5069, %v5182
        %v5278 = vadd.f32 %v5070, %v5184
        %v5279 = vadd.f32 %v5071, %v5186
        %v5280 = vadd.f32 %v5072, %v5188
        %v5281 = vadd.f32 %v5073, %v5190
        %v5282 = vadd.f32 %v5074, %v5192
        %v5283 = vadd.f32 %v5075, %v5194
        %v5284 = vadd.f32 %v5076, %v5196
        %v5285 = vadd.f32 %v5077, %v5198
        %v5286 = vadd.f32 %v5078, %v5200
        %v5287 = vadd.f32 %v5079, %v5202
        %v5288 = vadd.f32 %v5080, %v5204
        %v5289 = vadd.f32 %v5081, %v5206
        %v5290 = vadd.f32 %v5082, %v5208
        %v5291 = vadd.f32 %v5083, %v5210
        %v5292 = vadd.f32 %v5084, %v5212
        %v5293 = vadd.f32 %v5085, %v5214
        %v5294 = vadd.f32 %v5086, %v5216
        %v5295 = vadd.f32 %v5087, %v5218
        %v5296 = vadd.f32 %v5088, %v5220
        %v5297 = vadd.f32 %v5089, %v5222
        %v5298 = vadd.f32 %v5090, %v5224
        %v5299 = vadd.f32 %v5091, %v5226
        %v5300 = vadd.f32 %v5092, %v5228
        %v5301 = vadd.f32 %v5093, %v5230
        %v5302 = vadd.f32 %v5094, %v5232
        %v5303 = vadd.f32 %v5095, %v5234
        %v5304 = vadd.f32 %v5096, %v5236
        %v5305 = vadd.f32 %v5097, %v5238
        %v5306 = vadd.f32 %v5098, %v5240
        %v5307 = vadd.f32 %v5099, %v5242
        %v5308 = vadd.f32 %v5100, %v5244
        %v5309 = vrot.slane %v4461, 4
        %v5310 = vrot.slane %v4462, 4
        %v5311 = vsel %vm2139, %v5309, %v5310
        %v5312 = vrot.slane %v4463, 4
        %v5313 = vsel %vm2139, %v5310, %v5312
        %v5314 = vrot.slane %v4464, 4
        %v5315 = vrot.slane %v4465, 4
        %v5316 = vsel %vm2139, %v5314, %v5315
        %v5317 = vrot.slane %v4466, 4
        %v5318 = vsel %vm2139, %v5315, %v5317
        %v5319 = vrot.slane %v4467, 4
        %v5320 = vrot.slane %v4468, 4
        %v5321 = vsel %vm2139, %v5319, %v5320
        %v5322 = vrot.slane %v4469, 4
        %v5323 = vsel %vm2139, %v5320, %v5322
        %v5324 = vrot.slane %v4470, 4
        %v5325 = vrot.slane %v4471, 4
        %v5326 = vsel %vm2139, %v5324, %v5325
        %v5327 = vrot.slane %v4472, 4
        %v5328 = vsel %vm2139, %v5325, %v5327
        %v5329 = vrot.slane %v4473, 4
        %v5330 = vrot.slane %v4474, 4
        %v5331 = vsel %vm2139, %v5329, %v5330
        %v5332 = vrot.slane %v4475, 4
        %v5333 = vsel %vm2139, %v5330, %v5332
        %v5334 = vrot.slane %v4476, 4
        %v5335 = vrot.slane %v4477, 4
        %v5336 = vsel %vm2139, %v5334, %v5335
        %v5337 = vrot.slane %v4478, 4
        %v5338 = vsel %vm2139, %v5335, %v5337
        %v5339 = vrot.slane %v4479, 4
        %v5340 = vrot.slane %v4480, 4
        %v5341 = vsel %vm2139, %v5339, %v5340
        %v5342 = vrot.slane %v4481, 4
        %v5343 = vsel %vm2139, %v5340, %v5342
        %v5344 = vrot.slane %v4482, 4
        %v5345 = vrot.slane %v4483, 4
        %v5346 = vsel %vm2139, %v5344, %v5345
        %v5347 = vrot.slane %v4484, 4
        %v5348 = vsel %vm2139, %v5345, %v5347
        %v5349 = vrot.slane %v4485, 4
        %v5350 = vrot.slane %v4486, 4
        %v5351 = vsel %vm2139, %v5349, %v5350
        %v5352 = vrot.slane %v4487, 4
        %v5353 = vsel %vm2139, %v5350, %v5352
        %v5354 = vrot.slane %v4488, 4
        %v5355 = vrot.slane %v4489, 4
        %v5356 = vsel %vm2139, %v5354, %v5355
        %v5357 = vrot.slane %v4490, 4
        %v5358 = vsel %vm2139, %v5355, %v5357
        %v5359 = vrot.slane %v4491, 4
        %v5360 = vrot.slane %v4492, 4
        %v5361 = vsel %vm2139, %v5359, %v5360
        %v5362 = vrot.slane %v4493, 4
        %v5363 = vsel %vm2139, %v5360, %v5362
        %v5364 = vrot.slane %v4494, 4
        %v5365 = vrot.slane %v4495, 4
        %v5366 = vsel %vm2139, %v5364, %v5365
        %v5367 = vrot.slane %v4496, 4
        %v5368 = vsel %vm2139, %v5365, %v5367
        %v5369 = vrot.slane %v4497, 4
        %v5370 = vrot.slane %v4498, 4
        %v5371 = vsel %vm2139, %v5369, %v5370
        %v5372 = vrot.slane %v4499, 4
        %v5373 = vsel %vm2139, %v5370, %v5372
        %v5374 = vrot.slane %v4500, 4
        %v5375 = vrot.slane %v4501, 4
        %v5376 = vsel %vm2139, %v5374, %v5375
        %v5377 = vrot.slane %v4502, 4
        %v5378 = vsel %vm2139, %v5375, %v5377
        %v5379 = vrot.slane %v4503, 4
        %v5380 = vrot.slane %v4504, 4
        %v5381 = vsel %vm2139, %v5379, %v5380
        %v5382 = vrot.slane %v4505, 4
        %v5383 = vsel %vm2139, %v5380, %v5382
        %v5384 = vrot.slane %v4506, 4
        %v5385 = vrot.slane %v4507, 4
        %v5386 = vsel %vm2139, %v5384, %v5385
        %v5387 = vrot.slane %v4508, 4
        %v5388 = vsel %vm2139, %v5385, %v5387
        %5389 = vrot.lane.b32.xlu0 %v5311, 109
        %v5390 = vpop.permute.xlu0 %5389
        %5391 = vrot.lane.b32.xlu0 %v5313, 109
        %v5392 = vpop.permute.xlu0 %5391
        %5393 = vrot.lane.b32.xlu0 %v5316, 109
        %v5394 = vpop.permute.xlu0 %5393
        %5395 = vrot.lane.b32.xlu0 %v5318, 109
        %v5396 = vpop.permute.xlu0 %5395
        %5397 = vrot.lane.b32.xlu0 %v5321, 109
        %v5398 = vpop.permute.xlu0 %5397
        %5399 = vrot.lane.b32.xlu0 %v5323, 109
        %v5400 = vpop.permute.xlu0 %5399
        %5401 = vrot.lane.b32.xlu0 %v5326, 109
        %v5402 = vpop.permute.xlu0 %5401
        %5403 = vrot.lane.b32.xlu0 %v5328, 109
        %v5404 = vpop.permute.xlu0 %5403
        %5405 = vrot.lane.b32.xlu0 %v5331, 109
        %v5406 = vpop.permute.xlu0 %5405
        %5407 = vrot.lane.b32.xlu0 %v5333, 109
        %v5408 = vpop.permute.xlu0 %5407
        %5409 = vrot.lane.b32.xlu0 %v5336, 109
        %v5410 = vpop.permute.xlu0 %5409
        %5411 = vrot.lane.b32.xlu0 %v5338, 109
        %v5412 = vpop.permute.xlu0 %5411
        %5413 = vrot.lane.b32.xlu0 %v5341, 109
        %v5414 = vpop.permute.xlu0 %5413
        %5415 = vrot.lane.b32.xlu0 %v5343, 109
        %v5416 = vpop.permute.xlu0 %5415
        %5417 = vrot.lane.b32.xlu0 %v5346, 109
        %v5418 = vpop.permute.xlu0 %5417
        %5419 = vrot.lane.b32.xlu0 %v5348, 109
        %v5420 = vpop.permute.xlu0 %5419
        %5421 = vrot.lane.b32.xlu0 %v5351, 109
        %v5422 = vpop.permute.xlu0 %5421
        %5423 = vrot.lane.b32.xlu0 %v5353, 109
        %v5424 = vpop.permute.xlu0 %5423
        %5425 = vrot.lane.b32.xlu0 %v5356, 109
        %v5426 = vpop.permute.xlu0 %5425
        %5427 = vrot.lane.b32.xlu0 %v5358, 109
        %v5428 = vpop.permute.xlu0 %5427
        %5429 = vrot.lane.b32.xlu0 %v5361, 109
        %v5430 = vpop.permute.xlu0 %5429
        %5431 = vrot.lane.b32.xlu0 %v5363, 109
        %v5432 = vpop.permute.xlu0 %5431
        %5433 = vrot.lane.b32.xlu0 %v5366, 109
        %v5434 = vpop.permute.xlu0 %5433
        %5435 = vrot.lane.b32.xlu0 %v5368, 109
        %v5436 = vpop.permute.xlu0 %5435
        %5437 = vrot.lane.b32.xlu0 %v5371, 109
        %v5438 = vpop.permute.xlu0 %5437
        %5439 = vrot.lane.b32.xlu0 %v5373, 109
        %v5440 = vpop.permute.xlu0 %5439
        %5441 = vrot.lane.b32.xlu0 %v5376, 109
        %v5442 = vpop.permute.xlu0 %5441
        %5443 = vrot.lane.b32.xlu0 %v5378, 109
        %v5444 = vpop.permute.xlu0 %5443
        %5445 = vrot.lane.b32.xlu0 %v5381, 109
        %v5446 = vpop.permute.xlu0 %5445
        %5447 = vrot.lane.b32.xlu0 %v5383, 109
        %v5448 = vpop.permute.xlu0 %5447
        %5449 = vrot.lane.b32.xlu0 %v5386, 109
        %v5450 = vpop.permute.xlu0 %5449
        %5451 = vrot.lane.b32.xlu0 %v5388, 109
        %v5452 = vpop.permute.xlu0 %5451
        %v5485 = vadd.f32 %v5277, %v5390
        %v5486 = vadd.f32 %v5278, %v5392
        %v5487 = vadd.f32 %v5279, %v5394
        %v5488 = vadd.f32 %v5280, %v5396
        %v5489 = vadd.f32 %v5281, %v5398
        %v5490 = vadd.f32 %v5282, %v5400
        %v5491 = vadd.f32 %v5283, %v5402
        %v5492 = vadd.f32 %v5284, %v5404
        %v5493 = vadd.f32 %v5285, %v5406
        %v5494 = vadd.f32 %v5286, %v5408
        %v5495 = vadd.f32 %v5287, %v5410
        %v5496 = vadd.f32 %v5288, %v5412
        %v5497 = vadd.f32 %v5289, %v5414
        %v5498 = vadd.f32 %v5290, %v5416
        %v5499 = vadd.f32 %v5291, %v5418
        %v5500 = vadd.f32 %v5292, %v5420
        %v5501 = vadd.f32 %v5293, %v5422
        %v5502 = vadd.f32 %v5294, %v5424
        %v5503 = vadd.f32 %v5295, %v5426
        %v5504 = vadd.f32 %v5296, %v5428
        %v5505 = vadd.f32 %v5297, %v5430
        %v5506 = vadd.f32 %v5298, %v5432
        %v5507 = vadd.f32 %v5299, %v5434
        %v5508 = vadd.f32 %v5300, %v5436
        %v5509 = vadd.f32 %v5301, %v5438
        %v5510 = vadd.f32 %v5302, %v5440
        %v5511 = vadd.f32 %v5303, %v5442
        %v5512 = vadd.f32 %v5304, %v5444
        %v5513 = vadd.f32 %v5305, %v5446
        %v5514 = vadd.f32 %v5306, %v5448
        %v5515 = vadd.f32 %v5307, %v5450
        %v5516 = vadd.f32 %v5308, %v5452
        %s5517 = scalar_lea.vmem [#allocation2], 96
        %v5518 = vld [vmem:[%s5517] sm:$0xff]
        %v5519 = vld [vmem:[%s5517 + $0x8] sm:$0xff]
        %v5520 = vld [vmem:[%s5517 + $0x10] sm:$0xf]
        %v5521 = vld [vmem:[%s5517 + $0x18] sm:$0xff]
        %v5522 = vld [vmem:[%s5517 + $0x20] sm:$0xff]
        %v5523 = vld [vmem:[%s5517 + $0x28] sm:$0xf]
        %v5524 = vld [vmem:[%s5517 + $0x30] sm:$0xff]
        %v5525 = vld [vmem:[%s5517 + $0x38] sm:$0xff]
        %v5526 = vld [vmem:[%s5517 + $0x40] sm:$0xf]
        %v5527 = vld [vmem:[%s5517 + $0x48] sm:$0xff]
        %v5528 = vld [vmem:[%s5517 + $0x50] sm:$0xff]
        %v5529 = vld [vmem:[%s5517 + $0x58] sm:$0xf]
        %v5530 = vld [vmem:[%s5517 + $0x60] sm:$0xff]
        %v5531 = vld [vmem:[%s5517 + $0x68] sm:$0xff]
        %v5532 = vld [vmem:[%s5517 + $0x70] sm:$0xf]
        %v5533 = vld [vmem:[%s5517 + $0x78] sm:$0xff]
        %v5534 = vld [vmem:[%s5517 + $0x80] sm:$0xff]
        %v5535 = vld [vmem:[%s5517 + $0x88] sm:$0xf]
        %v5536 = vld [vmem:[%s5517 + $0x90] sm:$0xff]
        %v5537 = vld [vmem:[%s5517 + $0x98] sm:$0xff]
        %v5538 = vld [vmem:[%s5517 + $0xa0] sm:$0xf]
        %v5539 = vld [vmem:[%s5517 + $0xa8] sm:$0xff]
        %v5540 = vld [vmem:[%s5517 + $0xb0] sm:$0xff]
        %v5541 = vld [vmem:[%s5517 + $0xb8] sm:$0xf]
        %v5542 = vld [vmem:[%s5517 + $0xc0] sm:$0xff]
        %v5543 = vld [vmem:[%s5517 + $0xc8] sm:$0xff]
        %v5544 = vld [vmem:[%s5517 + $0xd0] sm:$0xf]
        %v5545 = vld [vmem:[%s5517 + $0xd8] sm:$0xff]
        %v5546 = vld [vmem:[%s5517 + $0xe0] sm:$0xff]
        %v5547 = vld [vmem:[%s5517 + $0xe8] sm:$0xf]
        %v5548 = vld [vmem:[%s5517 + $0xf0] sm:$0xff]
        %v5549 = vld [vmem:[%s5517 + $0xf8] sm:$0xff]
        %v5550 = vld [vmem:[%s5517 + $0x100] sm:$0xf]
        %v5551 = vld [vmem:[%s5517 + $0x108] sm:$0xff]
        %v5552 = vld [vmem:[%s5517 + $0x110] sm:$0xff]
        %v5553 = vld [vmem:[%s5517 + $0x118] sm:$0xf]
        %v5554 = vld [vmem:[%s5517 + $0x120] sm:$0xff]
        %v5555 = vld [vmem:[%s5517 + $0x128] sm:$0xff]
        %v5556 = vld [vmem:[%s5517 + $0x130] sm:$0xf]
        %v5557 = vld [vmem:[%s5517 + $0x138] sm:$0xff]
        %v5558 = vld [vmem:[%s5517 + $0x140] sm:$0xff]
        %v5559 = vld [vmem:[%s5517 + $0x148] sm:$0xf]
        %v5560 = vld [vmem:[%s5517 + $0x150] sm:$0xff]
        %v5561 = vld [vmem:[%s5517 + $0x158] sm:$0xff]
        %v5562 = vld [vmem:[%s5517 + $0x160] sm:$0xf]
        %v5563 = vld [vmem:[%s5517 + $0x168] sm:$0xff]
        %v5564 = vld [vmem:[%s5517 + $0x170] sm:$0xff]
        %v5565 = vld [vmem:[%s5517 + $0x178] sm:$0xf]
        %5598 = vrot.lane.b32.xlu0 %v5518, 108
        %v5599 = vpop.permute.xlu0 %5598
        %5600 = vrot.lane.b32.xlu0 %v5519, 108
        %v5601 = vpop.permute.xlu0 %5600
        %5602 = vrot.lane.b32.xlu0 %v5521, 108
        %v5603 = vpop.permute.xlu0 %5602
        %5604 = vrot.lane.b32.xlu0 %v5522, 108
        %v5605 = vpop.permute.xlu0 %5604
        %5606 = vrot.lane.b32.xlu0 %v5524, 108
        %v5607 = vpop.permute.xlu0 %5606
        %5608 = vrot.lane.b32.xlu0 %v5525, 108
        %v5609 = vpop.permute.xlu0 %5608
        %5610 = vrot.lane.b32.xlu0 %v5527, 108
        %v5611 = vpop.permute.xlu0 %5610
        %5612 = vrot.lane.b32.xlu0 %v5528, 108
        %v5613 = vpop.permute.xlu0 %5612
        %5614 = vrot.lane.b32.xlu0 %v5530, 108
        %v5615 = vpop.permute.xlu0 %5614
        %5616 = vrot.lane.b32.xlu0 %v5531, 108
        %v5617 = vpop.permute.xlu0 %5616
        %5618 = vrot.lane.b32.xlu0 %v5533, 108
        %v5619 = vpop.permute.xlu0 %5618
        %5620 = vrot.lane.b32.xlu0 %v5534, 108
        %v5621 = vpop.permute.xlu0 %5620
        %5622 = vrot.lane.b32.xlu0 %v5536, 108
        %v5623 = vpop.permute.xlu0 %5622
        %5624 = vrot.lane.b32.xlu0 %v5537, 108
        %v5625 = vpop.permute.xlu0 %5624
        %5626 = vrot.lane.b32.xlu0 %v5539, 108
        %v5627 = vpop.permute.xlu0 %5626
        %5628 = vrot.lane.b32.xlu0 %v5540, 108
        %v5629 = vpop.permute.xlu0 %5628
        %5630 = vrot.lane.b32.xlu0 %v5542, 108
        %v5631 = vpop.permute.xlu0 %5630
        %5632 = vrot.lane.b32.xlu0 %v5543, 108
        %v5633 = vpop.permute.xlu0 %5632
        %5634 = vrot.lane.b32.xlu0 %v5545, 108
        %v5635 = vpop.permute.xlu0 %5634
        %5636 = vrot.lane.b32.xlu0 %v5546, 108
        %v5637 = vpop.permute.xlu0 %5636
        %5638 = vrot.lane.b32.xlu0 %v5548, 108
        %v5639 = vpop.permute.xlu0 %5638
        %5640 = vrot.lane.b32.xlu0 %v5549, 108
        %v5641 = vpop.permute.xlu0 %5640
        %5642 = vrot.lane.b32.xlu0 %v5551, 108
        %v5643 = vpop.permute.xlu0 %5642
        %5644 = vrot.lane.b32.xlu0 %v5552, 108
        %v5645 = vpop.permute.xlu0 %5644
        %5646 = vrot.lane.b32.xlu0 %v5554, 108
        %v5647 = vpop.permute.xlu0 %5646
        %5648 = vrot.lane.b32.xlu0 %v5555, 108
        %v5649 = vpop.permute.xlu0 %5648
        %5650 = vrot.lane.b32.xlu0 %v5557, 108
        %v5651 = vpop.permute.xlu0 %5650
        %5652 = vrot.lane.b32.xlu0 %v5558, 108
        %v5653 = vpop.permute.xlu0 %5652
        %5654 = vrot.lane.b32.xlu0 %v5560, 108
        %v5655 = vpop.permute.xlu0 %5654
        %5656 = vrot.lane.b32.xlu0 %v5561, 108
        %v5657 = vpop.permute.xlu0 %5656
        %5658 = vrot.lane.b32.xlu0 %v5563, 108
        %v5659 = vpop.permute.xlu0 %5658
        %5660 = vrot.lane.b32.xlu0 %v5564, 108
        %v5661 = vpop.permute.xlu0 %5660
        %v5694 = vadd.f32 %v5485, %v5599
        %v5695 = vadd.f32 %v5486, %v5601
        %v5696 = vadd.f32 %v5487, %v5603
        %v5697 = vadd.f32 %v5488, %v5605
        %v5698 = vadd.f32 %v5489, %v5607
        %v5699 = vadd.f32 %v5490, %v5609
        %v5700 = vadd.f32 %v5491, %v5611
        %v5701 = vadd.f32 %v5492, %v5613
        %v5702 = vadd.f32 %v5493, %v5615
        %v5703 = vadd.f32 %v5494, %v5617
        %v5704 = vadd.f32 %v5495, %v5619
        %v5705 = vadd.f32 %v5496, %v5621
        %v5706 = vadd.f32 %v5497, %v5623
        %v5707 = vadd.f32 %v5498, %v5625
        %v5708 = vadd.f32 %v5499, %v5627
        %v5709 = vadd.f32 %v5500, %v5629
        %v5710 = vadd.f32 %v5501, %v5631
        %v5711 = vadd.f32 %v5502, %v5633
        %v5712 = vadd.f32 %v5503, %v5635
        %v5713 = vadd.f32 %v5504, %v5637
        %v5714 = vadd.f32 %v5505, %v5639
        %v5715 = vadd.f32 %v5506, %v5641
        %v5716 = vadd.f32 %v5507, %v5643
        %v5717 = vadd.f32 %v5508, %v5645
        %v5718 = vadd.f32 %v5509, %v5647
        %v5719 = vadd.f32 %v5510, %v5649
        %v5720 = vadd.f32 %v5511, %v5651
        %v5721 = vadd.f32 %v5512, %v5653
        %v5722 = vadd.f32 %v5513, %v5655
        %v5723 = vadd.f32 %v5514, %v5657
        %v5724 = vadd.f32 %v5515, %v5659
        %v5725 = vadd.f32 %v5516, %v5661
        %v5742 = vrot.slane %v5518, 1
        %v5743 = vrot.slane %v5519, 1
        %v5744 = vsel %vm1512, %v5742, %v5743
        %v5745 = vrot.slane %v5520, 1
        %v5746 = vsel %vm1512, %v5743, %v5745
        %v5747 = vrot.slane %v5521, 1
        %v5748 = vrot.slane %v5522, 1
        %v5749 = vsel %vm1512, %v5747, %v5748
        %v5750 = vrot.slane %v5523, 1
        %v5751 = vsel %vm1512, %v5748, %v5750
        %v5752 = vrot.slane %v5524, 1
        %v5753 = vrot.slane %v5525, 1
        %v5754 = vsel %vm1512, %v5752, %v5753
        %v5755 = vrot.slane %v5526, 1
        %v5756 = vsel %vm1512, %v5753, %v5755
        %v5757 = vrot.slane %v5527, 1
        %v5758 = vrot.slane %v5528, 1
        %v5759 = vsel %vm1512, %v5757, %v5758
        %v5760 = vrot.slane %v5529, 1
        %v5761 = vsel %vm1512, %v5758, %v5760
        %v5762 = vrot.slane %v5530, 1
        %v5763 = vrot.slane %v5531, 1
        %v5764 = vsel %vm1512, %v5762, %v5763
        %v5765 = vrot.slane %v5532, 1
        %v5766 = vsel %vm1512, %v5763, %v5765
        %v5767 = vrot.slane %v5533, 1
        %v5768 = vrot.slane %v5534, 1
        %v5769 = vsel %vm1512, %v5767, %v5768
        %v5770 = vrot.slane %v5535, 1
        %v5771 = vsel %vm1512, %v5768, %v5770
        %v5772 = vrot.slane %v5536, 1
        %v5773 = vrot.slane %v5537, 1
        %v5774 = vsel %vm1512, %v5772, %v5773
        %v5775 = vrot.slane %v5538, 1
        %v5776 = vsel %vm1512, %v5773, %v5775
        %v5777 = vrot.slane %v5539, 1
        %v5778 = vrot.slane %v5540, 1
        %v5779 = vsel %vm1512, %v5777, %v5778
        %v5780 = vrot.slane %v5541, 1
        %v5781 = vsel %vm1512, %v5778, %v5780
        %v5782 = vrot.slane %v5542, 1
        %v5783 = vrot.slane %v5543, 1
        %v5784 = vsel %vm1512, %v5782, %v5783
        %v5785 = vrot.slane %v5544, 1
        %v5786 = vsel %vm1512, %v5783, %v5785
        %v5787 = vrot.slane %v5545, 1
        %v5788 = vrot.slane %v5546, 1
        %v5789 = vsel %vm1512, %v5787, %v5788
        %v5790 = vrot.slane %v5547, 1
        %v5791 = vsel %vm1512, %v5788, %v5790
        %v5792 = vrot.slane %v5548, 1
        %v5793 = vrot.slane %v5549, 1
        %v5794 = vsel %vm1512, %v5792, %v5793
        %v5795 = vrot.slane %v5550, 1
        %v5796 = vsel %vm1512, %v5793, %v5795
        %v5797 = vrot.slane %v5551, 1
        %v5798 = vrot.slane %v5552, 1
        %v5799 = vsel %vm1512, %v5797, %v5798
        %v5800 = vrot.slane %v5553, 1
        %v5801 = vsel %vm1512, %v5798, %v5800
        %v5802 = vrot.slane %v5554, 1
        %v5803 = vrot.slane %v5555, 1
        %v5804 = vsel %vm1512, %v5802, %v5803
        %v5805 = vrot.slane %v5556, 1
        %v5806 = vsel %vm1512, %v5803, %v5805
        %v5807 = vrot.slane %v5557, 1
        %v5808 = vrot.slane %v5558, 1
        %v5809 = vsel %vm1512, %v5807, %v5808
        %v5810 = vrot.slane %v5559, 1
        %v5811 = vsel %vm1512, %v5808, %v5810
        %v5812 = vrot.slane %v5560, 1
        %v5813 = vrot.slane %v5561, 1
        %v5814 = vsel %vm1512, %v5812, %v5813
        %v5815 = vrot.slane %v5562, 1
        %v5816 = vsel %vm1512, %v5813, %v5815
        %v5817 = vrot.slane %v5563, 1
        %v5818 = vrot.slane %v5564, 1
        %v5819 = vsel %vm1512, %v5817, %v5818
        %v5820 = vrot.slane %v5565, 1
        %v5821 = vsel %vm1512, %v5818, %v5820
        %5822 = vrot.lane.b32.xlu0 %v5744, 107
        %v5823 = vpop.permute.xlu0 %5822
        %5824 = vrot.lane.b32.xlu0 %v5746, 107
        %v5825 = vpop.permute.xlu0 %5824
        %5826 = vrot.lane.b32.xlu0 %v5749, 107
        %v5827 = vpop.permute.xlu0 %5826
        %5828 = vrot.lane.b32.xlu0 %v5751, 107
        %v5829 = vpop.permute.xlu0 %5828
        %5830 = vrot.lane.b32.xlu0 %v5754, 107
        %v5831 = vpop.permute.xlu0 %5830
        %5832 = vrot.lane.b32.xlu0 %v5756, 107
        %v5833 = vpop.permute.xlu0 %5832
        %5834 = vrot.lane.b32.xlu0 %v5759, 107
        %v5835 = vpop.permute.xlu0 %5834
        %5836 = vrot.lane.b32.xlu0 %v5761, 107
        %v5837 = vpop.permute.xlu0 %5836
        %5838 = vrot.lane.b32.xlu0 %v5764, 107
        %v5839 = vpop.permute.xlu0 %5838
        %5840 = vrot.lane.b32.xlu0 %v5766, 107
        %v5841 = vpop.permute.xlu0 %5840
        %5842 = vrot.lane.b32.xlu0 %v5769, 107
        %v5843 = vpop.permute.xlu0 %5842
        %5844 = vrot.lane.b32.xlu0 %v5771, 107
        %v5845 = vpop.permute.xlu0 %5844
        %5846 = vrot.lane.b32.xlu0 %v5774, 107
        %v5847 = vpop.permute.xlu0 %5846
        %5848 = vrot.lane.b32.xlu0 %v5776, 107
        %v5849 = vpop.permute.xlu0 %5848
        %5850 = vrot.lane.b32.xlu0 %v5779, 107
        %v5851 = vpop.permute.xlu0 %5850
        %5852 = vrot.lane.b32.xlu0 %v5781, 107
        %v5853 = vpop.permute.xlu0 %5852
        %5854 = vrot.lane.b32.xlu0 %v5784, 107
        %v5855 = vpop.permute.xlu0 %5854
        %5856 = vrot.lane.b32.xlu0 %v5786, 107
        %v5857 = vpop.permute.xlu0 %5856
        %5858 = vrot.lane.b32.xlu0 %v5789, 107
        %v5859 = vpop.permute.xlu0 %5858
        %5860 = vrot.lane.b32.xlu0 %v5791, 107
        %v5861 = vpop.permute.xlu0 %5860
        %5862 = vrot.lane.b32.xlu0 %v5794, 107
        %v5863 = vpop.permute.xlu0 %5862
        %5864 = vrot.lane.b32.xlu0 %v5796, 107
        %v5865 = vpop.permute.xlu0 %5864
        %5866 = vrot.lane.b32.xlu0 %v5799, 107
        %v5867 = vpop.permute.xlu0 %5866
        %5868 = vrot.lane.b32.xlu0 %v5801, 107
        %v5869 = vpop.permute.xlu0 %5868
        %5870 = vrot.lane.b32.xlu0 %v5804, 107
        %v5871 = vpop.permute.xlu0 %5870
        %5872 = vrot.lane.b32.xlu0 %v5806, 107
        %v5873 = vpop.permute.xlu0 %5872
        %5874 = vrot.lane.b32.xlu0 %v5809, 107
        %v5875 = vpop.permute.xlu0 %5874
        %5876 = vrot.lane.b32.xlu0 %v5811, 107
        %v5877 = vpop.permute.xlu0 %5876
        %5878 = vrot.lane.b32.xlu0 %v5814, 107
        %v5879 = vpop.permute.xlu0 %5878
        %5880 = vrot.lane.b32.xlu0 %v5816, 107
        %v5881 = vpop.permute.xlu0 %5880
        %5882 = vrot.lane.b32.xlu0 %v5819, 107
        %v5883 = vpop.permute.xlu0 %5882
        %5884 = vrot.lane.b32.xlu0 %v5821, 107
        %v5885 = vpop.permute.xlu0 %5884
        %v5918 = vadd.f32 %v5694, %v5823
        %v5919 = vadd.f32 %v5695, %v5825
        %v5920 = vadd.f32 %v5696, %v5827
        %v5921 = vadd.f32 %v5697, %v5829
        %v5922 = vadd.f32 %v5698, %v5831
        %v5923 = vadd.f32 %v5699, %v5833
        %v5924 = vadd.f32 %v5700, %v5835
        %v5925 = vadd.f32 %v5701, %v5837
        %v5926 = vadd.f32 %v5702, %v5839
        %v5927 = vadd.f32 %v5703, %v5841
        %v5928 = vadd.f32 %v5704, %v5843
        %v5929 = vadd.f32 %v5705, %v5845
        %v5930 = vadd.f32 %v5706, %v5847
        %v5931 = vadd.f32 %v5707, %v5849
        %v5932 = vadd.f32 %v5708, %v5851
        %v5933 = vadd.f32 %v5709, %v5853
        %v5934 = vadd.f32 %v5710, %v5855
        %v5935 = vadd.f32 %v5711, %v5857
        %v5936 = vadd.f32 %v5712, %v5859
        %v5937 = vadd.f32 %v5713, %v5861
        %v5938 = vadd.f32 %v5714, %v5863
        %v5939 = vadd.f32 %v5715, %v5865
        %v5940 = vadd.f32 %v5716, %v5867
        %v5941 = vadd.f32 %v5717, %v5869
        %v5942 = vadd.f32 %v5718, %v5871
        %v5943 = vadd.f32 %v5719, %v5873
        %v5944 = vadd.f32 %v5720, %v5875
        %v5945 = vadd.f32 %v5721, %v5877
        %v5946 = vadd.f32 %v5722, %v5879
        %v5947 = vadd.f32 %v5723, %v5881
        %v5948 = vadd.f32 %v5724, %v5883
        %v5949 = vadd.f32 %v5725, %v5885
        %v5950 = vrot.slane %v5518, 2
        %v5951 = vrot.slane %v5519, 2
        %v5952 = vsel %vm1721, %v5950, %v5951
        %v5953 = vrot.slane %v5520, 2
        %v5954 = vsel %vm1721, %v5951, %v5953
        %v5955 = vrot.slane %v5521, 2
        %v5956 = vrot.slane %v5522, 2
        %v5957 = vsel %vm1721, %v5955, %v5956
        %v5958 = vrot.slane %v5523, 2
        %v5959 = vsel %vm1721, %v5956, %v5958
        %v5960 = vrot.slane %v5524, 2
        %v5961 = vrot.slane %v5525, 2
        %v5962 = vsel %vm1721, %v5960, %v5961
        %v5963 = vrot.slane %v5526, 2
        %v5964 = vsel %vm1721, %v5961, %v5963
        %v5965 = vrot.slane %v5527, 2
        %v5966 = vrot.slane %v5528, 2
        %v5967 = vsel %vm1721, %v5965, %v5966
        %v5968 = vrot.slane %v5529, 2
        %v5969 = vsel %vm1721, %v5966, %v5968
        %v5970 = vrot.slane %v5530, 2
        %v5971 = vrot.slane %v5531, 2
        %v5972 = vsel %vm1721, %v5970, %v5971
        %v5973 = vrot.slane %v5532, 2
        %v5974 = vsel %vm1721, %v5971, %v5973
        %v5975 = vrot.slane %v5533, 2
        %v5976 = vrot.slane %v5534, 2
        %v5977 = vsel %vm1721, %v5975, %v5976
        %v5978 = vrot.slane %v5535, 2
        %v5979 = vsel %vm1721, %v5976, %v5978
        %v5980 = vrot.slane %v5536, 2
        %v5981 = vrot.slane %v5537, 2
        %v5982 = vsel %vm1721, %v5980, %v5981
        %v5983 = vrot.slane %v5538, 2
        %v5984 = vsel %vm1721, %v5981, %v5983
        %v5985 = vrot.slane %v5539, 2
        %v5986 = vrot.slane %v5540, 2
        %v5987 = vsel %vm1721, %v5985, %v5986
        %v5988 = vrot.slane %v5541, 2
        %v5989 = vsel %vm1721, %v5986, %v5988
        %v5990 = vrot.slane %v5542, 2
        %v5991 = vrot.slane %v5543, 2
        %v5992 = vsel %vm1721, %v5990, %v5991
        %v5993 = vrot.slane %v5544, 2
        %v5994 = vsel %vm1721, %v5991, %v5993
        %v5995 = vrot.slane %v5545, 2
        %v5996 = vrot.slane %v5546, 2
        %v5997 = vsel %vm1721, %v5995, %v5996
        %v5998 = vrot.slane %v5547, 2
        %v5999 = vsel %vm1721, %v5996, %v5998
        %v6000 = vrot.slane %v5548, 2
        %v6001 = vrot.slane %v5549, 2
        %v6002 = vsel %vm1721, %v6000, %v6001
        %v6003 = vrot.slane %v5550, 2
        %v6004 = vsel %vm1721, %v6001, %v6003
        %v6005 = vrot.slane %v5551, 2
        %v6006 = vrot.slane %v5552, 2
        %v6007 = vsel %vm1721, %v6005, %v6006
        %v6008 = vrot.slane %v5553, 2
        %v6009 = vsel %vm1721, %v6006, %v6008
        %v6010 = vrot.slane %v5554, 2
        %v6011 = vrot.slane %v5555, 2
        %v6012 = vsel %vm1721, %v6010, %v6011
        %v6013 = vrot.slane %v5556, 2
        %v6014 = vsel %vm1721, %v6011, %v6013
        %v6015 = vrot.slane %v5557, 2
        %v6016 = vrot.slane %v5558, 2
        %v6017 = vsel %vm1721, %v6015, %v6016
        %v6018 = vrot.slane %v5559, 2
        %v6019 = vsel %vm1721, %v6016, %v6018
        %v6020 = vrot.slane %v5560, 2
        %v6021 = vrot.slane %v5561, 2
        %v6022 = vsel %vm1721, %v6020, %v6021
        %v6023 = vrot.slane %v5562, 2
        %v6024 = vsel %vm1721, %v6021, %v6023
        %v6025 = vrot.slane %v5563, 2
        %v6026 = vrot.slane %v5564, 2
        %v6027 = vsel %vm1721, %v6025, %v6026
        %v6028 = vrot.slane %v5565, 2
        %v6029 = vsel %vm1721, %v6026, %v6028
        %6030 = vrot.lane.b32.xlu0 %v5952, 106
        %v6031 = vpop.permute.xlu0 %6030
        %6032 = vrot.lane.b32.xlu0 %v5954, 106
        %v6033 = vpop.permute.xlu0 %6032
        %6034 = vrot.lane.b32.xlu0 %v5957, 106
        %v6035 = vpop.permute.xlu0 %6034
        %6036 = vrot.lane.b32.xlu0 %v5959, 106
        %v6037 = vpop.permute.xlu0 %6036
        %6038 = vrot.lane.b32.xlu0 %v5962, 106
        %v6039 = vpop.permute.xlu0 %6038
        %6040 = vrot.lane.b32.xlu0 %v5964, 106
        %v6041 = vpop.permute.xlu0 %6040
        %6042 = vrot.lane.b32.xlu0 %v5967, 106
        %v6043 = vpop.permute.xlu0 %6042
        %6044 = vrot.lane.b32.xlu0 %v5969, 106
        %v6045 = vpop.permute.xlu0 %6044
        %6046 = vrot.lane.b32.xlu0 %v5972, 106
        %v6047 = vpop.permute.xlu0 %6046
        %6048 = vrot.lane.b32.xlu0 %v5974, 106
        %v6049 = vpop.permute.xlu0 %6048
        %6050 = vrot.lane.b32.xlu0 %v5977, 106
        %v6051 = vpop.permute.xlu0 %6050
        %6052 = vrot.lane.b32.xlu0 %v5979, 106
        %v6053 = vpop.permute.xlu0 %6052
        %6054 = vrot.lane.b32.xlu0 %v5982, 106
        %v6055 = vpop.permute.xlu0 %6054
        %6056 = vrot.lane.b32.xlu0 %v5984, 106
        %v6057 = vpop.permute.xlu0 %6056
        %6058 = vrot.lane.b32.xlu0 %v5987, 106
        %v6059 = vpop.permute.xlu0 %6058
        %6060 = vrot.lane.b32.xlu0 %v5989, 106
        %v6061 = vpop.permute.xlu0 %6060
        %6062 = vrot.lane.b32.xlu0 %v5992, 106
        %v6063 = vpop.permute.xlu0 %6062
        %6064 = vrot.lane.b32.xlu0 %v5994, 106
        %v6065 = vpop.permute.xlu0 %6064
        %6066 = vrot.lane.b32.xlu0 %v5997, 106
        %v6067 = vpop.permute.xlu0 %6066
        %6068 = vrot.lane.b32.xlu0 %v5999, 106
        %v6069 = vpop.permute.xlu0 %6068
        %6070 = vrot.lane.b32.xlu0 %v6002, 106
        %v6071 = vpop.permute.xlu0 %6070
        %6072 = vrot.lane.b32.xlu0 %v6004, 106
        %v6073 = vpop.permute.xlu0 %6072
        %6074 = vrot.lane.b32.xlu0 %v6007, 106
        %v6075 = vpop.permute.xlu0 %6074
        %6076 = vrot.lane.b32.xlu0 %v6009, 106
        %v6077 = vpop.permute.xlu0 %6076
        %6078 = vrot.lane.b32.xlu0 %v6012, 106
        %v6079 = vpop.permute.xlu0 %6078
        %6080 = vrot.lane.b32.xlu0 %v6014, 106
        %v6081 = vpop.permute.xlu0 %6080
        %6082 = vrot.lane.b32.xlu0 %v6017, 106
        %v6083 = vpop.permute.xlu0 %6082
        %6084 = vrot.lane.b32.xlu0 %v6019, 106
        %v6085 = vpop.permute.xlu0 %6084
        %6086 = vrot.lane.b32.xlu0 %v6022, 106
        %v6087 = vpop.permute.xlu0 %6086
        %6088 = vrot.lane.b32.xlu0 %v6024, 106
        %v6089 = vpop.permute.xlu0 %6088
        %6090 = vrot.lane.b32.xlu0 %v6027, 106
        %v6091 = vpop.permute.xlu0 %6090
        %6092 = vrot.lane.b32.xlu0 %v6029, 106
        %v6093 = vpop.permute.xlu0 %6092
        %v6126 = vadd.f32 %v5918, %v6031
        %v6127 = vadd.f32 %v5919, %v6033
        %v6128 = vadd.f32 %v5920, %v6035
        %v6129 = vadd.f32 %v5921, %v6037
        %v6130 = vadd.f32 %v5922, %v6039
        %v6131 = vadd.f32 %v5923, %v6041
        %v6132 = vadd.f32 %v5924, %v6043
        %v6133 = vadd.f32 %v5925, %v6045
        %v6134 = vadd.f32 %v5926, %v6047
        %v6135 = vadd.f32 %v5927, %v6049
        %v6136 = vadd.f32 %v5928, %v6051
        %v6137 = vadd.f32 %v5929, %v6053
        %v6138 = vadd.f32 %v5930, %v6055
        %v6139 = vadd.f32 %v5931, %v6057
        %v6140 = vadd.f32 %v5932, %v6059
        %v6141 = vadd.f32 %v5933, %v6061
        %v6142 = vadd.f32 %v5934, %v6063
        %v6143 = vadd.f32 %v5935, %v6065
        %v6144 = vadd.f32 %v5936, %v6067
        %v6145 = vadd.f32 %v5937, %v6069
        %v6146 = vadd.f32 %v5938, %v6071
        %v6147 = vadd.f32 %v5939, %v6073
        %v6148 = vadd.f32 %v5940, %v6075
        %v6149 = vadd.f32 %v5941, %v6077
        %v6150 = vadd.f32 %v5942, %v6079
        %v6151 = vadd.f32 %v5943, %v6081
        %v6152 = vadd.f32 %v5944, %v6083
        %v6153 = vadd.f32 %v5945, %v6085
        %v6154 = vadd.f32 %v5946, %v6087
        %v6155 = vadd.f32 %v5947, %v6089
        %v6156 = vadd.f32 %v5948, %v6091
        %v6157 = vadd.f32 %v5949, %v6093
        %v6158 = vrot.slane %v5518, 3
        %v6159 = vrot.slane %v5519, 3
        %v6160 = vsel %vm1930, %v6158, %v6159
        %v6161 = vrot.slane %v5520, 3
        %v6162 = vsel %vm1930, %v6159, %v6161
        %v6163 = vrot.slane %v5521, 3
        %v6164 = vrot.slane %v5522, 3
        %v6165 = vsel %vm1930, %v6163, %v6164
        %v6166 = vrot.slane %v5523, 3
        %v6167 = vsel %vm1930, %v6164, %v6166
        %v6168 = vrot.slane %v5524, 3
        %v6169 = vrot.slane %v5525, 3
        %v6170 = vsel %vm1930, %v6168, %v6169
        %v6171 = vrot.slane %v5526, 3
        %v6172 = vsel %vm1930, %v6169, %v6171
        %v6173 = vrot.slane %v5527, 3
        %v6174 = vrot.slane %v5528, 3
        %v6175 = vsel %vm1930, %v6173, %v6174
        %v6176 = vrot.slane %v5529, 3
        %v6177 = vsel %vm1930, %v6174, %v6176
        %v6178 = vrot.slane %v5530, 3
        %v6179 = vrot.slane %v5531, 3
        %v6180 = vsel %vm1930, %v6178, %v6179
        %v6181 = vrot.slane %v5532, 3
        %v6182 = vsel %vm1930, %v6179, %v6181
        %v6183 = vrot.slane %v5533, 3
        %v6184 = vrot.slane %v5534, 3
        %v6185 = vsel %vm1930, %v6183, %v6184
        %v6186 = vrot.slane %v5535, 3
        %v6187 = vsel %vm1930, %v6184, %v6186
        %v6188 = vrot.slane %v5536, 3
        %v6189 = vrot.slane %v5537, 3
        %v6190 = vsel %vm1930, %v6188, %v6189
        %v6191 = vrot.slane %v5538, 3
        %v6192 = vsel %vm1930, %v6189, %v6191
        %v6193 = vrot.slane %v5539, 3
        %v6194 = vrot.slane %v5540, 3
        %v6195 = vsel %vm1930, %v6193, %v6194
        %v6196 = vrot.slane %v5541, 3
        %v6197 = vsel %vm1930, %v6194, %v6196
        %v6198 = vrot.slane %v5542, 3
        %v6199 = vrot.slane %v5543, 3
        %v6200 = vsel %vm1930, %v6198, %v6199
        %v6201 = vrot.slane %v5544, 3
        %v6202 = vsel %vm1930, %v6199, %v6201
        %v6203 = vrot.slane %v5545, 3
        %v6204 = vrot.slane %v5546, 3
        %v6205 = vsel %vm1930, %v6203, %v6204
        %v6206 = vrot.slane %v5547, 3
        %v6207 = vsel %vm1930, %v6204, %v6206
        %v6208 = vrot.slane %v5548, 3
        %v6209 = vrot.slane %v5549, 3
        %v6210 = vsel %vm1930, %v6208, %v6209
        %v6211 = vrot.slane %v5550, 3
        %v6212 = vsel %vm1930, %v6209, %v6211
        %v6213 = vrot.slane %v5551, 3
        %v6214 = vrot.slane %v5552, 3
        %v6215 = vsel %vm1930, %v6213, %v6214
        %v6216 = vrot.slane %v5553, 3
        %v6217 = vsel %vm1930, %v6214, %v6216
        %v6218 = vrot.slane %v5554, 3
        %v6219 = vrot.slane %v5555, 3
        %v6220 = vsel %vm1930, %v6218, %v6219
        %v6221 = vrot.slane %v5556, 3
        %v6222 = vsel %vm1930, %v6219, %v6221
        %v6223 = vrot.slane %v5557, 3
        %v6224 = vrot.slane %v5558, 3
        %v6225 = vsel %vm1930, %v6223, %v6224
        %v6226 = vrot.slane %v5559, 3
        %v6227 = vsel %vm1930, %v6224, %v6226
        %v6228 = vrot.slane %v5560, 3
        %v6229 = vrot.slane %v5561, 3
        %v6230 = vsel %vm1930, %v6228, %v6229
        %v6231 = vrot.slane %v5562, 3
        %v6232 = vsel %vm1930, %v6229, %v6231
        %v6233 = vrot.slane %v5563, 3
        %v6234 = vrot.slane %v5564, 3
        %v6235 = vsel %vm1930, %v6233, %v6234
        %v6236 = vrot.slane %v5565, 3
        %v6237 = vsel %vm1930, %v6234, %v6236
        %6238 = vrot.lane.b32.xlu0 %v6160, 105
        %v6239 = vpop.permute.xlu0 %6238
        %6240 = vrot.lane.b32.xlu0 %v6162, 105
        %v6241 = vpop.permute.xlu0 %6240
        %6242 = vrot.lane.b32.xlu0 %v6165, 105
        %v6243 = vpop.permute.xlu0 %6242
        %6244 = vrot.lane.b32.xlu0 %v6167, 105
        %v6245 = vpop.permute.xlu0 %6244
        %6246 = vrot.lane.b32.xlu0 %v6170, 105
        %v6247 = vpop.permute.xlu0 %6246
        %6248 = vrot.lane.b32.xlu0 %v6172, 105
        %v6249 = vpop.permute.xlu0 %6248
        %6250 = vrot.lane.b32.xlu0 %v6175, 105
        %v6251 = vpop.permute.xlu0 %6250
        %6252 = vrot.lane.b32.xlu0 %v6177, 105
        %v6253 = vpop.permute.xlu0 %6252
        %6254 = vrot.lane.b32.xlu0 %v6180, 105
        %v6255 = vpop.permute.xlu0 %6254
        %6256 = vrot.lane.b32.xlu0 %v6182, 105
        %v6257 = vpop.permute.xlu0 %6256
        %6258 = vrot.lane.b32.xlu0 %v6185, 105
        %v6259 = vpop.permute.xlu0 %6258
        %6260 = vrot.lane.b32.xlu0 %v6187, 105
        %v6261 = vpop.permute.xlu0 %6260
        %6262 = vrot.lane.b32.xlu0 %v6190, 105
        %v6263 = vpop.permute.xlu0 %6262
        %6264 = vrot.lane.b32.xlu0 %v6192, 105
        %v6265 = vpop.permute.xlu0 %6264
        %6266 = vrot.lane.b32.xlu0 %v6195, 105
        %v6267 = vpop.permute.xlu0 %6266
        %6268 = vrot.lane.b32.xlu0 %v6197, 105
        %v6269 = vpop.permute.xlu0 %6268
        %6270 = vrot.lane.b32.xlu0 %v6200, 105
        %v6271 = vpop.permute.xlu0 %6270
        %6272 = vrot.lane.b32.xlu0 %v6202, 105
        %v6273 = vpop.permute.xlu0 %6272
        %6274 = vrot.lane.b32.xlu0 %v6205, 105
        %v6275 = vpop.permute.xlu0 %6274
        %6276 = vrot.lane.b32.xlu0 %v6207, 105
        %v6277 = vpop.permute.xlu0 %6276
        %6278 = vrot.lane.b32.xlu0 %v6210, 105
        %v6279 = vpop.permute.xlu0 %6278
        %6280 = vrot.lane.b32.xlu0 %v6212, 105
        %v6281 = vpop.permute.xlu0 %6280
        %6282 = vrot.lane.b32.xlu0 %v6215, 105
        %v6283 = vpop.permute.xlu0 %6282
        %6284 = vrot.lane.b32.xlu0 %v6217, 105
        %v6285 = vpop.permute.xlu0 %6284
        %6286 = vrot.lane.b32.xlu0 %v6220, 105
        %v6287 = vpop.permute.xlu0 %6286
        %6288 = vrot.lane.b32.xlu0 %v6222, 105
        %v6289 = vpop.permute.xlu0 %6288
        %6290 = vrot.lane.b32.xlu0 %v6225, 105
        %v6291 = vpop.permute.xlu0 %6290
        %6292 = vrot.lane.b32.xlu0 %v6227, 105
        %v6293 = vpop.permute.xlu0 %6292
        %6294 = vrot.lane.b32.xlu0 %v6230, 105
        %v6295 = vpop.permute.xlu0 %6294
        %6296 = vrot.lane.b32.xlu0 %v6232, 105
        %v6297 = vpop.permute.xlu0 %6296
        %6298 = vrot.lane.b32.xlu0 %v6235, 105
        %v6299 = vpop.permute.xlu0 %6298
        %6300 = vrot.lane.b32.xlu0 %v6237, 105
        %v6301 = vpop.permute.xlu0 %6300
        %v6334 = vadd.f32 %v6126, %v6239
        %v6335 = vadd.f32 %v6127, %v6241
        %v6336 = vadd.f32 %v6128, %v6243
        %v6337 = vadd.f32 %v6129, %v6245
        %v6338 = vadd.f32 %v6130, %v6247
        %v6339 = vadd.f32 %v6131, %v6249
        %v6340 = vadd.f32 %v6132, %v6251
        %v6341 = vadd.f32 %v6133, %v6253
        %v6342 = vadd.f32 %v6134, %v6255
        %v6343 = vadd.f32 %v6135, %v6257
        %v6344 = vadd.f32 %v6136, %v6259
        %v6345 = vadd.f32 %v6137, %v6261
        %v6346 = vadd.f32 %v6138, %v6263
        %v6347 = vadd.f32 %v6139, %v6265
        %v6348 = vadd.f32 %v6140, %v6267
        %v6349 = vadd.f32 %v6141, %v6269
        %v6350 = vadd.f32 %v6142, %v6271
        %v6351 = vadd.f32 %v6143, %v6273
        %v6352 = vadd.f32 %v6144, %v6275
        %v6353 = vadd.f32 %v6145, %v6277
        %v6354 = vadd.f32 %v6146, %v6279
        %v6355 = vadd.f32 %v6147, %v6281
        %v6356 = vadd.f32 %v6148, %v6283
        %v6357 = vadd.f32 %v6149, %v6285
        %v6358 = vadd.f32 %v6150, %v6287
        %v6359 = vadd.f32 %v6151, %v6289
        %v6360 = vadd.f32 %v6152, %v6291
        %v6361 = vadd.f32 %v6153, %v6293
        %v6362 = vadd.f32 %v6154, %v6295
        %v6363 = vadd.f32 %v6155, %v6297
        %v6364 = vadd.f32 %v6156, %v6299
        %v6365 = vadd.f32 %v6157, %v6301
        %v6366 = vrot.slane %v5518, 4
        %v6367 = vrot.slane %v5519, 4
        %v6368 = vsel %vm2139, %v6366, %v6367
        %v6369 = vrot.slane %v5520, 4
        %v6370 = vsel %vm2139, %v6367, %v6369
        %v6371 = vrot.slane %v5521, 4
        %v6372 = vrot.slane %v5522, 4
        %v6373 = vsel %vm2139, %v6371, %v6372
        %v6374 = vrot.slane %v5523, 4
        %v6375 = vsel %vm2139, %v6372, %v6374
        %v6376 = vrot.slane %v5524, 4
        %v6377 = vrot.slane %v5525, 4
        %v6378 = vsel %vm2139, %v6376, %v6377
        %v6379 = vrot.slane %v5526, 4
        %v6380 = vsel %vm2139, %v6377, %v6379
        %v6381 = vrot.slane %v5527, 4
        %v6382 = vrot.slane %v5528, 4
        %v6383 = vsel %vm2139, %v6381, %v6382
        %v6384 = vrot.slane %v5529, 4
        %v6385 = vsel %vm2139, %v6382, %v6384
        %v6386 = vrot.slane %v5530, 4
        %v6387 = vrot.slane %v5531, 4
        %v6388 = vsel %vm2139, %v6386, %v6387
        %v6389 = vrot.slane %v5532, 4
        %v6390 = vsel %vm2139, %v6387, %v6389
        %v6391 = vrot.slane %v5533, 4
        %v6392 = vrot.slane %v5534, 4
        %v6393 = vsel %vm2139, %v6391, %v6392
        %v6394 = vrot.slane %v5535, 4
        %v6395 = vsel %vm2139, %v6392, %v6394
        %v6396 = vrot.slane %v5536, 4
        %v6397 = vrot.slane %v5537, 4
        %v6398 = vsel %vm2139, %v6396, %v6397
        %v6399 = vrot.slane %v5538, 4
        %v6400 = vsel %vm2139, %v6397, %v6399
        %v6401 = vrot.slane %v5539, 4
        %v6402 = vrot.slane %v5540, 4
        %v6403 = vsel %vm2139, %v6401, %v6402
        %v6404 = vrot.slane %v5541, 4
        %v6405 = vsel %vm2139, %v6402, %v6404
        %v6406 = vrot.slane %v5542, 4
        %v6407 = vrot.slane %v5543, 4
        %v6408 = vsel %vm2139, %v6406, %v6407
        %v6409 = vrot.slane %v5544, 4
        %v6410 = vsel %vm2139, %v6407, %v6409
        %v6411 = vrot.slane %v5545, 4
        %v6412 = vrot.slane %v5546, 4
        %v6413 = vsel %vm2139, %v6411, %v6412
        %v6414 = vrot.slane %v5547, 4
        %v6415 = vsel %vm2139, %v6412, %v6414
        %v6416 = vrot.slane %v5548, 4
        %v6417 = vrot.slane %v5549, 4
        %v6418 = vsel %vm2139, %v6416, %v6417
        %v6419 = vrot.slane %v5550, 4
        %v6420 = vsel %vm2139, %v6417, %v6419
        %v6421 = vrot.slane %v5551, 4
        %v6422 = vrot.slane %v5552, 4
        %v6423 = vsel %vm2139, %v6421, %v6422
        %v6424 = vrot.slane %v5553, 4
        %v6425 = vsel %vm2139, %v6422, %v6424
        %v6426 = vrot.slane %v5554, 4
        %v6427 = vrot.slane %v5555, 4
        %v6428 = vsel %vm2139, %v6426, %v6427
        %v6429 = vrot.slane %v5556, 4
        %v6430 = vsel %vm2139, %v6427, %v6429
        %v6431 = vrot.slane %v5557, 4
        %v6432 = vrot.slane %v5558, 4
        %v6433 = vsel %vm2139, %v6431, %v6432
        %v6434 = vrot.slane %v5559, 4
        %v6435 = vsel %vm2139, %v6432, %v6434
        %v6436 = vrot.slane %v5560, 4
        %v6437 = vrot.slane %v5561, 4
        %v6438 = vsel %vm2139, %v6436, %v6437
        %v6439 = vrot.slane %v5562, 4
        %v6440 = vsel %vm2139, %v6437, %v6439
        %v6441 = vrot.slane %v5563, 4
        %v6442 = vrot.slane %v5564, 4
        %v6443 = vsel %vm2139, %v6441, %v6442
        %v6444 = vrot.slane %v5565, 4
        %v6445 = vsel %vm2139, %v6442, %v6444
        %6446 = vrot.lane.b32.xlu0 %v6368, 104
        %v6447 = vpop.permute.xlu0 %6446
        %6448 = vrot.lane.b32.xlu0 %v6370, 104
        %v6449 = vpop.permute.xlu0 %6448
        %6450 = vrot.lane.b32.xlu0 %v6373, 104
        %v6451 = vpop.permute.xlu0 %6450
        %6452 = vrot.lane.b32.xlu0 %v6375, 104
        %v6453 = vpop.permute.xlu0 %6452
        %6454 = vrot.lane.b32.xlu0 %v6378, 104
        %v6455 = vpop.permute.xlu0 %6454
        %6456 = vrot.lane.b32.xlu0 %v6380, 104
        %v6457 = vpop.permute.xlu0 %6456
        %6458 = vrot.lane.b32.xlu0 %v6383, 104
        %v6459 = vpop.permute.xlu0 %6458
        %6460 = vrot.lane.b32.xlu0 %v6385, 104
        %v6461 = vpop.permute.xlu0 %6460
        %6462 = vrot.lane.b32.xlu0 %v6388, 104
        %v6463 = vpop.permute.xlu0 %6462
        %6464 = vrot.lane.b32.xlu0 %v6390, 104
        %v6465 = vpop.permute.xlu0 %6464
        %6466 = vrot.lane.b32.xlu0 %v6393, 104
        %v6467 = vpop.permute.xlu0 %6466
        %6468 = vrot.lane.b32.xlu0 %v6395, 104
        %v6469 = vpop.permute.xlu0 %6468
        %6470 = vrot.lane.b32.xlu0 %v6398, 104
        %v6471 = vpop.permute.xlu0 %6470
        %6472 = vrot.lane.b32.xlu0 %v6400, 104
        %v6473 = vpop.permute.xlu0 %6472
        %6474 = vrot.lane.b32.xlu0 %v6403, 104
        %v6475 = vpop.permute.xlu0 %6474
        %6476 = vrot.lane.b32.xlu0 %v6405, 104
        %v6477 = vpop.permute.xlu0 %6476
        %6478 = vrot.lane.b32.xlu0 %v6408, 104
        %v6479 = vpop.permute.xlu0 %6478
        %6480 = vrot.lane.b32.xlu0 %v6410, 104
        %v6481 = vpop.permute.xlu0 %6480
        %6482 = vrot.lane.b32.xlu0 %v6413, 104
        %v6483 = vpop.permute.xlu0 %6482
        %6484 = vrot.lane.b32.xlu0 %v6415, 104
        %v6485 = vpop.permute.xlu0 %6484
        %6486 = vrot.lane.b32.xlu0 %v6418, 104
        %v6487 = vpop.permute.xlu0 %6486
        %6488 = vrot.lane.b32.xlu0 %v6420, 104
        %v6489 = vpop.permute.xlu0 %6488
        %6490 = vrot.lane.b32.xlu0 %v6423, 104
        %v6491 = vpop.permute.xlu0 %6490
        %6492 = vrot.lane.b32.xlu0 %v6425, 104
        %v6493 = vpop.permute.xlu0 %6492
        %6494 = vrot.lane.b32.xlu0 %v6428, 104
        %v6495 = vpop.permute.xlu0 %6494
        %6496 = vrot.lane.b32.xlu0 %v6430, 104
        %v6497 = vpop.permute.xlu0 %6496
        %6498 = vrot.lane.b32.xlu0 %v6433, 104
        %v6499 = vpop.permute.xlu0 %6498
        %6500 = vrot.lane.b32.xlu0 %v6435, 104
        %v6501 = vpop.permute.xlu0 %6500
        %6502 = vrot.lane.b32.xlu0 %v6438, 104
        %v6503 = vpop.permute.xlu0 %6502
        %6504 = vrot.lane.b32.xlu0 %v6440, 104
        %v6505 = vpop.permute.xlu0 %6504
        %6506 = vrot.lane.b32.xlu0 %v6443, 104
        %v6507 = vpop.permute.xlu0 %6506
        %6508 = vrot.lane.b32.xlu0 %v6445, 104
        %v6509 = vpop.permute.xlu0 %6508
        %v6542 = vadd.f32 %v6334, %v6447
        %v6543 = vadd.f32 %v6335, %v6449
        %v6544 = vadd.f32 %v6336, %v6451
        %v6545 = vadd.f32 %v6337, %v6453
        %v6546 = vadd.f32 %v6338, %v6455
        %v6547 = vadd.f32 %v6339, %v6457
        %v6548 = vadd.f32 %v6340, %v6459
        %v6549 = vadd.f32 %v6341, %v6461
        %v6550 = vadd.f32 %v6342, %v6463
        %v6551 = vadd.f32 %v6343, %v6465
        %v6552 = vadd.f32 %v6344, %v6467
        %v6553 = vadd.f32 %v6345, %v6469
        %v6554 = vadd.f32 %v6346, %v6471
        %v6555 = vadd.f32 %v6347, %v6473
        %v6556 = vadd.f32 %v6348, %v6475
        %v6557 = vadd.f32 %v6349, %v6477
        %v6558 = vadd.f32 %v6350, %v6479
        %v6559 = vadd.f32 %v6351, %v6481
        %v6560 = vadd.f32 %v6352, %v6483
        %v6561 = vadd.f32 %v6353, %v6485
        %v6562 = vadd.f32 %v6354, %v6487
        %v6563 = vadd.f32 %v6355, %v6489
        %v6564 = vadd.f32 %v6356, %v6491
        %v6565 = vadd.f32 %v6357, %v6493
        %v6566 = vadd.f32 %v6358, %v6495
        %v6567 = vadd.f32 %v6359, %v6497
        %v6568 = vadd.f32 %v6360, %v6499
        %v6569 = vadd.f32 %v6361, %v6501
        %v6570 = vadd.f32 %v6362, %v6503
        %v6571 = vadd.f32 %v6363, %v6505
        %v6572 = vadd.f32 %v6364, %v6507
        %v6573 = vadd.f32 %v6365, %v6509
        %v6574 = vld [vmem:[#allocation3] sm:$0x1]
        %v6576 = vlaneseq
        %v6577 = vshrl.u32 %v6576, 7
        %v6578 = vsub.s32 0, %v6577
        %v6579 = vrot.slane %v6574, %v6578
        %6580 = vset.pattern.permute.xlu0 0
        %6581 = vperm.xlu0 %6580, %v6579
        %v6582 = vpop.permute.xlu0 %6581
        %v6584 = vadd.f32 %v6542, %v6582
        %v6585 = vadd.f32 %v6543, %v6582
        %v6586 = vadd.f32 %v6544, %v6582
        %v6587 = vadd.f32 %v6545, %v6582
        %v6588 = vadd.f32 %v6546, %v6582
        %v6589 = vadd.f32 %v6547, %v6582
        %v6590 = vadd.f32 %v6548, %v6582
        %v6591 = vadd.f32 %v6549, %v6582
        %v6592 = vadd.f32 %v6550, %v6582
        %v6593 = vadd.f32 %v6551, %v6582
        %v6594 = vadd.f32 %v6552, %v6582
        %v6595 = vadd.f32 %v6553, %v6582
        %v6596 = vadd.f32 %v6554, %v6582
        %v6597 = vadd.f32 %v6555, %v6582
        %v6598 = vadd.f32 %v6556, %v6582
        %v6599 = vadd.f32 %v6557, %v6582
        %v6600 = vadd.f32 %v6558, %v6582
        %v6601 = vadd.f32 %v6559, %v6582
        %v6602 = vadd.f32 %v6560, %v6582
        %v6603 = vadd.f32 %v6561, %v6582
        %v6604 = vadd.f32 %v6562, %v6582
        %v6605 = vadd.f32 %v6563, %v6582
        %v6606 = vadd.f32 %v6564, %v6582
        %v6607 = vadd.f32 %v6565, %v6582
        %v6608 = vadd.f32 %v6566, %v6582
        %v6609 = vadd.f32 %v6567, %v6582
        %v6610 = vadd.f32 %v6568, %v6582
        %v6611 = vadd.f32 %v6569, %v6582
        %v6612 = vadd.f32 %v6570, %v6582
        %v6613 = vadd.f32 %v6571, %v6582
        %v6614 = vadd.f32 %v6572, %v6582
        %v6615 = vadd.f32 %v6573, %v6582
        %6648 = vset.pattern.permute.xlu0 0
        %6649 = vperm.xlu0 %6648, %v6584
        %v6650 = vpop.permute.xlu0 %6649
        %6651 = vset.pattern.permute.xlu0 0
        %6652 = vperm.xlu0 %6651, %v6585
        %v6653 = vpop.permute.xlu0 %6652
        %6654 = vset.pattern.permute.xlu0 0
        %6655 = vperm.xlu0 %6654, %v6586
        %v6656 = vpop.permute.xlu0 %6655
        %6657 = vset.pattern.permute.xlu0 0
        %6658 = vperm.xlu0 %6657, %v6587
        %v6659 = vpop.permute.xlu0 %6658
        %6660 = vset.pattern.permute.xlu0 0
        %6661 = vperm.xlu0 %6660, %v6588
        %v6662 = vpop.permute.xlu0 %6661
        %6663 = vset.pattern.permute.xlu0 0
        %6664 = vperm.xlu0 %6663, %v6589
        %v6665 = vpop.permute.xlu0 %6664
        %6666 = vset.pattern.permute.xlu0 0
        %6667 = vperm.xlu0 %6666, %v6590
        %v6668 = vpop.permute.xlu0 %6667
        %6669 = vset.pattern.permute.xlu0 0
        %6670 = vperm.xlu0 %6669, %v6591
        %v6671 = vpop.permute.xlu0 %6670
        %6672 = vset.pattern.permute.xlu0 0
        %6673 = vperm.xlu0 %6672, %v6592
        %v6674 = vpop.permute.xlu0 %6673
        %6675 = vset.pattern.permute.xlu0 0
        %6676 = vperm.xlu0 %6675, %v6593
        %v6677 = vpop.permute.xlu0 %6676
        %6678 = vset.pattern.permute.xlu0 0
        %6679 = vperm.xlu0 %6678, %v6594
        %v6680 = vpop.permute.xlu0 %6679
        %6681 = vset.pattern.permute.xlu0 0
        %6682 = vperm.xlu0 %6681, %v6595
        %v6683 = vpop.permute.xlu0 %6682
        %6684 = vset.pattern.permute.xlu0 0
        %6685 = vperm.xlu0 %6684, %v6596
        %v6686 = vpop.permute.xlu0 %6685
        %6687 = vset.pattern.permute.xlu0 0
        %6688 = vperm.xlu0 %6687, %v6597
        %v6689 = vpop.permute.xlu0 %6688
        %6690 = vset.pattern.permute.xlu0 0
        %6691 = vperm.xlu0 %6690, %v6598
        %v6692 = vpop.permute.xlu0 %6691
        %6693 = vset.pattern.permute.xlu0 0
        %6694 = vperm.xlu0 %6693, %v6599
        %v6695 = vpop.permute.xlu0 %6694
        %6696 = vset.pattern.permute.xlu0 0
        %6697 = vperm.xlu0 %6696, %v6600
        %v6698 = vpop.permute.xlu0 %6697
        %6699 = vset.pattern.permute.xlu0 0
        %6700 = vperm.xlu0 %6699, %v6601
        %v6701 = vpop.permute.xlu0 %6700
        %6702 = vset.pattern.permute.xlu0 0
        %6703 = vperm.xlu0 %6702, %v6602
        %v6704 = vpop.permute.xlu0 %6703
        %6705 = vset.pattern.permute.xlu0 0
        %6706 = vperm.xlu0 %6705, %v6603
        %v6707 = vpop.permute.xlu0 %6706
        %6708 = vset.pattern.permute.xlu0 0
        %6709 = vperm.xlu0 %6708, %v6604
        %v6710 = vpop.permute.xlu0 %6709
        %6711 = vset.pattern.permute.xlu0 0
        %6712 = vperm.xlu0 %6711, %v6605
        %v6713 = vpop.permute.xlu0 %6712
        %6714 = vset.pattern.permute.xlu0 0
        %6715 = vperm.xlu0 %6714, %v6606
        %v6716 = vpop.permute.xlu0 %6715
        %6717 = vset.pattern.permute.xlu0 0
        %6718 = vperm.xlu0 %6717, %v6607
        %v6719 = vpop.permute.xlu0 %6718
        %6720 = vset.pattern.permute.xlu0 0
        %6721 = vperm.xlu0 %6720, %v6608
        %v6722 = vpop.permute.xlu0 %6721
        %6723 = vset.pattern.permute.xlu0 0
        %6724 = vperm.xlu0 %6723, %v6609
        %v6725 = vpop.permute.xlu0 %6724
        %6726 = vset.pattern.permute.xlu0 0
        %6727 = vperm.xlu0 %6726, %v6610
        %v6728 = vpop.permute.xlu0 %6727
        %6729 = vset.pattern.permute.xlu0 0
        %6730 = vperm.xlu0 %6729, %v6611
        %v6731 = vpop.permute.xlu0 %6730
        %6732 = vset.pattern.permute.xlu0 0
        %6733 = vperm.xlu0 %6732, %v6612
        %v6734 = vpop.permute.xlu0 %6733
        %6735 = vset.pattern.permute.xlu0 0
        %6736 = vperm.xlu0 %6735, %v6613
        %v6737 = vpop.permute.xlu0 %6736
        %6738 = vset.pattern.permute.xlu0 0
        %6739 = vperm.xlu0 %6738, %v6614
        %v6740 = vpop.permute.xlu0 %6739
        %6741 = vset.pattern.permute.xlu0 0
        %6742 = vperm.xlu0 %6741, %v6615
        %v6743 = vpop.permute.xlu0 %6742
        %v6744 = vlaneseq
        %v6745 = vand.u32 %v6744, 127
        %v6746 = vlaneseq
        %v6747 = vshrl.u32 %v6746, 7
        %v6748 = vsub.s32 %v6745, %v6747
        %v6749 = vrot.slane %v6650, %v6748
        %v6750 = vadd.s32 %v6745, 4294967288
        %v6751 = vlaneseq
        %v6752 = vshrl.u32 %v6751, 7
        %v6753 = vsub.s32 %v6750, %v6752
        %v6754 = vrot.slane %v6653, %v6753
        %vm6755 = vcmask 130112
        %v6756 = vsel %vm6755, %v6754, %v6749
        %v6757 = vlaneseq
        %v6758 = vshrl.u32 %v6757, 7
        %v6759 = vsub.s32 %v6745, %v6758
        %v6760 = vrot.slane %v6656, %v6759
        %v6761 = vlaneseq
        %v6762 = vshrl.u32 %v6761, 7
        %v6763 = vsub.s32 %v6750, %v6762
        %v6764 = vrot.slane %v6659, %v6763
        %v6765 = vsel %vm6755, %v6764, %v6760
        %v6766 = vlaneseq
        %v6767 = vshrl.u32 %v6766, 7
        %v6768 = vsub.s32 %v6745, %v6767
        %v6769 = vrot.slane %v6662, %v6768
        %v6770 = vlaneseq
        %v6771 = vshrl.u32 %v6770, 7
        %v6772 = vsub.s32 %v6750, %v6771
        %v6773 = vrot.slane %v6665, %v6772
        %v6774 = vsel %vm6755, %v6773, %v6769
        %v6775 = vlaneseq
        %v6776 = vshrl.u32 %v6775, 7
        %v6777 = vsub.s32 %v6745, %v6776
        %v6778 = vrot.slane %v6668, %v6777
        %v6779 = vlaneseq
        %v6780 = vshrl.u32 %v6779, 7
        %v6781 = vsub.s32 %v6750, %v6780
        %v6782 = vrot.slane %v6671, %v6781
        %v6783 = vsel %vm6755, %v6782, %v6778
        %v6784 = vlaneseq
        %v6785 = vshrl.u32 %v6784, 7
        %v6786 = vsub.s32 %v6745, %v6785
        %v6787 = vrot.slane %v6674, %v6786
        %v6788 = vlaneseq
        %v6789 = vshrl.u32 %v6788, 7
        %v6790 = vsub.s32 %v6750, %v6789
        %v6791 = vrot.slane %v6677, %v6790
        %v6792 = vsel %vm6755, %v6791, %v6787
        %v6793 = vlaneseq
        %v6794 = vshrl.u32 %v6793, 7
        %v6795 = vsub.s32 %v6745, %v6794
        %v6796 = vrot.slane %v6680, %v6795
        %v6797 = vlaneseq
        %v6798 = vshrl.u32 %v6797, 7
        %v6799 = vsub.s32 %v6750, %v6798
        %v6800 = vrot.slane %v6683, %v6799
        %v6801 = vsel %vm6755, %v6800, %v6796
        %v6802 = vlaneseq
        %v6803 = vshrl.u32 %v6802, 7
        %v6804 = vsub.s32 %v6745, %v6803
        %v6805 = vrot.slane %v6686, %v6804
        %v6806 = vlaneseq
        %v6807 = vshrl.u32 %v6806, 7
        %v6808 = vsub.s32 %v6750, %v6807
        %v6809 = vrot.slane %v6689, %v6808
        %v6810 = vsel %vm6755, %v6809, %v6805
        %v6811 = vlaneseq
        %v6812 = vshrl.u32 %v6811, 7
        %v6813 = vsub.s32 %v6745, %v6812
        %v6814 = vrot.slane %v6692, %v6813
        %v6815 = vlaneseq
        %v6816 = vshrl.u32 %v6815, 7
        %v6817 = vsub.s32 %v6750, %v6816
        %v6818 = vrot.slane %v6695, %v6817
        %v6819 = vsel %vm6755, %v6818, %v6814
        %v6820 = vlaneseq
        %v6821 = vshrl.u32 %v6820, 7
        %v6822 = vsub.s32 %v6745, %v6821
        %v6823 = vrot.slane %v6698, %v6822
        %v6824 = vlaneseq
        %v6825 = vshrl.u32 %v6824, 7
        %v6826 = vsub.s32 %v6750, %v6825
        %v6827 = vrot.slane %v6701, %v6826
        %v6828 = vsel %vm6755, %v6827, %v6823
        %v6829 = vlaneseq
        %v6830 = vshrl.u32 %v6829, 7
        %v6831 = vsub.s32 %v6745, %v6830
        %v6832 = vrot.slane %v6704, %v6831
        %v6833 = vlaneseq
        %v6834 = vshrl.u32 %v6833, 7
        %v6835 = vsub.s32 %v6750, %v6834
        %v6836 = vrot.slane %v6707, %v6835
        %v6837 = vsel %vm6755, %v6836, %v6832
        %v6838 = vlaneseq
        %v6839 = vshrl.u32 %v6838, 7
        %v6840 = vsub.s32 %v6745, %v6839
        %v6841 = vrot.slane %v6710, %v6840
        %v6842 = vlaneseq
        %v6843 = vshrl.u32 %v6842, 7
        %v6844 = vsub.s32 %v6750, %v6843
        %v6845 = vrot.slane %v6713, %v6844
        %v6846 = vsel %vm6755, %v6845, %v6841
        %v6847 = vlaneseq
        %v6848 = vshrl.u32 %v6847, 7
        %v6849 = vsub.s32 %v6745, %v6848
        %v6850 = vrot.slane %v6716, %v6849
        %v6851 = vlaneseq
        %v6852 = vshrl.u32 %v6851, 7
        %v6853 = vsub.s32 %v6750, %v6852
        %v6854 = vrot.slane %v6719, %v6853
        %v6855 = vsel %vm6755, %v6854, %v6850
        %v6856 = vlaneseq
        %v6857 = vshrl.u32 %v6856, 7
        %v6858 = vsub.s32 %v6745, %v6857
        %v6859 = vrot.slane %v6722, %v6858
        %v6860 = vlaneseq
        %v6861 = vshrl.u32 %v6860, 7
        %v6862 = vsub.s32 %v6750, %v6861
        %v6863 = vrot.slane %v6725, %v6862
        %v6864 = vsel %vm6755, %v6863, %v6859
        %v6865 = vlaneseq
        %v6866 = vshrl.u32 %v6865, 7
        %v6867 = vsub.s32 %v6745, %v6866
        %v6868 = vrot.slane %v6728, %v6867
        %v6869 = vlaneseq
        %v6870 = vshrl.u32 %v6869, 7
        %v6871 = vsub.s32 %v6750, %v6870
        %v6872 = vrot.slane %v6731, %v6871
        %v6873 = vsel %vm6755, %v6872, %v6868
        %v6874 = vlaneseq
        %v6875 = vshrl.u32 %v6874, 7
        %v6876 = vsub.s32 %v6745, %v6875
        %v6877 = vrot.slane %v6734, %v6876
        %v6878 = vlaneseq
        %v6879 = vshrl.u32 %v6878, 7
        %v6880 = vsub.s32 %v6750, %v6879
        %v6881 = vrot.slane %v6737, %v6880
        %v6882 = vsel %vm6755, %v6881, %v6877
        %v6883 = vlaneseq
        %v6884 = vshrl.u32 %v6883, 7
        %v6885 = vsub.s32 %v6745, %v6884
        %v6886 = vrot.slane %v6740, %v6885
        %v6887 = vlaneseq
        %v6888 = vshrl.u32 %v6887, 7
        %v6889 = vsub.s32 %v6750, %v6888
        %v6890 = vrot.slane %v6743, %v6889
        %v6891 = vsel %vm6755, %v6890, %v6886
        %vm6892 = vcmask 1041409
        %v6893 = vsel %vm6892, %v6765, %v6756
        %vm6894 = vcmask 1042434
        %v6895 = vsel %vm6894, %v6774, %v6893
        %vm6896 = vcmask 1043459
        %v6897 = vsel %vm6896, %v6783, %v6895
        %vm6898 = vcmask 1044484
        %v6899 = vsel %vm6898, %v6792, %v6897
        %vm6900 = vcmask 1045509
        %v6901 = vsel %vm6900, %v6801, %v6899
        %vm6902 = vcmask 1046534
        %v6903 = vsel %vm6902, %v6810, %v6901
        %vm6904 = vcmask 1047559
        %v6905 = vsel %vm6904, %v6819, %v6903
        %v6906 = vsel %vm6892, %v6837, %v6828
        %v6907 = vsel %vm6894, %v6846, %v6906
        %v6908 = vsel %vm6896, %v6855, %v6907
        %v6909 = vsel %vm6898, %v6864, %v6908
        %v6910 = vsel %vm6900, %v6873, %v6909
        %v6911 = vsel %vm6902, %v6882, %v6910
        %v6912 = vsel %vm6904, %v6891, %v6911
        %vm6915 = vcmask 130048
        %6916 = vst.msk [vmem:[%s273] sm:$0xff] %vm6915, %v6905
        %6917 = vst.msk [vmem:[%s273 + $0x8] sm:$0xff] %vm6915, %v6912
        %s6918 = sand.u32 %s183, 1
        %s6919 = scalar_lea.sflag [#allocation5], %s6918
        %s6920 = sand.u32 %s183, 1
        %s6921 = smul.addr %s6920, 16
        %s6922 = scalar_lea.vmem [#allocation4], %s6921
        // Predicated region
        $region49: #{srcnn_forward.1} parent=47 // pred_check
          %p6923 = pneg %p193
        $region50: #{srcnn_forward.1} parent=47 // pred_check_branch
          %6925 = sbr.rel (%p6923) target = $region52
        $region51: #{srcnn_forward.1} parent=47 // pred_region
          %s6927 = ssub.s32 256, 256
          %6928 = vsyncadd %s6919, %s6927
          %s6929 = smul.addr %s23, 2
          %s6930 = smul.addr %s6929, 128
          %s6931 = scalar_lea.hbm %s7, %s6930
          %s6932 = sshll.u32 %s6922, 4
          %s6933 = int_to_ptr.vmem [resolvable:$true] %s6932
          %6938 = dma.vmem_to_hbm [thread:$0]  %s6933, 256, %s6931, %s6919, 128, 128, 8
        $region52: #{srcnn_forward.1} parent=47 // pred_fallthru
          _
      $region48: #{srcnn_forward.1} parent=5 // pred_fallthru
        _
      %p6939 = scmp.le.s32.totalorder 2, %s18
      // Predicated region
      $region53: #{srcnn_forward.1} parent=5 // pred_check
        %p6940 = pneg %p6939
      $region54: #{srcnn_forward.1} parent=5 // pred_check_branch
        %6942 = sbr.rel (%p6940) target = $region56
      $region55: #{srcnn_forward.1} parent=5 // pred_region
        %s6943 = ssub.s32 %s18, 2
        // Predicated region
        $region57: #{srcnn_forward.1} parent=55 // pred_check
          %p6944 = pneg %p199
        $region58: #{srcnn_forward.1} parent=55 // pred_check_branch
          %6946 = sbr.rel (%p6944) target = $region60
        $region59: #{srcnn_forward.1} parent=55 // pred_region
          %s6947 = sand.u32 %s184, 1
          %s6948 = scalar_lea.sflag [#allocation5], %s6947
          %s6949 = sand.u32 %s184, 1
          %s6950 = smul.addr %s6949, 16
          %s6951 = scalar_lea.vmem [#allocation4], %s6950
          %6952 = dma.done %s6948, 256
        $region60: #{srcnn_forward.1} parent=55 // pred_fallthru
          _
      $region56: #{srcnn_forward.1} parent=5 // pred_fallthru
        _
    $region6: #{srcnn_forward.1} parent=1 // loop_footer
      %s22 = sadd.s32 1, %s18
    $region7: #{srcnn_forward.1} parent=1 // loop_footer_branch
      %17 = sbr.rel target = $region3
    $region8: #{srcnn_forward.1} parent=1 // loop_exit
      _
    %6953 = vsyncpa [#allocation5], 1
    %s6954 = scalar_lea.sflag [#allocation5], 1
    %6955 = vsyncpa %s6954, 1

</llo_original>
